<compile_context>
chip_gen: v6e
topology: v6e:2x2x1
jax: 0.10.0
libtpu: 0.0.40
codegen_flags: <defaults>
</compile_context>

<pallas_src>
import jax
import jax.numpy as jnp
import numpy as np
from jax.experimental import pallas as pl
from jax.experimental.pallas import tpu as pltpu


def _round_up(x, m):
    return (x + m - 1) // m * m


# ----------------------------------------------------------------------------
# Fused cls-MLP kernel.
#   scratch:  h = relu(x @ W1 + b1)                 (computed at j == 0, resident)
#   output :  out[:, tile] = h @ W2[:, tile] + b2   (every grid step, lane-dense)
# ----------------------------------------------------------------------------
def _head_mlp_kernel(x_ref, w1_ref, b1_ref, w2_ref, b2_ref, out_ref, h_ref):
    c = pl.program_id(0)
    j = pl.program_id(1)
    j2 = pl.num_programs(1)

    @pl.when(j == 0)
    def _compute_hidden():
        hid = jnp.dot(x_ref[...], w1_ref[...],
                      preferred_element_type=jnp.float32)
        hid = jnp.maximum(hid + b1_ref[...], 0.0)
        h_ref[...] = hid.astype(h_ref.dtype)

    tile_idx = c * j2 + j
    acc = jnp.dot(h_ref[...], w2_ref[...],
                  preferred_element_type=jnp.float32)
    # b2 is fully resident: pick this tile's bias row (dynamic sublane slice).
    bias = b2_ref[pl.ds(tile_idx, 1), :]          # (1, tile_n) f32
    out_ref[...] = (acc + bias).astype(out_ref.dtype)


def head_mlp(x, w1t, b1, w2t, b2_tiles, *, tile_n, splits, vmem_cap_bytes):
    """x:(N,D) bf16, w1t:(D,mid) bf16, b1:(1,mid) f32,
       w2t:(mid,total_pad) bf16, b2_tiles:(num_tiles,tile_n) f32
       ->  (N, total_pad) f32."""
    n, d = x.shape
    mid = w1t.shape[1]
    total_pad = w2t.shape[1]
    num_tiles = total_pad // tile_n
    assert num_tiles * tile_n == total_pad and num_tiles % splits == 0
    assert b2_tiles.shape == (num_tiles, tile_n)
    j2 = num_tiles // splits

    # Pad batch rows to a multiple of 8 so output stores are full, unmasked vregs.
    n_pad = max(8, _round_up(n, 8))
    if n_pad != n:
        x = jnp.pad(x, ((0, n_pad - n), (0, 0)))

    w2_bufs = 3

    # VMEM limit from the actual footprint (residents counted at 2 bufs so the
    # no-pipeline_mode fallback also fits), +30% headroom, generation-aware cap.
    footprint = (
        2 * (n_pad * d * 2                      # x
             + d * mid * 2                      # W1
             + 8 * mid * 4                      # b1 (sublane-padded)
             + _round_up(num_tiles, 8) * tile_n * 4)   # b2 resident
        + w2_bufs * mid * tile_n * 2            # W2 stream
        + 2 * n_pad * tile_n * 4                # out tiles (double-buffered)
        + n_pad * mid * 2                       # h scratch
    )
    vmem_limit = int(min(max(int(footprint * 1.3) + (4 << 20), 32 << 20),
                         vmem_cap_bytes))

    def _call(use_buffered):
        def resident(shape):
            if use_buffered:
                return pl.BlockSpec(shape, lambda c, j: (0, 0),
                                    pipeline_mode=pl.Buffered(1))
            return pl.BlockSpec(shape, lambda c, j: (0, 0))

        if use_buffered:
            w2_spec = pl.BlockSpec((mid, tile_n), lambda c, j: (0, c * j2 + j),
                                   pipeline_mode=pl.Buffered(w2_bufs))
        else:
            w2_spec = pl.BlockSpec((mid, tile_n), lambda c, j: (0, c * j2 + j))

        grid_spec = pltpu.PrefetchScalarGridSpec(
            num_scalar_prefetch=0,
            grid=(splits, j2),
            in_specs=[
                resident((n_pad, d)),             # x   (resident, 1 buffer)
                resident((d, mid)),               # W1  (resident, 1 buffer)
                resident((1, mid)),               # b1  (resident, 1 buffer)
                w2_spec,                          # W2  (streamed, deep-buffered)
                resident((num_tiles, tile_n)),    # b2  (resident, 1 buffer)
            ],
            out_specs=pl.BlockSpec((n_pad, tile_n), lambda c, j: (0, c * j2 + j)),
            scratch_shapes=[pltpu.VMEM((n_pad, mid), jnp.bfloat16)],
        )
        return pl.pallas_call(
            _head_mlp_kernel,
            out_shape=jax.ShapeDtypeStruct((n_pad, total_pad), jnp.float32),
            grid_spec=grid_spec,
            compiler_params=pltpu.CompilerParams(
                dimension_semantics=("parallel", "arbitrary"),
                vmem_limit_bytes=vmem_limit),
        )(x, w1t, b1, w2t, b2_tiles)

    try:
        out = _call(use_buffered=True)
    except Exception:
        # Fallback if this jax build rejects pipeline_mode / Buffered counts.
        out = _call(use_buffered=False)
    return out[:n]


# ----------------------------------------------------------------------------
# parsingNet head (forward) wrapper.
# ----------------------------------------------------------------------------
class ParsingNetHead:
    def __init__(self, num_grid_row, num_cls_row, num_grid_col, num_cls_col,
                 num_lane_on_row, num_lane_on_col, input_height, input_width,
                 mlp_mid_dim=2048, key=None):
        if key is None:
            key = jax.random.PRNGKey(0)
        self.num_grid_row = num_grid_row
        self.num_cls_row = num_cls_row
        self.num_grid_col = num_grid_col
        self.num_cls_col = num_cls_col
        self.num_lane_on_row = num_lane_on_row
        self.num_lane_on_col = num_lane_on_col
        self.dim1 = num_grid_row * num_cls_row * num_lane_on_row
        self.dim2 = num_grid_col * num_cls_col * num_lane_on_col
        self.dim3 = 2 * num_cls_row * num_lane_on_row
        self.dim4 = 2 * num_cls_col * num_lane_on_col
        self.total_dim = self.dim1 + self.dim2 + self.dim3 + self.dim4
        self.input_dim = input_height // 32 * input_width // 32 * 8
        self.mlp_mid_dim = mlp_mid_dim

        # Generation-aware choices (perf-only; correctness identical either way).
        try:
            kind = jax.devices()[0].device_kind.lower()
        except Exception:
            kind = ""
        self.is_v7x = "7" in kind
        self.splits = 2 if self.is_v7x else 1          # megacore split only on v7x
        self.vmem_cap = (56 << 20) if self.is_v7x else (100 << 20)

        # Lane-dense W2 tiling: never below 512 columns; 1024 for large heads.
        if _round_up(self.total_dim, 128) >= self.splits * 2048:
            self.tile_n = 1024
        else:
            self.tile_n = 512
        self.total_dim_pad = _round_up(self.total_dim, self.splits * self.tile_n)
        self.num_tiles = self.total_dim_pad // self.tile_n

        k = jax.random.split(key, 6)
        f32 = jnp.float32
        # self.pool = Conv2d(576, 8, 1): weight (8, 576, 1, 1), bias (8,)
        self.w_pool = jax.random.normal(k[0], (8, 576), f32) * 0.02
        self.b_pool = jax.random.normal(k[1], (8,), f32) * 0.02
        # cls: Linear(input_dim, mid), ReLU, Linear(mid, total_dim)  (fc_norm=False)
        w1 = jax.random.normal(k[2], (mlp_mid_dim, self.input_dim), f32) * 0.02   # torch (out,in)
        b1 = jax.random.normal(k[3], (mlp_mid_dim,), f32) * 0.02
        w2 = jax.random.normal(k[4], (self.total_dim, mlp_mid_dim), f32) * 0.02
        b2 = jax.random.normal(k[5], (self.total_dim,), f32) * 0.02

        # Pre-transpose ONCE, cast weights to bf16, zero-pad the output dim so
        # every kernel store is an unmasked, lane-dense vst.
        self.w1t = jnp.asarray(w1.T, jnp.bfloat16)                     # (input_dim, mid)
        self.b1 = b1.reshape(1, mlp_mid_dim)                           # f32
        self.w2t = (jnp.zeros((mlp_mid_dim, self.total_dim_pad), jnp.bfloat16)
                    .at[:, :self.total_dim].set(w2.T.astype(jnp.bfloat16)))
        b2_pad = (jnp.zeros((self.total_dim_pad,), f32)
                  .at[:self.total_dim].set(b2))
        self.b2_tiles = b2_pad.reshape(self.num_tiles, self.tile_n)    # f32, resident

    def forward(self, fea):
        """fea: (N, 576, h, w) NCHW backbone output (h = H//32, w = W//32)."""
        n, c, h, w = fea.shape
        fea_flat = fea.reshape(n, c, h * w)
        # 1x1 "pool" conv (negligible work) as an XLA prologue feeding the kernel.
        pooled = (jnp.einsum('ck,nkp->ncp', self.w_pool, fea_flat)
                  + self.b_pool[None, :, None])
        x = pooled.reshape(n, self.input_dim).astype(jnp.bfloat16)     # == .view(-1, input_dim)
        out = head_mlp(x, self.w1t, self.b1, self.w2t, self.b2_tiles,
                       tile_n=self.tile_n, splits=self.splits,
                       vmem_cap_bytes=self.vmem_cap)[:, :self.total_dim]

        d1, d2, d3, d4 = self.dim1, self.dim2, self.dim3, self.dim4
        return {
            'loc_row': out[:, :d1].reshape(
                -1, self.num_grid_row, self.num_cls_row, self.num_lane_on_row),
            'loc_col': out[:, d1:d1 + d2].reshape(
                -1, self.num_grid_col, self.num_cls_col, self.num_lane_on_col),
            'exist_row': out[:, d1 + d2:d1 + d2 + d3].reshape(
                -1, 2, self.num_cls_row, self.num_lane_on_row),
            'exist_col': out[:, -d4:].reshape(
                -1, 2, self.num_cls_col, self.num_lane_on_col),
        }

    # Pure-JAX reference (same bf16 weights / f32 accumulation) for checking.
    def forward_ref(self, fea):
        n, c, h, w = fea.shape
        fea_flat = fea.reshape(n, c, h * w)
        pooled = (jnp.einsum('ck,nkp->ncp', self.w_pool, fea_flat)
                  + self.b_pool[None, :, None])
        x = pooled.reshape(n, self.input_dim).astype(jnp.bfloat16)
        hid = jnp.maximum(
            jnp.dot(x, self.w1t, preferred_element_type=jnp.float32) + self.b1,
            0.0).astype(jnp.bfloat16)
        out = (jnp.dot(hid, self.w2t, preferred_element_type=jnp.float32)
               + self.b2_tiles.reshape(1, -1))
        return out[:, :self.total_dim]


if __name__ == "__main__":
    # Small, module-consistent configuration.
    input_height, input_width = 64, 64          # -> h = w = 2, input_dim = 32
    num_grid_row, num_cls_row, num_lane_on_row = 4, 4, 2
    num_grid_col, num_cls_col, num_lane_on_col = 4, 4, 2
    N = 2

    root_key = jax.random.PRNGKey(0)
    net_key, fea_key = jax.random.split(root_key)

    net = ParsingNetHead(num_grid_row, num_cls_row, num_grid_col, num_cls_col,
                         num_lane_on_row, num_lane_on_col,
                         input_height, input_width, key=net_key)

    # Synthetic backbone output `fea`: (N, 576, H//32, W//32), NCHW.
    fea = jax.random.normal(fea_key,
                            (N, 576, input_height // 32, input_width // 32),
                            jnp.float32)

    pred = net.forward(fea)
    jax.block_until_ready(pred)

    # Sanity check against pure-JAX reference (same bf16 weights).
    out_ref = net.forward_ref(fea)
    out_kernel = jnp.concatenate(
        [pred['loc_row'].reshape(N, -1),
         pred['loc_col'].reshape(N, -1),
         pred['exist_row'].reshape(N, -1),
         pred['exist_col'].reshape(N, -1)], axis=1)
    np.testing.assert_allclose(np.asarray(out_kernel), np.asarray(out_ref),
                               rtol=2e-2, atol=2e-3)

    assert pred['loc_row'].shape == (N, num_grid_row, num_cls_row, num_lane_on_row)
    assert pred['loc_col'].shape == (N, num_grid_col, num_cls_col, num_lane_on_col)
    assert pred['exist_row'].shape == (N, 2, num_cls_row, num_lane_on_row)
    assert pred['exist_col'].shape == (N, 2, num_cls_col, num_lane_on_col)

    print("KERNEL_OK")
</pallas_src>

<mosaic_0001>
module attributes {stable_mosaic.version = 11 : i64} {
  func.func @_head_mlp_kernel(%arg0: i32, %arg1: i32, %arg2: memref<8x32xbf16, #tpu.memory_space<vmem>>, %arg3: memref<32x2048xbf16, #tpu.memory_space<vmem>>, %arg4: memref<1x2048xf32, #tpu.memory_space<vmem>>, %arg5: memref<2048x512xbf16, #tpu.memory_space<vmem>>, %arg6: memref<1x512xf32, #tpu.memory_space<vmem>>, %arg7: memref<8x512xf32, #tpu.memory_space<vmem>>, %arg8: memref<8x2048xbf16, #tpu.memory_space<vmem>>) attributes {dimension_semantics = [#tpu.dimension_semantics<parallel>, #tpu.dimension_semantics<arbitrary>], iteration_bounds = array<i64: 1, 1>, scalar_prefetch = 0 : i64, scratch_operands = 1 : i64, tpu.core_type = #tpu.core_type<tc>, window_params = [{pipeline_mode = #tpu.pipeline_mode<synchronous>, transform_indices = @transform_0, window_bounds = array<i64: 8, 32>}, {pipeline_mode = #tpu.pipeline_mode<synchronous>, transform_indices = @transform_1, window_bounds = array<i64: 32, 2048>}, {pipeline_mode = #tpu.pipeline_mode<synchronous>, transform_indices = @transform_2, window_bounds = array<i64: 1, 2048>}, {transform_indices = @transform_3, window_bounds = array<i64: 2048, 512>}, {pipeline_mode = #tpu.pipeline_mode<synchronous>, transform_indices = @transform_4, window_bounds = array<i64: 1, 512>}, {transform_indices = @transform_5, window_bounds = array<i64: 8, 512>}]} {
    %c0_i32 = arith.constant 0 : i32
    %0 = arith.cmpi eq, %arg1, %c0_i32 : i32
    %1 = arith.extui %0 : i1 to i32
    %c0_i32_0 = arith.constant 0 : i32
    %2 = arith.cmpi ne, %1, %c0_i32_0 : i32
    scf.if %2 {
      %c0_7 = arith.constant 0 : index
      %c0_8 = arith.constant 0 : index
      %13 = vector.load %arg2[%c0_7, %c0_8] : memref<8x32xbf16, #tpu.memory_space<vmem>>, vector<8x32xbf16>
      %c0_9 = arith.constant 0 : index
      %c0_10 = arith.constant 0 : index
      %14 = vector.load %arg3[%c0_9, %c0_10] : memref<32x2048xbf16, #tpu.memory_space<vmem>>, vector<32x2048xbf16>
      %cst_11 = arith.constant dense<0.000000e+00> : vector<8x2048xf32>
      %15 = tpu.matmul %13, %14, %cst_11 {dimension_numbers = #tpu.dot_dimension_numbers<[1], [0], [0], [1], [0, 0, 1, 1], [], []>} : vector<8x32xbf16>, vector<32x2048xbf16>, vector<8x2048xf32> -> vector<8x2048xf32>
      %c0_12 = arith.constant 0 : index
      %c0_13 = arith.constant 0 : index
      %16 = vector.load %arg4[%c0_12, %c0_13] : memref<1x2048xf32, #tpu.memory_space<vmem>>, vector<1x2048xf32>
      %17 = vector.broadcast %16 : vector<1x2048xf32> to vector<8x2048xf32>
      %18 = arith.addf %15, %17 : vector<8x2048xf32>
      %cst_14 = arith.constant 0.000000e+00 : f32
      %19 = vector.broadcast %cst_14 : f32 to vector<8x2048xf32>
      %20 = arith.maximumf %18, %19 : vector<8x2048xf32>
      %21 = arith.truncf %20 : vector<8x2048xf32> to vector<8x2048xbf16>
      %c0_15 = arith.constant 0 : index
      %c0_16 = arith.constant 0 : index
      %22 = vector.load %arg8[%c0_15, %c0_16] : memref<8x2048xbf16, #tpu.memory_space<vmem>>, vector<8x2048xbf16>
      tpu.vector_store %arg8[%c0_15, %c0_16], %21 {strides = array<i32>} : memref<8x2048xbf16, #tpu.memory_space<vmem>>, vector<8x2048xbf16>,
    } else {
    }
    %c1_i32 = arith.constant 1 : i32
    %3 = arith.muli %arg0, %c1_i32 : i32
    %4 = arith.addi %3, %arg1 : i32
    %c0 = arith.constant 0 : index
    %c0_1 = arith.constant 0 : index
    %5 = vector.load %arg8[%c0, %c0_1] : memref<8x2048xbf16, #tpu.memory_space<vmem>>, vector<8x2048xbf16>
    %c0_2 = arith.constant 0 : index
    %c0_3 = arith.constant 0 : index
    %6 = vector.load %arg5[%c0_2, %c0_3] : memref<2048x512xbf16, #tpu.memory_space<vmem>>, vector<2048x512xbf16>
    %cst = arith.constant dense<0.000000e+00> : vector<8x512xf32>
    %7 = tpu.matmul %5, %6, %cst {dimension_numbers = #tpu.dot_dimension_numbers<[1], [0], [0], [1], [0, 0, 1, 1], [], []>} : vector<8x2048xbf16>, vector<2048x512xbf16>, vector<8x512xf32> -> vector<8x512xf32>
    %8 = arith.index_cast %4 : i32 to index
    %c0_4 = arith.constant 0 : index
    %9 = vector.load %arg6[%8, %c0_4] : memref<1x512xf32, #tpu.memory_space<vmem>>, vector<1x512xf32>
    %10 = vector.broadcast %9 : vector<1x512xf32> to vector<8x512xf32>
    %11 = arith.addf %7, %10 : vector<8x512xf32>
    %c0_5 = arith.constant 0 : index
    %c0_6 = arith.constant 0 : index
    %12 = vector.load %arg7[%c0_5, %c0_6] : memref<8x512xf32, #tpu.memory_space<vmem>>, vector<8x512xf32>
    tpu.vector_store %arg7[%c0_5, %c0_6], %11 {strides = array<i32>} : memref<8x512xf32, #tpu.memory_space<vmem>>, vector<8x512xf32>,
    return
  }
  func.func @transform_0(%arg0: i32, %arg1: i32) -> (i32, i32) {
    %c0_i32 = arith.constant 0 : i32
    %c0_i32_0 = arith.constant 0 : i32
    %c0_i32_1 = arith.constant 0 : i32
    return %c0_i32, %c0_i32_0 : i32, i32
  }
  func.func @transform_1(%arg0: i32, %arg1: i32) -> (i32, i32) {
    %c0_i32 = arith.constant 0 : i32
    %c0_i32_0 = arith.constant 0 : i32
    %c0_i32_1 = arith.constant 0 : i32
    return %c0_i32, %c0_i32_0 : i32, i32
  }
  func.func @transform_2(%arg0: i32, %arg1: i32) -> (i32, i32) {
    %c0_i32 = arith.constant 0 : i32
    %c0_i32_0 = arith.constant 0 : i32
    %c0_i32_1 = arith.constant 0 : i32
    return %c0_i32, %c0_i32_0 : i32, i32
  }
  func.func @transform_3(%arg0: i32, %arg1: i32) -> (i32, i32) {
    %c1_i32 = arith.constant 1 : i32
    %0 = arith.muli %arg0, %c1_i32 : i32
    %1 = arith.addi %0, %arg1 : i32
    %c0_i32 = arith.constant 0 : i32
    %c0_i32_0 = arith.constant 0 : i32
    return %c0_i32, %1 : i32, i32
  }
  func.func @transform_4(%arg0: i32, %arg1: i32) -> (i32, i32) {
    %c0_i32 = arith.constant 0 : i32
    %c0_i32_0 = arith.constant 0 : i32
    %c0_i32_1 = arith.constant 0 : i32
    return %c0_i32, %c0_i32_0 : i32, i32
  }
  func.func @transform_5(%arg0: i32, %arg1: i32) -> (i32, i32) {
    %c1_i32 = arith.constant 1 : i32
    %0 = arith.muli %arg0, %c1_i32 : i32
    %1 = arith.addi %0, %arg1 : i32
    %c0_i32 = arith.constant 0 : i32
    %c0_i32_0 = arith.constant 0 : i32
    return %c0_i32, %1 : i32, i32
  }
}

</mosaic_0001>

<llo_original>
// kernel: tpu_custom_call.1
$region0: #{tpu_custom_call.1}
  #allocation0 [shape = 'u32[]', space=smem, size = 0x4, offset = 0x4, fixed_abs, tag = 'smem constant byte address 0x4 - core index']
  #allocation1 [shape = 'u32[144,128]{1,0:T(1,128)}', space=vmem, size = 0x12000, scoped, tag = 'internal scratch']
  #allocation2 [shape = 'bf16[8,2048]{1,0:T(8,128)(2,1)}', space=vmem, size = 0x8000, scoped, tag = 'scratch operand']
  %s0 = inlined_call_operand.hbm [shape: bf16[8,32], index: 0, kind: input, shape index: {}]
  %s1 = inlined_call_operand.hbm [shape: bf16[32,2048], index: 1, kind: input, shape index: {}]
  %s2 = inlined_call_operand.hbm [shape: f32[1,2048], index: 2, kind: input, shape index: {}]
  %s3 = inlined_call_operand.hbm [shape: bf16[2048,512], index: 3, kind: input, shape index: {}]
  %s4 = inlined_call_operand.hbm [shape: f32[1,512], index: 4, kind: input, shape index: {}]
  %s5 = inlined_call_operand.hbm [shape: f32[8,512], index: 5, kind: output, shape index: {}]
  %s6 = sld [smem:[#allocation0]]
  $region54: #{tpu_custom_call.1} parent=0
    _
  %s8 = ssub.s32 1, %s6
  %s9 = scalar_select 0, %s8, %s6
  $region1: #{tpu_custom_call.1} parent=0
    #allocation3 [shape = 'u8[2048]{0}', space=vmem, size = 0x800, scoped, tag = 'input window, operand 0, single buffered']
    #allocation4 [shape = 's32[1]{0}', space=sflag, size = 0x4, scoped, tag = 'scoped memory for tpu_custom_call.1']
    #allocation5 [shape = 's32[1]{0}', space=sflag, size = 0x4, scoped, tag = 'scoped memory for tpu_custom_call.1']
    #allocation6 [shape = 'u8[131072]{0}', space=vmem, size = 0x20000, scoped, tag = 'input window, operand 1, single buffered']
    #allocation7 [shape = 's32[1]{0}', space=sflag, size = 0x4, scoped, tag = 'scoped memory for tpu_custom_call.1']
    #allocation8 [shape = 'u8[8192]{0}', space=vmem, size = 0x2000, scoped, tag = 'input window, operand 2, single buffered']
    #allocation9 [shape = 'u8[2097152]{0}', space=vmem, size = 0x200000, scoped, tag = 'input window, operand 3, single buffered']
    #allocation10 [shape = 's32[1]{0}', space=sflag, size = 0x4, scoped, tag = 'scoped memory for tpu_custom_call.1']
    #allocation11 [shape = 'u8[2048]{0}', space=vmem, size = 0x800, scoped, tag = 'input window, operand 4, single buffered']
    #allocation12 [shape = 'u8[16384]{0}', space=vmem, size = 0x4000, scoped, tag = 'output window, operand 0, single buffered']
    %10 = vsyncpa [#allocation4], 0
    %11 = vsyncpa [#allocation7], 0
    %12 = vsyncpa [#allocation10], 0
    %13 = vsyncpa [#allocation5], 0
    // Predicated region
    $region2: #{tpu_custom_call.1} parent=1 // pred_check
      _
    $region3: #{tpu_custom_call.1} parent=1 // pred_check_branch
      %15 = sbr.rel (0) target = $region5
    $region4: #{tpu_custom_call.1} parent=1 // pred_region
      %s17 = ssub.s32 64, 64
      %18 = vsyncadd [#allocation4], %s17
      %s20 = sshll.u32 [#allocation3], 4
      %s21 = int_to_ptr.vmem [resolvable:$true] %s20
      %23 = dma.hbm_to_vmem [thread:$0]  %s0, 64, %s21, [#allocation4]
    $region5: #{tpu_custom_call.1} parent=1 // pred_fallthru
      _
    // Predicated region
    $region6: #{tpu_custom_call.1} parent=1 // pred_check
      _
    $region7: #{tpu_custom_call.1} parent=1 // pred_check_branch
      %25 = sbr.rel (0) target = $region9
    $region8: #{tpu_custom_call.1} parent=1 // pred_region
      %s27 = ssub.s32 4096, 4096
      %28 = vsyncadd [#allocation7], %s27
      %s29 = sshll.u32 [#allocation6], 4
      %s30 = int_to_ptr.vmem [resolvable:$true] %s29
      %35 = dma.hbm_to_vmem [thread:$0]  %s1, 4096, %s30, [#allocation7], 1024, 1024, 64
    $region9: #{tpu_custom_call.1} parent=1 // pred_fallthru
      _
    // Predicated region
    $region10: #{tpu_custom_call.1} parent=1 // pred_check
      _
    $region11: #{tpu_custom_call.1} parent=1 // pred_check_branch
      %37 = sbr.rel (0) target = $region13
    $region12: #{tpu_custom_call.1} parent=1 // pred_region
      %s39 = ssub.s32 256, 256
      %40 = vsyncadd [#allocation7], %s39
      %s42 = sshll.u32 [#allocation8], 4
      %s43 = int_to_ptr.vmem [resolvable:$true] %s42
      %45 = dma.hbm_to_vmem [thread:$0]  %s2, 256, %s43, [#allocation7]
    $region13: #{tpu_custom_call.1} parent=1 // pred_fallthru
      _
    // Predicated region
    $region14: #{tpu_custom_call.1} parent=1 // pred_check
      _
    $region15: #{tpu_custom_call.1} parent=1 // pred_check_branch
      %47 = sbr.rel (0) target = $region17
    $region16: #{tpu_custom_call.1} parent=1 // pred_region
      %s48 = sadd.s32 0, 0
      %s49 = smul.u32 4, %s48
      %s51 = ssub.s32 65536, 65536
      %52 = vsyncadd [#allocation10], %s51
      %s53 = smul.addr %s49, 64
      %s54 = scalar_lea.hbm %s3, %s53
      %s55 = sshll.u32 [#allocation9], 4
      %s56 = int_to_ptr.vmem [resolvable:$true] %s55
      %61 = dma.hbm_to_vmem [thread:$0]  %s54, 65536, %s56, [#allocation10], 256, 256, 16
    $region17: #{tpu_custom_call.1} parent=1 // pred_fallthru
      _
    // Predicated region
    $region18: #{tpu_custom_call.1} parent=1 // pred_check
      _
    $region19: #{tpu_custom_call.1} parent=1 // pred_check_branch
      %63 = sbr.rel (0) target = $region21
    $region20: #{tpu_custom_call.1} parent=1 // pred_region
      %s65 = ssub.s32 64, 64
      %66 = vsyncadd [#allocation10], %s65
      %s68 = sshll.u32 [#allocation11], 4
      %s69 = int_to_ptr.vmem [resolvable:$true] %s68
      %71 = dma.hbm_to_vmem [thread:$0]  %s4, 64, %s69, [#allocation10]
    $region21: #{tpu_custom_call.1} parent=1 // pred_fallthru
      _
    // Predicated region
    $region22: #{tpu_custom_call.1} parent=1 // pred_check
      _
    $region23: #{tpu_custom_call.1} parent=1 // pred_check_branch
      %73 = sbr.rel (0) target = $region25
    $region24: #{tpu_custom_call.1} parent=1 // pred_region
      %74 = dma.done [#allocation4], 64
    $region25: #{tpu_custom_call.1} parent=1 // pred_fallthru
      _
    // Predicated region
    $region26: #{tpu_custom_call.1} parent=1 // pred_check
      _
    $region27: #{tpu_custom_call.1} parent=1 // pred_check_branch
      %76 = sbr.rel (0) target = $region29
    $region28: #{tpu_custom_call.1} parent=1 // pred_region
      %77 = dma.done [#allocation7], 4096
    $region29: #{tpu_custom_call.1} parent=1 // pred_fallthru
      _
    // Predicated region
    $region30: #{tpu_custom_call.1} parent=1 // pred_check
      _
    $region31: #{tpu_custom_call.1} parent=1 // pred_check_branch
      %79 = sbr.rel (0) target = $region33
    $region32: #{tpu_custom_call.1} parent=1 // pred_region
      %80 = dma.done [#allocation7], 256
    $region33: #{tpu_custom_call.1} parent=1 // pred_fallthru
      _
    // Predicated region
    $region34: #{tpu_custom_call.1} parent=1 // pred_check
      _
    $region35: #{tpu_custom_call.1} parent=1 // pred_check_branch
      %82 = sbr.rel (0) target = $region37
    $region36: #{tpu_custom_call.1} parent=1 // pred_region
      %83 = dma.done [#allocation10], 65536
    $region37: #{tpu_custom_call.1} parent=1 // pred_fallthru
      _
    // Predicated region
    $region38: #{tpu_custom_call.1} parent=1 // pred_check
      _
    $region39: #{tpu_custom_call.1} parent=1 // pred_check_branch
      %85 = sbr.rel (0) target = $region41
    $region40: #{tpu_custom_call.1} parent=1 // pred_region
      %86 = dma.done [#allocation10], 64
    $region41: #{tpu_custom_call.1} parent=1 // pred_fallthru
      _
    %s87 = sadd.s32 0, 0
    %s88 = smul.u32 4, %s87
    %s89 = sadd.s32 0, 0
    %s90 = smul.u32 4, %s89
    %p92 = scmp.eq.s32.totalorder 0, 0
    // Predicated region
    $region42: #{tpu_custom_call.1} parent=1 // pred_check
      %p93 = pneg %p92
    $region43: #{tpu_custom_call.1} parent=1 // pred_check_branch
      %95 = sbr.rel (%p93) target = $region45
    $region44: #{tpu_custom_call.1} parent=1 // pred_region
      %v96 = vld [vmem:[#allocation3] sm:$0xf]
      %v97 = vld [vmem:[#allocation6] sm:$0xff]
      %v98 = vld [vmem:[#allocation6 + $0x8] sm:$0xff]
      %v99 = vld [vmem:[#allocation6 + $0x10] sm:$0xff]
      %v100 = vld [vmem:[#allocation6 + $0x18] sm:$0xff]
      %v101 = vld [vmem:[#allocation6 + $0x20] sm:$0xff]
      %v102 = vld [vmem:[#allocation6 + $0x28] sm:$0xff]
      %v103 = vld [vmem:[#allocation6 + $0x30] sm:$0xff]
      %v104 = vld [vmem:[#allocation6 + $0x38] sm:$0xff]
      %v105 = vld [vmem:[#allocation6 + $0x40] sm:$0xff]
      %v106 = vld [vmem:[#allocation6 + $0x48] sm:$0xff]
      %v107 = vld [vmem:[#allocation6 + $0x50] sm:$0xff]
      %v108 = vld [vmem:[#allocation6 + $0x58] sm:$0xff]
      %v109 = vld [vmem:[#allocation6 + $0x60] sm:$0xff]
      %v110 = vld [vmem:[#allocation6 + $0x68] sm:$0xff]
      %v111 = vld [vmem:[#allocation6 + $0x70] sm:$0xff]
      %v112 = vld [vmem:[#allocation6 + $0x78] sm:$0xff]
      %v113 = vld [vmem:[#allocation6 + $0x80] sm:$0xff]
      %v114 = vld [vmem:[#allocation6 + $0x88] sm:$0xff]
      %v115 = vld [vmem:[#allocation6 + $0x90] sm:$0xff]
      %v116 = vld [vmem:[#allocation6 + $0x98] sm:$0xff]
      %v117 = vld [vmem:[#allocation6 + $0xa0] sm:$0xff]
      %v118 = vld [vmem:[#allocation6 + $0xa8] sm:$0xff]
      %v119 = vld [vmem:[#allocation6 + $0xb0] sm:$0xff]
      %v120 = vld [vmem:[#allocation6 + $0xb8] sm:$0xff]
      %v121 = vld [vmem:[#allocation6 + $0xc0] sm:$0xff]
      %v122 = vld [vmem:[#allocation6 + $0xc8] sm:$0xff]
      %v123 = vld [vmem:[#allocation6 + $0xd0] sm:$0xff]
      %v124 = vld [vmem:[#allocation6 + $0xd8] sm:$0xff]
      %v125 = vld [vmem:[#allocation6 + $0xe0] sm:$0xff]
      %v126 = vld [vmem:[#allocation6 + $0xe8] sm:$0xff]
      %v127 = vld [vmem:[#allocation6 + $0xf0] sm:$0xff]
      %v128 = vld [vmem:[#allocation6 + $0xf8] sm:$0xff]
      %v129 = vld [vmem:[#allocation8] sm:$0xff]
      %v130 = vld [vmem:[#allocation8 + $0x8] sm:$0xff]
      %v133 = vlaneseq
      %v134 = vshrl.u32 %v133, 7
      %v135 = vsub.s32 0, %v134
      %v136 = vrot.slane %v129, %v135
      %v137 = vlaneseq
      %v138 = vshrl.u32 %v137, 7
      %v139 = vsub.s32 1, %v138
      %v140 = vrot.slane %v129, %v139
      %v141 = vlaneseq
      %v142 = vshrl.u32 %v141, 7
      %v143 = vsub.s32 2, %v142
      %v144 = vrot.slane %v129, %v143
      %v145 = vlaneseq
      %v146 = vshrl.u32 %v145, 7
      %v147 = vsub.s32 3, %v146
      %v148 = vrot.slane %v129, %v147
      %v149 = vlaneseq
      %v150 = vshrl.u32 %v149, 7
      %v151 = vsub.s32 4, %v150
      %v152 = vrot.slane %v129, %v151
      %v153 = vlaneseq
      %v154 = vshrl.u32 %v153, 7
      %v155 = vsub.s32 5, %v154
      %v156 = vrot.slane %v129, %v155
      %v157 = vlaneseq
      %v158 = vshrl.u32 %v157, 7
      %v159 = vsub.s32 6, %v158
      %v160 = vrot.slane %v129, %v159
      %v161 = vlaneseq
      %v162 = vshrl.u32 %v161, 7
      %v163 = vsub.s32 7, %v162
      %v164 = vrot.slane %v129, %v163
      %v165 = vlaneseq
      %v166 = vshrl.u32 %v165, 7
      %v167 = vsub.s32 0, %v166
      %v168 = vrot.slane %v130, %v167
      %v169 = vlaneseq
      %v170 = vshrl.u32 %v169, 7
      %v171 = vsub.s32 1, %v170
      %v172 = vrot.slane %v130, %v171
      %v173 = vlaneseq
      %v174 = vshrl.u32 %v173, 7
      %v175 = vsub.s32 2, %v174
      %v176 = vrot.slane %v130, %v175
      %v177 = vlaneseq
      %v178 = vshrl.u32 %v177, 7
      %v179 = vsub.s32 3, %v178
      %v180 = vrot.slane %v130, %v179
      %v181 = vlaneseq
      %v182 = vshrl.u32 %v181, 7
      %v183 = vsub.s32 4, %v182
      %v184 = vrot.slane %v130, %v183
      %v185 = vlaneseq
      %v186 = vshrl.u32 %v185, 7
      %v187 = vsub.s32 5, %v186
      %v188 = vrot.slane %v130, %v187
      %v189 = vlaneseq
      %v190 = vshrl.u32 %v189, 7
      %v191 = vsub.s32 6, %v190
      %v192 = vrot.slane %v130, %v191
      %v193 = vlaneseq
      %v194 = vshrl.u32 %v193, 7
      %v195 = vsub.s32 7, %v194
      %v196 = vrot.slane %v130, %v195
      %v245 = vunpack.c.l.b16 %v97
      %v246 = vunpack.c.h.b16 %v97
      %v247 = vunpack.c.l.b16 %v98
      %v248 = vunpack.c.h.b16 %v98
      %v249 = vunpack.c.l.b16 %v99
      %v250 = vunpack.c.h.b16 %v99
      %v251 = vunpack.c.l.b16 %v100
      %v252 = vunpack.c.h.b16 %v100
      %v253 = vunpack.c.l.b16 %v101
      %v254 = vunpack.c.h.b16 %v101
      %v255 = vunpack.c.l.b16 %v102
      %v256 = vunpack.c.h.b16 %v102
      %v257 = vunpack.c.l.b16 %v103
      %v258 = vunpack.c.h.b16 %v103
      %v259 = vunpack.c.l.b16 %v104
      %v260 = vunpack.c.h.b16 %v104
      %v261 = vunpack.c.l.b16 %v105
      %v262 = vunpack.c.h.b16 %v105
      %v263 = vunpack.c.l.b16 %v106
      %v264 = vunpack.c.h.b16 %v106
      %v265 = vunpack.c.l.b16 %v107
      %v266 = vunpack.c.h.b16 %v107
      %v267 = vunpack.c.l.b16 %v108
      %v268 = vunpack.c.h.b16 %v108
      %v269 = vunpack.c.l.b16 %v109
      %v270 = vunpack.c.h.b16 %v109
      %v271 = vunpack.c.l.b16 %v110
      %v272 = vunpack.c.h.b16 %v110
      %v273 = vunpack.c.l.b16 %v111
      %v274 = vunpack.c.h.b16 %v111
      %v275 = vunpack.c.l.b16 %v112
      %v276 = vunpack.c.h.b16 %v112
      %v277 = vunpack.c.l.b16 %v113
      %v278 = vunpack.c.h.b16 %v113
      %v279 = vunpack.c.l.b16 %v114
      %v280 = vunpack.c.h.b16 %v114
      %v281 = vunpack.c.l.b16 %v115
      %v282 = vunpack.c.h.b16 %v115
      %v283 = vunpack.c.l.b16 %v116
      %v284 = vunpack.c.h.b16 %v116
      %v285 = vunpack.c.l.b16 %v117
      %v286 = vunpack.c.h.b16 %v117
      %v287 = vunpack.c.l.b16 %v118
      %v288 = vunpack.c.h.b16 %v118
      %v289 = vunpack.c.l.b16 %v119
      %v290 = vunpack.c.h.b16 %v119
      %v291 = vunpack.c.l.b16 %v120
      %v292 = vunpack.c.h.b16 %v120
      %v293 = vunpack.c.l.b16 %v121
      %v294 = vunpack.c.h.b16 %v121
      %v295 = vunpack.c.l.b16 %v122
      %v296 = vunpack.c.h.b16 %v122
      %v297 = vunpack.c.l.b16 %v123
      %v298 = vunpack.c.h.b16 %v123
      %v299 = vunpack.c.l.b16 %v124
      %v300 = vunpack.c.h.b16 %v124
      %v301 = vunpack.c.l.b16 %v125
      %v302 = vunpack.c.h.b16 %v125
      %v303 = vunpack.c.l.b16 %v126
      %v304 = vunpack.c.h.b16 %v126
      %v305 = vunpack.c.l.b16 %v127
      %v306 = vunpack.c.h.b16 %v127
      %v307 = vunpack.c.l.b16 %v128
      %v308 = vunpack.c.h.b16 %v128
      %v309 = vpack.c.b16 %v261, %v245
      %v310 = vpack.c.b16 %v262, %v246
      %v311 = vpack.c.b16 %v263, %v247
      %v312 = vpack.c.b16 %v264, %v248
      %v313 = vpack.c.b16 %v265, %v249
      %v314 = vpack.c.b16 %v266, %v250
      %v315 = vpack.c.b16 %v267, %v251
      %v316 = vpack.c.b16 %v268, %v252
      %v317 = vpack.c.b16 %v269, %v253
      %v318 = vpack.c.b16 %v270, %v254
      %v319 = vpack.c.b16 %v271, %v255
      %v320 = vpack.c.b16 %v272, %v256
      %v321 = vpack.c.b16 %v273, %v257
      %v322 = vpack.c.b16 %v274, %v258
      %v323 = vpack.c.b16 %v275, %v259
      %v324 = vpack.c.b16 %v276, %v260
      %v325 = vpack.c.b16 %v293, %v277
      %v326 = vpack.c.b16 %v294, %v278
      %v327 = vpack.c.b16 %v295, %v279
      %v328 = vpack.c.b16 %v296, %v280
      %v329 = vpack.c.b16 %v297, %v281
      %v330 = vpack.c.b16 %v298, %v282
      %v331 = vpack.c.b16 %v299, %v283
      %v332 = vpack.c.b16 %v300, %v284
      %v333 = vpack.c.b16 %v301, %v285
      %v334 = vpack.c.b16 %v302, %v286
      %v335 = vpack.c.b16 %v303, %v287
      %v336 = vpack.c.b16 %v304, %v288
      %v337 = vpack.c.b16 %v305, %v289
      %v338 = vpack.c.b16 %v306, %v290
      %v339 = vpack.c.b16 %v307, %v291
      %v340 = vpack.c.b16 %v308, %v292
      %vm373 = vcmask 261120
      %v375 = vsel %vm373, %v96, 0
      %377 = vmatprep.subr.bf16.mxu0 0
      %378 = vmatpush1.bf16.msra.mxu0 0
      %379 = vmatprep.subr.bf16.mxu0 0
      %380 = vmatpush1.bf16.msra.mxu0 0
      %381 = vmatprep.subr.bf16.mxu0 0
      %382 = vmatpush1.bf16.msra.mxu0 0
      %383 = vmatprep.subr.bf16.mxu0 0
      %384 = vmatpush1.bf16.msra.mxu0 0
      %385 = vmatprep.subr.bf16.mxu0 0
      %386 = vmatpush1.bf16.msra.mxu0 0
      %387 = vmatprep.subr.bf16.mxu0 0
      %388 = vmatpush1.bf16.msra.mxu0 0
      %389 = vmatprep.subr.bf16.mxu0 %v326
      %390 = vmatpush1.bf16.msra.mxu0 %v325
      %391 = vmatprep.subr.bf16.mxu0 %v310
      %392 = vmatpush1.bf16.msra.mxu0 %v309
      %393 = vmatprep.subr.bf16.mxu0 0
      %394 = vmatpush2.bf16.msra.mxu0 0
      %395 = vmatprep.subr.bf16.mxu0 0
      %396 = vmatpush2.bf16.msra.mxu0 0
      %397 = vmatprep.subr.bf16.mxu0 0
      %398 = vmatpush2.bf16.msra.mxu0 0
      %399 = vmatprep.subr.bf16.mxu0 0
      %400 = vmatpush2.bf16.msra.mxu0 0
      %401 = vmatprep.subr.bf16.mxu0 0
      %402 = vmatpush2.bf16.msra.mxu0 0
      %403 = vmatprep.subr.bf16.mxu0 0
      %404 = vmatpush2.bf16.msra.mxu0 0
      %405 = vmatprep.subr.bf16.mxu0 0
      %406 = vmatpush2.bf16.msra.mxu0 0
      %407 = vmatprep.subr.bf16.mxu0 0
      %408 = vmatpush2.bf16.msra.mxu0 0
      %409 = vmatprep.mubr.bf16.mxu0 0
      %410 = vmatmul.mubr.bf16.gmra.mxu0 %v375
      %v411 = vpop.f32.mrf.mxu0
      %v412 = vadd.f32 %v136, %v411
      %v413 = vpop.f32.mrf.mxu0
      %v414 = vadd.f32 %v140, %v413
      %v415 = vpop.f32.mrf.mxu0
      %v416 = vpop.f32.mrf.mxu0
      %417 = vdwg.mxu0
      %418 = vmatprep.subr.bf16.mxu0 0
      %419 = vmatpush1.bf16.msra.mxu0 0
      %420 = vmatprep.subr.bf16.mxu0 0
      %421 = vmatpush1.bf16.msra.mxu0 0
      %422 = vmatprep.subr.bf16.mxu0 0
      %423 = vmatpush1.bf16.msra.mxu0 0
      %424 = vmatprep.subr.bf16.mxu0 0
      %425 = vmatpush1.bf16.msra.mxu0 0
      %426 = vmatprep.subr.bf16.mxu0 0
      %427 = vmatpush1.bf16.msra.mxu0 0
      %428 = vmatprep.subr.bf16.mxu0 0
      %429 = vmatpush1.bf16.msra.mxu0 0
      %430 = vmatprep.subr.bf16.mxu0 %v328
      %431 = vmatpush1.bf16.msra.mxu0 %v327
      %432 = vmatprep.subr.bf16.mxu0 %v312
      %433 = vmatpush1.bf16.msra.mxu0 %v311
      %434 = vmatprep.subr.bf16.mxu0 0
      %435 = vmatpush2.bf16.msra.mxu0 0
      %436 = vmatprep.subr.bf16.mxu0 0
      %437 = vmatpush2.bf16.msra.mxu0 0
      %438 = vmatprep.subr.bf16.mxu0 0
      %439 = vmatpush2.bf16.msra.mxu0 0
      %440 = vmatprep.subr.bf16.mxu0 0
      %441 = vmatpush2.bf16.msra.mxu0 0
      %442 = vmatprep.subr.bf16.mxu0 0
      %443 = vmatpush2.bf16.msra.mxu0 0
      %444 = vmatprep.subr.bf16.mxu0 0
      %445 = vmatpush2.bf16.msra.mxu0 0
      %446 = vmatprep.subr.bf16.mxu0 0
      %447 = vmatpush2.bf16.msra.mxu0 0
      %448 = vmatprep.subr.bf16.mxu0 0
      %449 = vmatpush2.bf16.msra.mxu0 0
      %450 = vmatprep.mubr.bf16.mxu0 0
      %451 = vmatmul.mubr.bf16.gmra.mxu0 %v375
      %v452 = vpop.f32.mrf.mxu0
      %v453 = vadd.f32 %v144, %v452
      %v454 = vpop.f32.mrf.mxu0
      %v455 = vadd.f32 %v148, %v454
      %v456 = vpop.f32.mrf.mxu0
      %v457 = vpop.f32.mrf.mxu0
      %458 = vdwg.mxu0
      %459 = vmatprep.subr.bf16.mxu0 0
      %460 = vmatpush1.bf16.msra.mxu0 0
      %461 = vmatprep.subr.bf16.mxu0 0
      %462 = vmatpush1.bf16.msra.mxu0 0
      %463 = vmatprep.subr.bf16.mxu0 0
      %464 = vmatpush1.bf16.msra.mxu0 0
      %465 = vmatprep.subr.bf16.mxu0 0
      %466 = vmatpush1.bf16.msra.mxu0 0
      %467 = vmatprep.subr.bf16.mxu0 0
      %468 = vmatpush1.bf16.msra.mxu0 0
      %469 = vmatprep.subr.bf16.mxu0 0
      %470 = vmatpush1.bf16.msra.mxu0 0
      %471 = vmatprep.subr.bf16.mxu0 %v330
      %472 = vmatpush1.bf16.msra.mxu0 %v329
      %473 = vmatprep.subr.bf16.mxu0 %v314
      %474 = vmatpush1.bf16.msra.mxu0 %v313
      %475 = vmatprep.subr.bf16.mxu0 0
      %476 = vmatpush2.bf16.msra.mxu0 0
      %477 = vmatprep.subr.bf16.mxu0 0
      %478 = vmatpush2.bf16.msra.mxu0 0
      %479 = vmatprep.subr.bf16.mxu0 0
      %480 = vmatpush2.bf16.msra.mxu0 0
      %481 = vmatprep.subr.bf16.mxu0 0
      %482 = vmatpush2.bf16.msra.mxu0 0
      %483 = vmatprep.subr.bf16.mxu0 0
      %484 = vmatpush2.bf16.msra.mxu0 0
      %485 = vmatprep.subr.bf16.mxu0 0
      %486 = vmatpush2.bf16.msra.mxu0 0
      %487 = vmatprep.subr.bf16.mxu0 0
      %488 = vmatpush2.bf16.msra.mxu0 0
      %489 = vmatprep.subr.bf16.mxu0 0
      %490 = vmatpush2.bf16.msra.mxu0 0
      %491 = vmatprep.mubr.bf16.mxu0 0
      %492 = vmatmul.mubr.bf16.gmra.mxu0 %v375
      %v493 = vpop.f32.mrf.mxu0
      %v494 = vadd.f32 %v152, %v493
      %v495 = vpop.f32.mrf.mxu0
      %v496 = vadd.f32 %v156, %v495
      %v497 = vpop.f32.mrf.mxu0
      %v498 = vpop.f32.mrf.mxu0
      %499 = vdwg.mxu0
      %500 = vmatprep.subr.bf16.mxu0 0
      %501 = vmatpush1.bf16.msra.mxu0 0
      %502 = vmatprep.subr.bf16.mxu0 0
      %503 = vmatpush1.bf16.msra.mxu0 0
      %504 = vmatprep.subr.bf16.mxu0 0
      %505 = vmatpush1.bf16.msra.mxu0 0
      %506 = vmatprep.subr.bf16.mxu0 0
      %507 = vmatpush1.bf16.msra.mxu0 0
      %508 = vmatprep.subr.bf16.mxu0 0
      %509 = vmatpush1.bf16.msra.mxu0 0
      %510 = vmatprep.subr.bf16.mxu0 0
      %511 = vmatpush1.bf16.msra.mxu0 0
      %512 = vmatprep.subr.bf16.mxu0 %v332
      %513 = vmatpush1.bf16.msra.mxu0 %v331
      %514 = vmatprep.subr.bf16.mxu0 %v316
      %515 = vmatpush1.bf16.msra.mxu0 %v315
      %516 = vmatprep.subr.bf16.mxu0 0
      %517 = vmatpush2.bf16.msra.mxu0 0
      %518 = vmatprep.subr.bf16.mxu0 0
      %519 = vmatpush2.bf16.msra.mxu0 0
      %520 = vmatprep.subr.bf16.mxu0 0
      %521 = vmatpush2.bf16.msra.mxu0 0
      %522 = vmatprep.subr.bf16.mxu0 0
      %523 = vmatpush2.bf16.msra.mxu0 0
      %524 = vmatprep.subr.bf16.mxu0 0
      %525 = vmatpush2.bf16.msra.mxu0 0
      %526 = vmatprep.subr.bf16.mxu0 0
      %527 = vmatpush2.bf16.msra.mxu0 0
      %528 = vmatprep.subr.bf16.mxu0 0
      %529 = vmatpush2.bf16.msra.mxu0 0
      %530 = vmatprep.subr.bf16.mxu0 0
      %531 = vmatpush2.bf16.msra.mxu0 0
      %532 = vmatprep.mubr.bf16.mxu0 0
      %533 = vmatmul.mubr.bf16.gmra.mxu0 %v375
      %v534 = vpop.f32.mrf.mxu0
      %v535 = vadd.f32 %v160, %v534
      %v536 = vpop.f32.mrf.mxu0
      %v537 = vadd.f32 %v164, %v536
      %v538 = vpop.f32.mrf.mxu0
      %v539 = vpop.f32.mrf.mxu0
      %540 = vdwg.mxu0
      %541 = vmatprep.subr.bf16.mxu0 0
      %542 = vmatpush1.bf16.msra.mxu0 0
      %543 = vmatprep.subr.bf16.mxu0 0
      %544 = vmatpush1.bf16.msra.mxu0 0
      %545 = vmatprep.subr.bf16.mxu0 0
      %546 = vmatpush1.bf16.msra.mxu0 0
      %547 = vmatprep.subr.bf16.mxu0 0
      %548 = vmatpush1.bf16.msra.mxu0 0
      %549 = vmatprep.subr.bf16.mxu0 0
      %550 = vmatpush1.bf16.msra.mxu0 0
      %551 = vmatprep.subr.bf16.mxu0 0
      %552 = vmatpush1.bf16.msra.mxu0 0
      %553 = vmatprep.subr.bf16.mxu0 %v334
      %554 = vmatpush1.bf16.msra.mxu0 %v333
      %555 = vmatprep.subr.bf16.mxu0 %v318
      %556 = vmatpush1.bf16.msra.mxu0 %v317
      %557 = vmatprep.subr.bf16.mxu0 0
      %558 = vmatpush2.bf16.msra.mxu0 0
      %559 = vmatprep.subr.bf16.mxu0 0
      %560 = vmatpush2.bf16.msra.mxu0 0
      %561 = vmatprep.subr.bf16.mxu0 0
      %562 = vmatpush2.bf16.msra.mxu0 0
      %563 = vmatprep.subr.bf16.mxu0 0
      %564 = vmatpush2.bf16.msra.mxu0 0
      %565 = vmatprep.subr.bf16.mxu0 0
      %566 = vmatpush2.bf16.msra.mxu0 0
      %567 = vmatprep.subr.bf16.mxu0 0
      %568 = vmatpush2.bf16.msra.mxu0 0
      %569 = vmatprep.subr.bf16.mxu0 0
      %570 = vmatpush2.bf16.msra.mxu0 0
      %571 = vmatprep.subr.bf16.mxu0 0
      %572 = vmatpush2.bf16.msra.mxu0 0
      %573 = vmatprep.mubr.bf16.mxu0 0
      %574 = vmatmul.mubr.bf16.gmra.mxu0 %v375
      %v575 = vpop.f32.mrf.mxu0
      %v576 = vadd.f32 %v168, %v575
      %v577 = vpop.f32.mrf.mxu0
      %v578 = vadd.f32 %v172, %v577
      %v579 = vpop.f32.mrf.mxu0
      %v580 = vpop.f32.mrf.mxu0
      %581 = vdwg.mxu0
      %582 = vmatprep.subr.bf16.mxu0 0
      %583 = vmatpush1.bf16.msra.mxu0 0
      %584 = vmatprep.subr.bf16.mxu0 0
      %585 = vmatpush1.bf16.msra.mxu0 0
      %586 = vmatprep.subr.bf16.mxu0 0
      %587 = vmatpush1.bf16.msra.mxu0 0
      %588 = vmatprep.subr.bf16.mxu0 0
      %589 = vmatpush1.bf16.msra.mxu0 0
      %590 = vmatprep.subr.bf16.mxu0 0
      %591 = vmatpush1.bf16.msra.mxu0 0
      %592 = vmatprep.subr.bf16.mxu0 0
      %593 = vmatpush1.bf16.msra.mxu0 0
      %594 = vmatprep.subr.bf16.mxu0 %v336
      %595 = vmatpush1.bf16.msra.mxu0 %v335
      %596 = vmatprep.subr.bf16.mxu0 %v320
      %597 = vmatpush1.bf16.msra.mxu0 %v319
      %598 = vmatprep.subr.bf16.mxu0 0
      %599 = vmatpush2.bf16.msra.mxu0 0
      %600 = vmatprep.subr.bf16.mxu0 0
      %601 = vmatpush2.bf16.msra.mxu0 0
      %602 = vmatprep.subr.bf16.mxu0 0
      %603 = vmatpush2.bf16.msra.mxu0 0
      %604 = vmatprep.subr.bf16.mxu0 0
      %605 = vmatpush2.bf16.msra.mxu0 0
      %606 = vmatprep.subr.bf16.mxu0 0
      %607 = vmatpush2.bf16.msra.mxu0 0
      %608 = vmatprep.subr.bf16.mxu0 0
      %609 = vmatpush2.bf16.msra.mxu0 0
      %610 = vmatprep.subr.bf16.mxu0 0
      %611 = vmatpush2.bf16.msra.mxu0 0
      %612 = vmatprep.subr.bf16.mxu0 0
      %613 = vmatpush2.bf16.msra.mxu0 0
      %614 = vmatprep.mubr.bf16.mxu0 0
      %615 = vmatmul.mubr.bf16.gmra.mxu0 %v375
      %v616 = vpop.f32.mrf.mxu0
      %v617 = vadd.f32 %v176, %v616
      %v618 = vpop.f32.mrf.mxu0
      %v619 = vadd.f32 %v180, %v618
      %v620 = vpop.f32.mrf.mxu0
      %v621 = vpop.f32.mrf.mxu0
      %622 = vdwg.mxu0
      %623 = vmatprep.subr.bf16.mxu0 0
      %624 = vmatpush1.bf16.msra.mxu0 0
      %625 = vmatprep.subr.bf16.mxu0 0
      %626 = vmatpush1.bf16.msra.mxu0 0
      %627 = vmatprep.subr.bf16.mxu0 0
      %628 = vmatpush1.bf16.msra.mxu0 0
      %629 = vmatprep.subr.bf16.mxu0 0
      %630 = vmatpush1.bf16.msra.mxu0 0
      %631 = vmatprep.subr.bf16.mxu0 0
      %632 = vmatpush1.bf16.msra.mxu0 0
      %633 = vmatprep.subr.bf16.mxu0 0
      %634 = vmatpush1.bf16.msra.mxu0 0
      %635 = vmatprep.subr.bf16.mxu0 %v338
      %636 = vmatpush1.bf16.msra.mxu0 %v337
      %637 = vmatprep.subr.bf16.mxu0 %v322
      %638 = vmatpush1.bf16.msra.mxu0 %v321
      %639 = vmatprep.subr.bf16.mxu0 0
      %640 = vmatpush2.bf16.msra.mxu0 0
      %641 = vmatprep.subr.bf16.mxu0 0
      %642 = vmatpush2.bf16.msra.mxu0 0
      %643 = vmatprep.subr.bf16.mxu0 0
      %644 = vmatpush2.bf16.msra.mxu0 0
      %645 = vmatprep.subr.bf16.mxu0 0
      %646 = vmatpush2.bf16.msra.mxu0 0
      %647 = vmatprep.subr.bf16.mxu0 0
      %648 = vmatpush2.bf16.msra.mxu0 0
      %649 = vmatprep.subr.bf16.mxu0 0
      %650 = vmatpush2.bf16.msra.mxu0 0
      %651 = vmatprep.subr.bf16.mxu0 0
      %652 = vmatpush2.bf16.msra.mxu0 0
      %653 = vmatprep.subr.bf16.mxu0 0
      %654 = vmatpush2.bf16.msra.mxu0 0
      %655 = vmatprep.mubr.bf16.mxu0 0
      %656 = vmatmul.mubr.bf16.gmra.mxu0 %v375
      %v657 = vpop.f32.mrf.mxu0
      %v658 = vadd.f32 %v184, %v657
      %v659 = vpop.f32.mrf.mxu0
      %v660 = vadd.f32 %v188, %v659
      %v661 = vpop.f32.mrf.mxu0
      %v662 = vpop.f32.mrf.mxu0
      %663 = vdwg.mxu0
      %664 = vmatprep.subr.bf16.mxu0 0
      %665 = vmatpush1.bf16.msra.mxu0 0
      %666 = vmatprep.subr.bf16.mxu0 0
      %667 = vmatpush1.bf16.msra.mxu0 0
      %668 = vmatprep.subr.bf16.mxu0 0
      %669 = vmatpush1.bf16.msra.mxu0 0
      %670 = vmatprep.subr.bf16.mxu0 0
      %671 = vmatpush1.bf16.msra.mxu0 0
      %672 = vmatprep.subr.bf16.mxu0 0
      %673 = vmatpush1.bf16.msra.mxu0 0
      %674 = vmatprep.subr.bf16.mxu0 0
      %675 = vmatpush1.bf16.msra.mxu0 0
      %676 = vmatprep.subr.bf16.mxu0 %v340
      %677 = vmatpush1.bf16.msra.mxu0 %v339
      %678 = vmatprep.subr.bf16.mxu0 %v324
      %679 = vmatpush1.bf16.msra.mxu0 %v323
      %680 = vmatprep.subr.bf16.mxu0 0
      %681 = vmatpush2.bf16.msra.mxu0 0
      %682 = vmatprep.subr.bf16.mxu0 0
      %683 = vmatpush2.bf16.msra.mxu0 0
      %684 = vmatprep.subr.bf16.mxu0 0
      %685 = vmatpush2.bf16.msra.mxu0 0
      %686 = vmatprep.subr.bf16.mxu0 0
      %687 = vmatpush2.bf16.msra.mxu0 0
      %688 = vmatprep.subr.bf16.mxu0 0
      %689 = vmatpush2.bf16.msra.mxu0 0
      %690 = vmatprep.subr.bf16.mxu0 0
      %691 = vmatpush2.bf16.msra.mxu0 0
      %692 = vmatprep.subr.bf16.mxu0 0
      %693 = vmatpush2.bf16.msra.mxu0 0
      %694 = vmatprep.subr.bf16.mxu0 0
      %695 = vmatpush2.bf16.msra.mxu0 0
      %696 = vmatprep.mubr.bf16.mxu0 0
      %697 = vmatmul.mubr.bf16.gmra.mxu0 %v375
      %v698 = vpop.f32.mrf.mxu0
      %v699 = vadd.f32 %v192, %v698
      %v700 = vpop.f32.mrf.mxu0
      %v701 = vadd.f32 %v196, %v700
      %v702 = vpop.f32.mrf.mxu0
      %v703 = vpop.f32.mrf.mxu0
      %704 = vdwg.mxu0
      %v705 = vmax.f32 %v412, 0.0
      %v706 = vmax.f32 %v414, 0.0
      %v707 = vmax.f32 %v453, 0.0
      %v708 = vmax.f32 %v455, 0.0
      %v709 = vmax.f32 %v494, 0.0
      %v710 = vmax.f32 %v496, 0.0
      %v711 = vmax.f32 %v535, 0.0
      %v712 = vmax.f32 %v537, 0.0
      %v713 = vmax.f32 %v576, 0.0
      %v714 = vmax.f32 %v578, 0.0
      %v715 = vmax.f32 %v617, 0.0
      %v716 = vmax.f32 %v619, 0.0
      %v717 = vmax.f32 %v658, 0.0
      %v718 = vmax.f32 %v660, 0.0
      %v719 = vmax.f32 %v699, 0.0
      %v720 = vmax.f32 %v701, 0.0
      %v721 = vpack.c.bf16 %v705, %v705
      %v722 = vpack.c.bf16 %v706, %v706
      %v723 = vpack.c.bf16 %v707, %v707
      %v724 = vpack.c.bf16 %v708, %v708
      %v725 = vpack.c.bf16 %v709, %v709
      %v726 = vpack.c.bf16 %v710, %v710
      %v727 = vpack.c.bf16 %v711, %v711
      %v728 = vpack.c.bf16 %v712, %v712
      %v729 = vpack.c.bf16 %v713, %v713
      %v730 = vpack.c.bf16 %v714, %v714
      %v731 = vpack.c.bf16 %v715, %v715
      %v732 = vpack.c.bf16 %v716, %v716
      %v733 = vpack.c.bf16 %v717, %v717
      %v734 = vpack.c.bf16 %v718, %v718
      %v735 = vpack.c.bf16 %v719, %v719
      %v736 = vpack.c.bf16 %v720, %v720
      %v753 = vunpack.c.l.b16 %v721
      %v754 = vunpack.c.l.b16 %v722
      %v755 = vunpack.c.l.b16 %v723
      %v756 = vunpack.c.l.b16 %v724
      %v757 = vunpack.c.l.b16 %v725
      %v758 = vunpack.c.l.b16 %v726
      %v759 = vunpack.c.l.b16 %v727
      %v760 = vunpack.c.l.b16 %v728
      %v761 = vunpack.c.l.b16 %v729
      %v762 = vunpack.c.l.b16 %v730
      %v763 = vunpack.c.l.b16 %v731
      %v764 = vunpack.c.l.b16 %v732
      %v765 = vunpack.c.l.b16 %v733
      %v766 = vunpack.c.l.b16 %v734
      %v767 = vunpack.c.l.b16 %v735
      %v768 = vunpack.c.l.b16 %v736
      %v769 = vpack.c.b16 %v754, %v753
      %v770 = vpack.c.b16 %v756, %v755
      %v771 = vpack.c.b16 %v758, %v757
      %v772 = vpack.c.b16 %v760, %v759
      %v773 = vpack.c.b16 %v762, %v761
      %v774 = vpack.c.b16 %v764, %v763
      %v775 = vpack.c.b16 %v766, %v765
      %v776 = vpack.c.b16 %v768, %v767
      %785 = vst [vmem:[#allocation2] sm:$0xff] %v769
      %786 = vst [vmem:[#allocation2 + $0x8] sm:$0xff] %v770
      %787 = vst [vmem:[#allocation2 + $0x10] sm:$0xff] %v771
      %788 = vst [vmem:[#allocation2 + $0x18] sm:$0xff] %v772
      %789 = vst [vmem:[#allocation2 + $0x20] sm:$0xff] %v773
      %790 = vst [vmem:[#allocation2 + $0x28] sm:$0xff] %v774
      %791 = vst [vmem:[#allocation2 + $0x30] sm:$0xff] %v775
      %792 = vst [vmem:[#allocation2 + $0x38] sm:$0xff] %v776
    $region45: #{tpu_custom_call.1} parent=1 // pred_fallthru
      _
    %s793 = sadd.s32 0, 0
    %v794 = vld [vmem:[#allocation2] sm:$0xff]
    %v795 = vld [vmem:[#allocation2 + $0x8] sm:$0xff]
    %v796 = vld [vmem:[#allocation2 + $0x10] sm:$0xff]
    %v797 = vld [vmem:[#allocation2 + $0x18] sm:$0xff]
    %v798 = vld [vmem:[#allocation2 + $0x20] sm:$0xff]
    %v799 = vld [vmem:[#allocation2 + $0x28] sm:$0xff]
    %v800 = vld [vmem:[#allocation2 + $0x30] sm:$0xff]
    %v801 = vld [vmem:[#allocation2 + $0x38] sm:$0xff]
    %v802 = vld [vmem:[#allocation9] sm:$0xff]
    %v803 = vld [vmem:[#allocation9 + $0x8] sm:$0xff]
    %v804 = vld [vmem:[#allocation9 + $0x10] sm:$0xff]
    %v805 = vld [vmem:[#allocation9 + $0x18] sm:$0xff]
    %v806 = vld [vmem:[#allocation9 + $0x20] sm:$0xff]
    %v807 = vld [vmem:[#allocation9 + $0x28] sm:$0xff]
    %v808 = vld [vmem:[#allocation9 + $0x30] sm:$0xff]
    %v809 = vld [vmem:[#allocation9 + $0x38] sm:$0xff]
    %v810 = vld [vmem:[#allocation9 + $0x40] sm:$0xff]
    %v811 = vld [vmem:[#allocation9 + $0x48] sm:$0xff]
    %v812 = vld [vmem:[#allocation9 + $0x50] sm:$0xff]
    %v813 = vld [vmem:[#allocation9 + $0x58] sm:$0xff]
    %v814 = vld [vmem:[#allocation9 + $0x60] sm:$0xff]
    %v815 = vld [vmem:[#allocation9 + $0x68] sm:$0xff]
    %v816 = vld [vmem:[#allocation9 + $0x70] sm:$0xff]
    %v817 = vld [vmem:[#allocation9 + $0x78] sm:$0xff]
    %v818 = vld [vmem:[#allocation9 + $0x80] sm:$0xff]
    %v819 = vld [vmem:[#allocation9 + $0x88] sm:$0xff]
    %v820 = vld [vmem:[#allocation9 + $0x90] sm:$0xff]
    %v821 = vld [vmem:[#allocation9 + $0x98] sm:$0xff]
    %v822 = vld [vmem:[#allocation9 + $0xa0] sm:$0xff]
    %v823 = vld [vmem:[#allocation9 + $0xa8] sm:$0xff]
    %v824 = vld [vmem:[#allocation9 + $0xb0] sm:$0xff]
    %v825 = vld [vmem:[#allocation9 + $0xb8] sm:$0xff]
    %v826 = vld [vmem:[#allocation9 + $0xc0] sm:$0xff]
    %v827 = vld [vmem:[#allocation9 + $0xc8] sm:$0xff]
    %v828 = vld [vmem:[#allocation9 + $0xd0] sm:$0xff]
    %v829 = vld [vmem:[#allocation9 + $0xd8] sm:$0xff]
    %v830 = vld [vmem:[#allocation9 + $0xe0] sm:$0xff]
    %v831 = vld [vmem:[#allocation9 + $0xe8] sm:$0xff]
    %v832 = vld [vmem:[#allocation9 + $0xf0] sm:$0xff]
    %v833 = vld [vmem:[#allocation9 + $0xf8] sm:$0xff]
    %v834 = vld [vmem:[#allocation9 + $0x100] sm:$0xff]
    %v835 = vld [vmem:[#allocation9 + $0x108] sm:$0xff]
    %v836 = vld [vmem:[#allocation9 + $0x110] sm:$0xff]
    %v837 = vld [vmem:[#allocation9 + $0x118] sm:$0xff]
    %v838 = vld [vmem:[#allocation9 + $0x120] sm:$0xff]
    %v839 = vld [vmem:[#allocation9 + $0x128] sm:$0xff]
    %v840 = vld [vmem:[#allocation9 + $0x130] sm:$0xff]
    %v841 = vld [vmem:[#allocation9 + $0x138] sm:$0xff]
    %v842 = vld [vmem:[#allocation9 + $0x140] sm:$0xff]
    %v843 = vld [vmem:[#allocation9 + $0x148] sm:$0xff]
    %v844 = vld [vmem:[#allocation9 + $0x150] sm:$0xff]
    %v845 = vld [vmem:[#allocation9 + $0x158] sm:$0xff]
    %v846 = vld [vmem:[#allocation9 + $0x160] sm:$0xff]
    %v847 = vld [vmem:[#allocation9 + $0x168] sm:$0xff]
    %v848 = vld [vmem:[#allocation9 + $0x170] sm:$0xff]
    %v849 = vld [vmem:[#allocation9 + $0x178] sm:$0xff]
    %v850 = vld [vmem:[#allocation9 + $0x180] sm:$0xff]
    %v851 = vld [vmem:[#allocation9 + $0x188] sm:$0xff]
    %v852 = vld [vmem:[#allocation9 + $0x190] sm:$0xff]
    %v853 = vld [vmem:[#allocation9 + $0x198] sm:$0xff]
    %v854 = vld [vmem:[#allocation9 + $0x1a0] sm:$0xff]
    %v855 = vld [vmem:[#allocation9 + $0x1a8] sm:$0xff]
    %v856 = vld [vmem:[#allocation9 + $0x1b0] sm:$0xff]
    %v857 = vld [vmem:[#allocation9 + $0x1b8] sm:$0xff]
    %v858 = vld [vmem:[#allocation9 + $0x1c0] sm:$0xff]
    %v859 = vld [vmem:[#allocation9 + $0x1c8] sm:$0xff]
    %v860 = vld [vmem:[#allocation9 + $0x1d0] sm:$0xff]
    %v861 = vld [vmem:[#allocation9 + $0x1d8] sm:$0xff]
    %v862 = vld [vmem:[#allocation9 + $0x1e0] sm:$0xff]
    %v863 = vld [vmem:[#allocation9 + $0x1e8] sm:$0xff]
    %v864 = vld [vmem:[#allocation9 + $0x1f0] sm:$0xff]
    %v865 = vld [vmem:[#allocation9 + $0x1f8] sm:$0xff]
    %v866 = vld [vmem:[#allocation9 + $0x200] sm:$0xff]
    %v867 = vld [vmem:[#allocation9 + $0x208] sm:$0xff]
    %v868 = vld [vmem:[#allocation9 + $0x210] sm:$0xff]
    %v869 = vld [vmem:[#allocation9 + $0x218] sm:$0xff]
    %v870 = vld [vmem:[#allocation9 + $0x220] sm:$0xff]
    %v871 = vld [vmem:[#allocation9 + $0x228] sm:$0xff]
    %v872 = vld [vmem:[#allocation9 + $0x230] sm:$0xff]
    %v873 = vld [vmem:[#allocation9 + $0x238] sm:$0xff]
    %v874 = vld [vmem:[#allocation9 + $0x240] sm:$0xff]
    %v875 = vld [vmem:[#allocation9 + $0x248] sm:$0xff]
    %v876 = vld [vmem:[#allocation9 + $0x250] sm:$0xff]
    %v877 = vld [vmem:[#allocation9 + $0x258] sm:$0xff]
    %v878 = vld [vmem:[#allocation9 + $0x260] sm:$0xff]
    %v879 = vld [vmem:[#allocation9 + $0x268] sm:$0xff]
    %v880 = vld [vmem:[#allocation9 + $0x270] sm:$0xff]
    %v881 = vld [vmem:[#allocation9 + $0x278] sm:$0xff]
    %v882 = vld [vmem:[#allocation9 + $0x280] sm:$0xff]
    %v883 = vld [vmem:[#allocation9 + $0x288] sm:$0xff]
    %v884 = vld [vmem:[#allocation9 + $0x290] sm:$0xff]
    %v885 = vld [vmem:[#allocation9 + $0x298] sm:$0xff]
    %v886 = vld [vmem:[#allocation9 + $0x2a0] sm:$0xff]
    %v887 = vld [vmem:[#allocation9 + $0x2a8] sm:$0xff]
    %v888 = vld [vmem:[#allocation9 + $0x2b0] sm:$0xff]
    %v889 = vld [vmem:[#allocation9 + $0x2b8] sm:$0xff]
    %v890 = vld [vmem:[#allocation9 + $0x2c0] sm:$0xff]
    %v891 = vld [vmem:[#allocation9 + $0x2c8] sm:$0xff]
    %v892 = vld [vmem:[#allocation9 + $0x2d0] sm:$0xff]
    %v893 = vld [vmem:[#allocation9 + $0x2d8] sm:$0xff]
    %v894 = vld [vmem:[#allocation9 + $0x2e0] sm:$0xff]
    %v895 = vld [vmem:[#allocation9 + $0x2e8] sm:$0xff]
    %v896 = vld [vmem:[#allocation9 + $0x2f0] sm:$0xff]
    %v897 = vld [vmem:[#allocation9 + $0x2f8] sm:$0xff]
    %v898 = vld [vmem:[#allocation9 + $0x300] sm:$0xff]
    %v899 = vld [vmem:[#allocation9 + $0x308] sm:$0xff]
    %v900 = vld [vmem:[#allocation9 + $0x310] sm:$0xff]
    %v901 = vld [vmem:[#allocation9 + $0x318] sm:$0xff]
    %v902 = vld [vmem:[#allocation9 + $0x320] sm:$0xff]
    %v903 = vld [vmem:[#allocation9 + $0x328] sm:$0xff]
    %v904 = vld [vmem:[#allocation9 + $0x330] sm:$0xff]
    %v905 = vld [vmem:[#allocation9 + $0x338] sm:$0xff]
    %v906 = vld [vmem:[#allocation9 + $0x340] sm:$0xff]
    %v907 = vld [vmem:[#allocation9 + $0x348] sm:$0xff]
    %v908 = vld [vmem:[#allocation9 + $0x350] sm:$0xff]
    %v909 = vld [vmem:[#allocation9 + $0x358] sm:$0xff]
    %v910 = vld [vmem:[#allocation9 + $0x360] sm:$0xff]
    %v911 = vld [vmem:[#allocation9 + $0x368] sm:$0xff]
    %v912 = vld [vmem:[#allocation9 + $0x370] sm:$0xff]
    %v913 = vld [vmem:[#allocation9 + $0x378] sm:$0xff]
    %v914 = vld [vmem:[#allocation9 + $0x380] sm:$0xff]
    %v915 = vld [vmem:[#allocation9 + $0x388] sm:$0xff]
    %v916 = vld [vmem:[#allocation9 + $0x390] sm:$0xff]
    %v917 = vld [vmem:[#allocation9 + $0x398] sm:$0xff]
    %v918 = vld [vmem:[#allocation9 + $0x3a0] sm:$0xff]
    %v919 = vld [vmem:[#allocation9 + $0x3a8] sm:$0xff]
    %v920 = vld [vmem:[#allocation9 + $0x3b0] sm:$0xff]
    %v921 = vld [vmem:[#allocation9 + $0x3b8] sm:$0xff]
    %v922 = vld [vmem:[#allocation9 + $0x3c0] sm:$0xff]
    %v923 = vld [vmem:[#allocation9 + $0x3c8] sm:$0xff]
    %v924 = vld [vmem:[#allocation9 + $0x3d0] sm:$0xff]
    %v925 = vld [vmem:[#allocation9 + $0x3d8] sm:$0xff]
    %v926 = vld [vmem:[#allocation9 + $0x3e0] sm:$0xff]
    %v927 = vld [vmem:[#allocation9 + $0x3e8] sm:$0xff]
    %v928 = vld [vmem:[#allocation9 + $0x3f0] sm:$0xff]
    %v929 = vld [vmem:[#allocation9 + $0x3f8] sm:$0xff]
    %v930 = vld [vmem:[#allocation9 + $0x400] sm:$0xff]
    %v931 = vld [vmem:[#allocation9 + $0x408] sm:$0xff]
    %v932 = vld [vmem:[#allocation9 + $0x410] sm:$0xff]
    %v933 = vld [vmem:[#allocation9 + $0x418] sm:$0xff]
    %v934 = vld [vmem:[#allocation9 + $0x420] sm:$0xff]
    %v935 = vld [vmem:[#allocation9 + $0x428] sm:$0xff]
    %v936 = vld [vmem:[#allocation9 + $0x430] sm:$0xff]
    %v937 = vld [vmem:[#allocation9 + $0x438] sm:$0xff]
    %v938 = vld [vmem:[#allocation9 + $0x440] sm:$0xff]
    %v939 = vld [vmem:[#allocation9 + $0x448] sm:$0xff]
    %v940 = vld [vmem:[#allocation9 + $0x450] sm:$0xff]
    %v941 = vld [vmem:[#allocation9 + $0x458] sm:$0xff]
    %v942 = vld [vmem:[#allocation9 + $0x460] sm:$0xff]
    %v943 = vld [vmem:[#allocation9 + $0x468] sm:$0xff]
    %v944 = vld [vmem:[#allocation9 + $0x470] sm:$0xff]
    %v945 = vld [vmem:[#allocation9 + $0x478] sm:$0xff]
    %v946 = vld [vmem:[#allocation9 + $0x480] sm:$0xff]
    %v947 = vld [vmem:[#allocation9 + $0x488] sm:$0xff]
    %v948 = vld [vmem:[#allocation9 + $0x490] sm:$0xff]
    %v949 = vld [vmem:[#allocation9 + $0x498] sm:$0xff]
    %v950 = vld [vmem:[#allocation9 + $0x4a0] sm:$0xff]
    %v951 = vld [vmem:[#allocation9 + $0x4a8] sm:$0xff]
    %v952 = vld [vmem:[#allocation9 + $0x4b0] sm:$0xff]
    %v953 = vld [vmem:[#allocation9 + $0x4b8] sm:$0xff]
    %v954 = vld [vmem:[#allocation9 + $0x4c0] sm:$0xff]
    %v955 = vld [vmem:[#allocation9 + $0x4c8] sm:$0xff]
    %v956 = vld [vmem:[#allocation9 + $0x4d0] sm:$0xff]
    %v957 = vld [vmem:[#allocation9 + $0x4d8] sm:$0xff]
    %v958 = vld [vmem:[#allocation9 + $0x4e0] sm:$0xff]
    %v959 = vld [vmem:[#allocation9 + $0x4e8] sm:$0xff]
    %v960 = vld [vmem:[#allocation9 + $0x4f0] sm:$0xff]
    %v961 = vld [vmem:[#allocation9 + $0x4f8] sm:$0xff]
    %v962 = vld [vmem:[#allocation9 + $0x500] sm:$0xff]
    %v963 = vld [vmem:[#allocation9 + $0x508] sm:$0xff]
    %v964 = vld [vmem:[#allocation9 + $0x510] sm:$0xff]
    %v965 = vld [vmem:[#allocation9 + $0x518] sm:$0xff]
    %v966 = vld [vmem:[#allocation9 + $0x520] sm:$0xff]
    %v967 = vld [vmem:[#allocation9 + $0x528] sm:$0xff]
    %v968 = vld [vmem:[#allocation9 + $0x530] sm:$0xff]
    %v969 = vld [vmem:[#allocation9 + $0x538] sm:$0xff]
    %v970 = vld [vmem:[#allocation9 + $0x540] sm:$0xff]
    %v971 = vld [vmem:[#allocation9 + $0x548] sm:$0xff]
    %v972 = vld [vmem:[#allocation9 + $0x550] sm:$0xff]
    %v973 = vld [vmem:[#allocation9 + $0x558] sm:$0xff]
    %v974 = vld [vmem:[#allocation9 + $0x560] sm:$0xff]
    %v975 = vld [vmem:[#allocation9 + $0x568] sm:$0xff]
    %v976 = vld [vmem:[#allocation9 + $0x570] sm:$0xff]
    %v977 = vld [vmem:[#allocation9 + $0x578] sm:$0xff]
    %v978 = vld [vmem:[#allocation9 + $0x580] sm:$0xff]
    %v979 = vld [vmem:[#allocation9 + $0x588] sm:$0xff]
    %v980 = vld [vmem:[#allocation9 + $0x590] sm:$0xff]
    %v981 = vld [vmem:[#allocation9 + $0x598] sm:$0xff]
    %v982 = vld [vmem:[#allocation9 + $0x5a0] sm:$0xff]
    %v983 = vld [vmem:[#allocation9 + $0x5a8] sm:$0xff]
    %v984 = vld [vmem:[#allocation9 + $0x5b0] sm:$0xff]
    %v985 = vld [vmem:[#allocation9 + $0x5b8] sm:$0xff]
    %v986 = vld [vmem:[#allocation9 + $0x5c0] sm:$0xff]
    %v987 = vld [vmem:[#allocation9 + $0x5c8] sm:$0xff]
    %v988 = vld [vmem:[#allocation9 + $0x5d0] sm:$0xff]
    %v989 = vld [vmem:[#allocation9 + $0x5d8] sm:$0xff]
    %v990 = vld [vmem:[#allocation9 + $0x5e0] sm:$0xff]
    %v991 = vld [vmem:[#allocation9 + $0x5e8] sm:$0xff]
    %v992 = vld [vmem:[#allocation9 + $0x5f0] sm:$0xff]
    %v993 = vld [vmem:[#allocation9 + $0x5f8] sm:$0xff]
    %v994 = vld [vmem:[#allocation9 + $0x600] sm:$0xff]
    %v995 = vld [vmem:[#allocation9 + $0x608] sm:$0xff]
    %v996 = vld [vmem:[#allocation9 + $0x610] sm:$0xff]
    %v997 = vld [vmem:[#allocation9 + $0x618] sm:$0xff]
    %v998 = vld [vmem:[#allocation9 + $0x620] sm:$0xff]
    %v999 = vld [vmem:[#allocation9 + $0x628] sm:$0xff]
    %v1000 = vld [vmem:[#allocation9 + $0x630] sm:$0xff]
    %v1001 = vld [vmem:[#allocation9 + $0x638] sm:$0xff]
    %v1002 = vld [vmem:[#allocation9 + $0x640] sm:$0xff]
    %v1003 = vld [vmem:[#allocation9 + $0x648] sm:$0xff]
    %v1004 = vld [vmem:[#allocation9 + $0x650] sm:$0xff]
    %v1005 = vld [vmem:[#allocation9 + $0x658] sm:$0xff]
    %v1006 = vld [vmem:[#allocation9 + $0x660] sm:$0xff]
    %v1007 = vld [vmem:[#allocation9 + $0x668] sm:$0xff]
    %v1008 = vld [vmem:[#allocation9 + $0x670] sm:$0xff]
    %v1009 = vld [vmem:[#allocation9 + $0x678] sm:$0xff]
    %v1010 = vld [vmem:[#allocation9 + $0x680] sm:$0xff]
    %v1011 = vld [vmem:[#allocation9 + $0x688] sm:$0xff]
    %v1012 = vld [vmem:[#allocation9 + $0x690] sm:$0xff]
    %v1013 = vld [vmem:[#allocation9 + $0x698] sm:$0xff]
    %v1014 = vld [vmem:[#allocation9 + $0x6a0] sm:$0xff]
    %v1015 = vld [vmem:[#allocation9 + $0x6a8] sm:$0xff]
    %v1016 = vld [vmem:[#allocation9 + $0x6b0] sm:$0xff]
    %v1017 = vld [vmem:[#allocation9 + $0x6b8] sm:$0xff]
    %v1018 = vld [vmem:[#allocation9 + $0x6c0] sm:$0xff]
    %v1019 = vld [vmem:[#allocation9 + $0x6c8] sm:$0xff]
    %v1020 = vld [vmem:[#allocation9 + $0x6d0] sm:$0xff]
    %v1021 = vld [vmem:[#allocation9 + $0x6d8] sm:$0xff]
    %v1022 = vld [vmem:[#allocation9 + $0x6e0] sm:$0xff]
    %v1023 = vld [vmem:[#allocation9 + $0x6e8] sm:$0xff]
    %v1024 = vld [vmem:[#allocation9 + $0x6f0] sm:$0xff]
    %v1025 = vld [vmem:[#allocation9 + $0x6f8] sm:$0xff]
    %v1026 = vld [vmem:[#allocation9 + $0x700] sm:$0xff]
    %v1027 = vld [vmem:[#allocation9 + $0x708] sm:$0xff]
    %v1028 = vld [vmem:[#allocation9 + $0x710] sm:$0xff]
    %v1029 = vld [vmem:[#allocation9 + $0x718] sm:$0xff]
    %v1030 = vld [vmem:[#allocation9 + $0x720] sm:$0xff]
    %v1031 = vld [vmem:[#allocation9 + $0x728] sm:$0xff]
    %v1032 = vld [vmem:[#allocation9 + $0x730] sm:$0xff]
    %v1033 = vld [vmem:[#allocation9 + $0x738] sm:$0xff]
    %v1034 = vld [vmem:[#allocation9 + $0x740] sm:$0xff]
    %v1035 = vld [vmem:[#allocation9 + $0x748] sm:$0xff]
    %v1036 = vld [vmem:[#allocation9 + $0x750] sm:$0xff]
    %v1037 = vld [vmem:[#allocation9 + $0x758] sm:$0xff]
    %v1038 = vld [vmem:[#allocation9 + $0x760] sm:$0xff]
    %v1039 = vld [vmem:[#allocation9 + $0x768] sm:$0xff]
    %v1040 = vld [vmem:[#allocation9 + $0x770] sm:$0xff]
    %v1041 = vld [vmem:[#allocation9 + $0x778] sm:$0xff]
    %v1042 = vld [vmem:[#allocation9 + $0x780] sm:$0xff]
    %v1043 = vld [vmem:[#allocation9 + $0x788] sm:$0xff]
    %v1044 = vld [vmem:[#allocation9 + $0x790] sm:$0xff]
    %v1045 = vld [vmem:[#allocation9 + $0x798] sm:$0xff]
    %v1046 = vld [vmem:[#allocation9 + $0x7a0] sm:$0xff]
    %v1047 = vld [vmem:[#allocation9 + $0x7a8] sm:$0xff]
    %v1048 = vld [vmem:[#allocation9 + $0x7b0] sm:$0xff]
    %v1049 = vld [vmem:[#allocation9 + $0x7b8] sm:$0xff]
    %v1050 = vld [vmem:[#allocation9 + $0x7c0] sm:$0xff]
    %v1051 = vld [vmem:[#allocation9 + $0x7c8] sm:$0xff]
    %v1052 = vld [vmem:[#allocation9 + $0x7d0] sm:$0xff]
    %v1053 = vld [vmem:[#allocation9 + $0x7d8] sm:$0xff]
    %v1054 = vld [vmem:[#allocation9 + $0x7e0] sm:$0xff]
    %v1055 = vld [vmem:[#allocation9 + $0x7e8] sm:$0xff]
    %v1056 = vld [vmem:[#allocation9 + $0x7f0] sm:$0xff]
    %v1057 = vld [vmem:[#allocation9 + $0x7f8] sm:$0xff]
    %v1058 = vld [vmem:[#allocation9 + $0x800] sm:$0xff]
    %v1059 = vld [vmem:[#allocation9 + $0x808] sm:$0xff]
    %v1060 = vld [vmem:[#allocation9 + $0x810] sm:$0xff]
    %v1061 = vld [vmem:[#allocation9 + $0x818] sm:$0xff]
    %v1062 = vld [vmem:[#allocation9 + $0x820] sm:$0xff]
    %v1063 = vld [vmem:[#allocation9 + $0x828] sm:$0xff]
    %v1064 = vld [vmem:[#allocation9 + $0x830] sm:$0xff]
    %v1065 = vld [vmem:[#allocation9 + $0x838] sm:$0xff]
    %v1066 = vld [vmem:[#allocation9 + $0x840] sm:$0xff]
    %v1067 = vld [vmem:[#allocation9 + $0x848] sm:$0xff]
    %v1068 = vld [vmem:[#allocation9 + $0x850] sm:$0xff]
    %v1069 = vld [vmem:[#allocation9 + $0x858] sm:$0xff]
    %v1070 = vld [vmem:[#allocation9 + $0x860] sm:$0xff]
    %v1071 = vld [vmem:[#allocation9 + $0x868] sm:$0xff]
    %v1072 = vld [vmem:[#allocation9 + $0x870] sm:$0xff]
    %v1073 = vld [vmem:[#allocation9 + $0x878] sm:$0xff]
    %v1074 = vld [vmem:[#allocation9 + $0x880] sm:$0xff]
    %v1075 = vld [vmem:[#allocation9 + $0x888] sm:$0xff]
    %v1076 = vld [vmem:[#allocation9 + $0x890] sm:$0xff]
    %v1077 = vld [vmem:[#allocation9 + $0x898] sm:$0xff]
    %v1078 = vld [vmem:[#allocation9 + $0x8a0] sm:$0xff]
    %v1079 = vld [vmem:[#allocation9 + $0x8a8] sm:$0xff]
    %v1080 = vld [vmem:[#allocation9 + $0x8b0] sm:$0xff]
    %v1081 = vld [vmem:[#allocation9 + $0x8b8] sm:$0xff]
    %v1082 = vld [vmem:[#allocation9 + $0x8c0] sm:$0xff]
    %v1083 = vld [vmem:[#allocation9 + $0x8c8] sm:$0xff]
    %v1084 = vld [vmem:[#allocation9 + $0x8d0] sm:$0xff]
    %v1085 = vld [vmem:[#allocation9 + $0x8d8] sm:$0xff]
    %v1086 = vld [vmem:[#allocation9 + $0x8e0] sm:$0xff]
    %v1087 = vld [vmem:[#allocation9 + $0x8e8] sm:$0xff]
    %v1088 = vld [vmem:[#allocation9 + $0x8f0] sm:$0xff]
    %v1089 = vld [vmem:[#allocation9 + $0x8f8] sm:$0xff]
    %v1090 = vld [vmem:[#allocation9 + $0x900] sm:$0xff]
    %v1091 = vld [vmem:[#allocation9 + $0x908] sm:$0xff]
    %v1092 = vld [vmem:[#allocation9 + $0x910] sm:$0xff]
    %v1093 = vld [vmem:[#allocation9 + $0x918] sm:$0xff]
    %v1094 = vld [vmem:[#allocation9 + $0x920] sm:$0xff]
    %v1095 = vld [vmem:[#allocation9 + $0x928] sm:$0xff]
    %v1096 = vld [vmem:[#allocation9 + $0x930] sm:$0xff]
    %v1097 = vld [vmem:[#allocation9 + $0x938] sm:$0xff]
    %v1098 = vld [vmem:[#allocation9 + $0x940] sm:$0xff]
    %v1099 = vld [vmem:[#allocation9 + $0x948] sm:$0xff]
    %v1100 = vld [vmem:[#allocation9 + $0x950] sm:$0xff]
    %v1101 = vld [vmem:[#allocation9 + $0x958] sm:$0xff]
    %v1102 = vld [vmem:[#allocation9 + $0x960] sm:$0xff]
    %v1103 = vld [vmem:[#allocation9 + $0x968] sm:$0xff]
    %v1104 = vld [vmem:[#allocation9 + $0x970] sm:$0xff]
    %v1105 = vld [vmem:[#allocation9 + $0x978] sm:$0xff]
    %v1106 = vld [vmem:[#allocation9 + $0x980] sm:$0xff]
    %v1107 = vld [vmem:[#allocation9 + $0x988] sm:$0xff]
    %v1108 = vld [vmem:[#allocation9 + $0x990] sm:$0xff]
    %v1109 = vld [vmem:[#allocation9 + $0x998] sm:$0xff]
    %v1110 = vld [vmem:[#allocation9 + $0x9a0] sm:$0xff]
    %v1111 = vld [vmem:[#allocation9 + $0x9a8] sm:$0xff]
    %v1112 = vld [vmem:[#allocation9 + $0x9b0] sm:$0xff]
    %v1113 = vld [vmem:[#allocation9 + $0x9b8] sm:$0xff]
    %v1114 = vld [vmem:[#allocation9 + $0x9c0] sm:$0xff]
    %v1115 = vld [vmem:[#allocation9 + $0x9c8] sm:$0xff]
    %v1116 = vld [vmem:[#allocation9 + $0x9d0] sm:$0xff]
    %v1117 = vld [vmem:[#allocation9 + $0x9d8] sm:$0xff]
    %v1118 = vld [vmem:[#allocation9 + $0x9e0] sm:$0xff]
    %v1119 = vld [vmem:[#allocation9 + $0x9e8] sm:$0xff]
    %v1120 = vld [vmem:[#allocation9 + $0x9f0] sm:$0xff]
    %v1121 = vld [vmem:[#allocation9 + $0x9f8] sm:$0xff]
    %v1122 = vld [vmem:[#allocation9 + $0xa00] sm:$0xff]
    %v1123 = vld [vmem:[#allocation9 + $0xa08] sm:$0xff]
    %v1124 = vld [vmem:[#allocation9 + $0xa10] sm:$0xff]
    %v1125 = vld [vmem:[#allocation9 + $0xa18] sm:$0xff]
    %v1126 = vld [vmem:[#allocation9 + $0xa20] sm:$0xff]
    %v1127 = vld [vmem:[#allocation9 + $0xa28] sm:$0xff]
    %v1128 = vld [vmem:[#allocation9 + $0xa30] sm:$0xff]
    %v1129 = vld [vmem:[#allocation9 + $0xa38] sm:$0xff]
    %v1130 = vld [vmem:[#allocation9 + $0xa40] sm:$0xff]
    %v1131 = vld [vmem:[#allocation9 + $0xa48] sm:$0xff]
    %v1132 = vld [vmem:[#allocation9 + $0xa50] sm:$0xff]
    %v1133 = vld [vmem:[#allocation9 + $0xa58] sm:$0xff]
    %v1134 = vld [vmem:[#allocation9 + $0xa60] sm:$0xff]
    %v1135 = vld [vmem:[#allocation9 + $0xa68] sm:$0xff]
    %v1136 = vld [vmem:[#allocation9 + $0xa70] sm:$0xff]
    %v1137 = vld [vmem:[#allocation9 + $0xa78] sm:$0xff]
    %v1138 = vld [vmem:[#allocation9 + $0xa80] sm:$0xff]
    %v1139 = vld [vmem:[#allocation9 + $0xa88] sm:$0xff]
    %v1140 = vld [vmem:[#allocation9 + $0xa90] sm:$0xff]
    %v1141 = vld [vmem:[#allocation9 + $0xa98] sm:$0xff]
    %v1142 = vld [vmem:[#allocation9 + $0xaa0] sm:$0xff]
    %v1143 = vld [vmem:[#allocation9 + $0xaa8] sm:$0xff]
    %v1144 = vld [vmem:[#allocation9 + $0xab0] sm:$0xff]
    %v1145 = vld [vmem:[#allocation9 + $0xab8] sm:$0xff]
    %v1146 = vld [vmem:[#allocation9 + $0xac0] sm:$0xff]
    %v1147 = vld [vmem:[#allocation9 + $0xac8] sm:$0xff]
    %v1148 = vld [vmem:[#allocation9 + $0xad0] sm:$0xff]
    %v1149 = vld [vmem:[#allocation9 + $0xad8] sm:$0xff]
    %v1150 = vld [vmem:[#allocation9 + $0xae0] sm:$0xff]
    %v1151 = vld [vmem:[#allocation9 + $0xae8] sm:$0xff]
    %v1152 = vld [vmem:[#allocation9 + $0xaf0] sm:$0xff]
    %v1153 = vld [vmem:[#allocation9 + $0xaf8] sm:$0xff]
    %v1154 = vld [vmem:[#allocation9 + $0xb00] sm:$0xff]
    %v1155 = vld [vmem:[#allocation9 + $0xb08] sm:$0xff]
    %v1156 = vld [vmem:[#allocation9 + $0xb10] sm:$0xff]
    %v1157 = vld [vmem:[#allocation9 + $0xb18] sm:$0xff]
    %v1158 = vld [vmem:[#allocation9 + $0xb20] sm:$0xff]
    %v1159 = vld [vmem:[#allocation9 + $0xb28] sm:$0xff]
    %v1160 = vld [vmem:[#allocation9 + $0xb30] sm:$0xff]
    %v1161 = vld [vmem:[#allocation9 + $0xb38] sm:$0xff]
    %v1162 = vld [vmem:[#allocation9 + $0xb40] sm:$0xff]
    %v1163 = vld [vmem:[#allocation9 + $0xb48] sm:$0xff]
    %v1164 = vld [vmem:[#allocation9 + $0xb50] sm:$0xff]
    %v1165 = vld [vmem:[#allocation9 + $0xb58] sm:$0xff]
    %v1166 = vld [vmem:[#allocation9 + $0xb60] sm:$0xff]
    %v1167 = vld [vmem:[#allocation9 + $0xb68] sm:$0xff]
    %v1168 = vld [vmem:[#allocation9 + $0xb70] sm:$0xff]
    %v1169 = vld [vmem:[#allocation9 + $0xb78] sm:$0xff]
    %v1170 = vld [vmem:[#allocation9 + $0xb80] sm:$0xff]
    %v1171 = vld [vmem:[#allocation9 + $0xb88] sm:$0xff]
    %v1172 = vld [vmem:[#allocation9 + $0xb90] sm:$0xff]
    %v1173 = vld [vmem:[#allocation9 + $0xb98] sm:$0xff]
    %v1174 = vld [vmem:[#allocation9 + $0xba0] sm:$0xff]
    %v1175 = vld [vmem:[#allocation9 + $0xba8] sm:$0xff]
    %v1176 = vld [vmem:[#allocation9 + $0xbb0] sm:$0xff]
    %v1177 = vld [vmem:[#allocation9 + $0xbb8] sm:$0xff]
    %v1178 = vld [vmem:[#allocation9 + $0xbc0] sm:$0xff]
    %v1179 = vld [vmem:[#allocation9 + $0xbc8] sm:$0xff]
    %v1180 = vld [vmem:[#allocation9 + $0xbd0] sm:$0xff]
    %v1181 = vld [vmem:[#allocation9 + $0xbd8] sm:$0xff]
    %v1182 = vld [vmem:[#allocation9 + $0xbe0] sm:$0xff]
    %v1183 = vld [vmem:[#allocation9 + $0xbe8] sm:$0xff]
    %v1184 = vld [vmem:[#allocation9 + $0xbf0] sm:$0xff]
    %v1185 = vld [vmem:[#allocation9 + $0xbf8] sm:$0xff]
    %v1186 = vld [vmem:[#allocation9 + $0xc00] sm:$0xff]
    %v1187 = vld [vmem:[#allocation9 + $0xc08] sm:$0xff]
    %v1188 = vld [vmem:[#allocation9 + $0xc10] sm:$0xff]
    %v1189 = vld [vmem:[#allocation9 + $0xc18] sm:$0xff]
    %v1190 = vld [vmem:[#allocation9 + $0xc20] sm:$0xff]
    %v1191 = vld [vmem:[#allocation9 + $0xc28] sm:$0xff]
    %v1192 = vld [vmem:[#allocation9 + $0xc30] sm:$0xff]
    %v1193 = vld [vmem:[#allocation9 + $0xc38] sm:$0xff]
    %v1194 = vld [vmem:[#allocation9 + $0xc40] sm:$0xff]
    %v1195 = vld [vmem:[#allocation9 + $0xc48] sm:$0xff]
    %v1196 = vld [vmem:[#allocation9 + $0xc50] sm:$0xff]
    %v1197 = vld [vmem:[#allocation9 + $0xc58] sm:$0xff]
    %v1198 = vld [vmem:[#allocation9 + $0xc60] sm:$0xff]
    %v1199 = vld [vmem:[#allocation9 + $0xc68] sm:$0xff]
    %v1200 = vld [vmem:[#allocation9 + $0xc70] sm:$0xff]
    %v1201 = vld [vmem:[#allocation9 + $0xc78] sm:$0xff]
    %v1202 = vld [vmem:[#allocation9 + $0xc80] sm:$0xff]
    %v1203 = vld [vmem:[#allocation9 + $0xc88] sm:$0xff]
    %v1204 = vld [vmem:[#allocation9 + $0xc90] sm:$0xff]
    %v1205 = vld [vmem:[#allocation9 + $0xc98] sm:$0xff]
    %v1206 = vld [vmem:[#allocation9 + $0xca0] sm:$0xff]
    %v1207 = vld [vmem:[#allocation9 + $0xca8] sm:$0xff]
    %v1208 = vld [vmem:[#allocation9 + $0xcb0] sm:$0xff]
    %v1209 = vld [vmem:[#allocation9 + $0xcb8] sm:$0xff]
    %v1210 = vld [vmem:[#allocation9 + $0xcc0] sm:$0xff]
    %v1211 = vld [vmem:[#allocation9 + $0xcc8] sm:$0xff]
    %v1212 = vld [vmem:[#allocation9 + $0xcd0] sm:$0xff]
    %v1213 = vld [vmem:[#allocation9 + $0xcd8] sm:$0xff]
    %v1214 = vld [vmem:[#allocation9 + $0xce0] sm:$0xff]
    %v1215 = vld [vmem:[#allocation9 + $0xce8] sm:$0xff]
    %v1216 = vld [vmem:[#allocation9 + $0xcf0] sm:$0xff]
    %v1217 = vld [vmem:[#allocation9 + $0xcf8] sm:$0xff]
    %v1218 = vld [vmem:[#allocation9 + $0xd00] sm:$0xff]
    %v1219 = vld [vmem:[#allocation9 + $0xd08] sm:$0xff]
    %v1220 = vld [vmem:[#allocation9 + $0xd10] sm:$0xff]
    %v1221 = vld [vmem:[#allocation9 + $0xd18] sm:$0xff]
    %v1222 = vld [vmem:[#allocation9 + $0xd20] sm:$0xff]
    %v1223 = vld [vmem:[#allocation9 + $0xd28] sm:$0xff]
    %v1224 = vld [vmem:[#allocation9 + $0xd30] sm:$0xff]
    %v1225 = vld [vmem:[#allocation9 + $0xd38] sm:$0xff]
    %v1226 = vld [vmem:[#allocation9 + $0xd40] sm:$0xff]
    %v1227 = vld [vmem:[#allocation9 + $0xd48] sm:$0xff]
    %v1228 = vld [vmem:[#allocation9 + $0xd50] sm:$0xff]
    %v1229 = vld [vmem:[#allocation9 + $0xd58] sm:$0xff]
    %v1230 = vld [vmem:[#allocation9 + $0xd60] sm:$0xff]
    %v1231 = vld [vmem:[#allocation9 + $0xd68] sm:$0xff]
    %v1232 = vld [vmem:[#allocation9 + $0xd70] sm:$0xff]
    %v1233 = vld [vmem:[#allocation9 + $0xd78] sm:$0xff]
    %v1234 = vld [vmem:[#allocation9 + $0xd80] sm:$0xff]
    %v1235 = vld [vmem:[#allocation9 + $0xd88] sm:$0xff]
    %v1236 = vld [vmem:[#allocation9 + $0xd90] sm:$0xff]
    %v1237 = vld [vmem:[#allocation9 + $0xd98] sm:$0xff]
    %v1238 = vld [vmem:[#allocation9 + $0xda0] sm:$0xff]
    %v1239 = vld [vmem:[#allocation9 + $0xda8] sm:$0xff]
    %v1240 = vld [vmem:[#allocation9 + $0xdb0] sm:$0xff]
    %v1241 = vld [vmem:[#allocation9 + $0xdb8] sm:$0xff]
    %v1242 = vld [vmem:[#allocation9 + $0xdc0] sm:$0xff]
    %v1243 = vld [vmem:[#allocation9 + $0xdc8] sm:$0xff]
    %v1244 = vld [vmem:[#allocation9 + $0xdd0] sm:$0xff]
    %v1245 = vld [vmem:[#allocation9 + $0xdd8] sm:$0xff]
    %v1246 = vld [vmem:[#allocation9 + $0xde0] sm:$0xff]
    %v1247 = vld [vmem:[#allocation9 + $0xde8] sm:$0xff]
    %v1248 = vld [vmem:[#allocation9 + $0xdf0] sm:$0xff]
    %v1249 = vld [vmem:[#allocation9 + $0xdf8] sm:$0xff]
    %v1250 = vld [vmem:[#allocation9 + $0xe00] sm:$0xff]
    %v1251 = vld [vmem:[#allocation9 + $0xe08] sm:$0xff]
    %v1252 = vld [vmem:[#allocation9 + $0xe10] sm:$0xff]
    %v1253 = vld [vmem:[#allocation9 + $0xe18] sm:$0xff]
    %v1254 = vld [vmem:[#allocation9 + $0xe20] sm:$0xff]
    %v1255 = vld [vmem:[#allocation9 + $0xe28] sm:$0xff]
    %v1256 = vld [vmem:[#allocation9 + $0xe30] sm:$0xff]
    %v1257 = vld [vmem:[#allocation9 + $0xe38] sm:$0xff]
    %v1258 = vld [vmem:[#allocation9 + $0xe40] sm:$0xff]
    %v1259 = vld [vmem:[#allocation9 + $0xe48] sm:$0xff]
    %v1260 = vld [vmem:[#allocation9 + $0xe50] sm:$0xff]
    %v1261 = vld [vmem:[#allocation9 + $0xe58] sm:$0xff]
    %v1262 = vld [vmem:[#allocation9 + $0xe60] sm:$0xff]
    %v1263 = vld [vmem:[#allocation9 + $0xe68] sm:$0xff]
    %v1264 = vld [vmem:[#allocation9 + $0xe70] sm:$0xff]
    %v1265 = vld [vmem:[#allocation9 + $0xe78] sm:$0xff]
    %v1266 = vld [vmem:[#allocation9 + $0xe80] sm:$0xff]
    %v1267 = vld [vmem:[#allocation9 + $0xe88] sm:$0xff]
    %v1268 = vld [vmem:[#allocation9 + $0xe90] sm:$0xff]
    %v1269 = vld [vmem:[#allocation9 + $0xe98] sm:$0xff]
    %v1270 = vld [vmem:[#allocation9 + $0xea0] sm:$0xff]
    %v1271 = vld [vmem:[#allocation9 + $0xea8] sm:$0xff]
    %v1272 = vld [vmem:[#allocation9 + $0xeb0] sm:$0xff]
    %v1273 = vld [vmem:[#allocation9 + $0xeb8] sm:$0xff]
    %v1274 = vld [vmem:[#allocation9 + $0xec0] sm:$0xff]
    %v1275 = vld [vmem:[#allocation9 + $0xec8] sm:$0xff]
    %v1276 = vld [vmem:[#allocation9 + $0xed0] sm:$0xff]
    %v1277 = vld [vmem:[#allocation9 + $0xed8] sm:$0xff]
    %v1278 = vld [vmem:[#allocation9 + $0xee0] sm:$0xff]
    %v1279 = vld [vmem:[#allocation9 + $0xee8] sm:$0xff]
    %v1280 = vld [vmem:[#allocation9 + $0xef0] sm:$0xff]
    %v1281 = vld [vmem:[#allocation9 + $0xef8] sm:$0xff]
    %v1282 = vld [vmem:[#allocation9 + $0xf00] sm:$0xff]
    %v1283 = vld [vmem:[#allocation9 + $0xf08] sm:$0xff]
    %v1284 = vld [vmem:[#allocation9 + $0xf10] sm:$0xff]
    %v1285 = vld [vmem:[#allocation9 + $0xf18] sm:$0xff]
    %v1286 = vld [vmem:[#allocation9 + $0xf20] sm:$0xff]
    %v1287 = vld [vmem:[#allocation9 + $0xf28] sm:$0xff]
    %v1288 = vld [vmem:[#allocation9 + $0xf30] sm:$0xff]
    %v1289 = vld [vmem:[#allocation9 + $0xf38] sm:$0xff]
    %v1290 = vld [vmem:[#allocation9 + $0xf40] sm:$0xff]
    %v1291 = vld [vmem:[#allocation9 + $0xf48] sm:$0xff]
    %v1292 = vld [vmem:[#allocation9 + $0xf50] sm:$0xff]
    %v1293 = vld [vmem:[#allocation9 + $0xf58] sm:$0xff]
    %v1294 = vld [vmem:[#allocation9 + $0xf60] sm:$0xff]
    %v1295 = vld [vmem:[#allocation9 + $0xf68] sm:$0xff]
    %v1296 = vld [vmem:[#allocation9 + $0xf70] sm:$0xff]
    %v1297 = vld [vmem:[#allocation9 + $0xf78] sm:$0xff]
    %v1298 = vld [vmem:[#allocation9 + $0xf80] sm:$0xff]
    %v1299 = vld [vmem:[#allocation9 + $0xf88] sm:$0xff]
    %v1300 = vld [vmem:[#allocation9 + $0xf90] sm:$0xff]
    %v1301 = vld [vmem:[#allocation9 + $0xf98] sm:$0xff]
    %v1302 = vld [vmem:[#allocation9 + $0xfa0] sm:$0xff]
    %v1303 = vld [vmem:[#allocation9 + $0xfa8] sm:$0xff]
    %v1304 = vld [vmem:[#allocation9 + $0xfb0] sm:$0xff]
    %v1305 = vld [vmem:[#allocation9 + $0xfb8] sm:$0xff]
    %v1306 = vld [vmem:[#allocation9 + $0xfc0] sm:$0xff]
    %v1307 = vld [vmem:[#allocation9 + $0xfc8] sm:$0xff]
    %v1308 = vld [vmem:[#allocation9 + $0xfd0] sm:$0xff]
    %v1309 = vld [vmem:[#allocation9 + $0xfd8] sm:$0xff]
    %v1310 = vld [vmem:[#allocation9 + $0xfe0] sm:$0xff]
    %v1311 = vld [vmem:[#allocation9 + $0xfe8] sm:$0xff]
    %v1312 = vld [vmem:[#allocation9 + $0xff0] sm:$0xff]
    %v1313 = vld [vmem:[#allocation9 + $0xff8] sm:$0xff]
    %s1314 = smul.u32 %s793, 4
    %s1315 = scalar_lea.vmem [#allocation11], %s1314
    %v1316 = vld [vmem:[%s1315] sm:$0xf]
    %v1318 = vlaneseq
    %v1319 = vshrl.u32 %v1318, 7
    %v1320 = vsub.s32 0, %v1319
    %v1321 = vrot.slane %v1316, %v1320
    %v1322 = vlaneseq
    %v1323 = vshrl.u32 %v1322, 7
    %v1324 = vsub.s32 1, %v1323
    %v1325 = vrot.slane %v1316, %v1324
    %v1326 = vlaneseq
    %v1327 = vshrl.u32 %v1326, 7
    %v1328 = vsub.s32 2, %v1327
    %v1329 = vrot.slane %v1316, %v1328
    %v1330 = vlaneseq
    %v1331 = vshrl.u32 %v1330, 7
    %v1332 = vsub.s32 3, %v1331
    %v1333 = vrot.slane %v1316, %v1332
    %v1346 = vunpack.c.l.b16 %v794
    %v1347 = vunpack.c.h.b16 %v794
    %v1348 = vunpack.c.l.b16 %v795
    %v1349 = vunpack.c.h.b16 %v795
    %v1350 = vunpack.c.l.b16 %v796
    %v1351 = vunpack.c.h.b16 %v796
    %v1352 = vunpack.c.l.b16 %v797
    %v1353 = vunpack.c.h.b16 %v797
    %v1354 = vunpack.c.l.b16 %v798
    %v1355 = vunpack.c.h.b16 %v798
    %v1356 = vunpack.c.l.b16 %v799
    %v1357 = vunpack.c.h.b16 %v799
    %v1358 = vunpack.c.l.b16 %v800
    %v1359 = vunpack.c.h.b16 %v800
    %v1360 = vunpack.c.l.b16 %v801
    %v1361 = vunpack.c.h.b16 %v801
    %v1362 = vpack.c.b16 %v1346, %v1346
    %v1363 = vpack.c.b16 %v1347, %v1347
    %v1364 = vpack.c.b16 %v1348, %v1348
    %v1365 = vpack.c.b16 %v1349, %v1349
    %v1366 = vpack.c.b16 %v1350, %v1350
    %v1367 = vpack.c.b16 %v1351, %v1351
    %v1368 = vpack.c.b16 %v1352, %v1352
    %v1369 = vpack.c.b16 %v1353, %v1353
    %v1370 = vpack.c.b16 %v1354, %v1354
    %v1371 = vpack.c.b16 %v1355, %v1355
    %v1372 = vpack.c.b16 %v1356, %v1356
    %v1373 = vpack.c.b16 %v1357, %v1357
    %v1374 = vpack.c.b16 %v1358, %v1358
    %v1375 = vpack.c.b16 %v1359, %v1359
    %v1376 = vpack.c.b16 %v1360, %v1360
    %v1377 = vpack.c.b16 %v1361, %v1361
    %v1906 = vunpack.c.l.b16 %v802
    %v1907 = vunpack.c.h.b16 %v802
    %v1908 = vunpack.c.l.b16 %v803
    %v1909 = vunpack.c.h.b16 %v803
    %v1910 = vunpack.c.l.b16 %v804
    %v1911 = vunpack.c.h.b16 %v804
    %v1912 = vunpack.c.l.b16 %v805
    %v1913 = vunpack.c.h.b16 %v805
    %v1914 = vunpack.c.l.b16 %v806
    %v1915 = vunpack.c.h.b16 %v806
    %v1916 = vunpack.c.l.b16 %v807
    %v1917 = vunpack.c.h.b16 %v807
    %v1918 = vunpack.c.l.b16 %v808
    %v1919 = vunpack.c.h.b16 %v808
    %v1920 = vunpack.c.l.b16 %v809
    %v1921 = vunpack.c.h.b16 %v809
    %v1922 = vunpack.c.l.b16 %v810
    %v1923 = vunpack.c.h.b16 %v810
    %v1924 = vunpack.c.l.b16 %v811
    %v1925 = vunpack.c.h.b16 %v811
    %v1926 = vunpack.c.l.b16 %v812
    %v1927 = vunpack.c.h.b16 %v812
    %v1928 = vunpack.c.l.b16 %v813
    %v1929 = vunpack.c.h.b16 %v813
    %v1930 = vunpack.c.l.b16 %v814
    %v1931 = vunpack.c.h.b16 %v814
    %v1932 = vunpack.c.l.b16 %v815
    %v1933 = vunpack.c.h.b16 %v815
    %v1934 = vunpack.c.l.b16 %v816
    %v1935 = vunpack.c.h.b16 %v816
    %v1936 = vunpack.c.l.b16 %v817
    %v1937 = vunpack.c.h.b16 %v817
    %v1938 = vunpack.c.l.b16 %v818
    %v1939 = vunpack.c.h.b16 %v818
    %v1940 = vunpack.c.l.b16 %v819
    %v1941 = vunpack.c.h.b16 %v819
    %v1942 = vunpack.c.l.b16 %v820
    %v1943 = vunpack.c.h.b16 %v820
    %v1944 = vunpack.c.l.b16 %v821
    %v1945 = vunpack.c.h.b16 %v821
    %v1946 = vunpack.c.l.b16 %v822
    %v1947 = vunpack.c.h.b16 %v822
    %v1948 = vunpack.c.l.b16 %v823
    %v1949 = vunpack.c.h.b16 %v823
    %v1950 = vunpack.c.l.b16 %v824
    %v1951 = vunpack.c.h.b16 %v824
    %v1952 = vunpack.c.l.b16 %v825
    %v1953 = vunpack.c.h.b16 %v825
    %v1954 = vunpack.c.l.b16 %v826
    %v1955 = vunpack.c.h.b16 %v826
    %v1956 = vunpack.c.l.b16 %v827
    %v1957 = vunpack.c.h.b16 %v827
    %v1958 = vunpack.c.l.b16 %v828
    %v1959 = vunpack.c.h.b16 %v828
    %v1960 = vunpack.c.l.b16 %v829
    %v1961 = vunpack.c.h.b16 %v829
    %v1962 = vunpack.c.l.b16 %v830
    %v1963 = vunpack.c.h.b16 %v830
    %v1964 = vunpack.c.l.b16 %v831
    %v1965 = vunpack.c.h.b16 %v831
    %v1966 = vunpack.c.l.b16 %v832
    %v1967 = vunpack.c.h.b16 %v832
    %v1968 = vunpack.c.l.b16 %v833
    %v1969 = vunpack.c.h.b16 %v833
    %v1970 = vunpack.c.l.b16 %v834
    %v1971 = vunpack.c.h.b16 %v834
    %v1972 = vunpack.c.l.b16 %v835
    %v1973 = vunpack.c.h.b16 %v835
    %v1974 = vunpack.c.l.b16 %v836
    %v1975 = vunpack.c.h.b16 %v836
    %v1976 = vunpack.c.l.b16 %v837
    %v1977 = vunpack.c.h.b16 %v837
    %v1978 = vunpack.c.l.b16 %v838
    %v1979 = vunpack.c.h.b16 %v838
    %v1980 = vunpack.c.l.b16 %v839
    %v1981 = vunpack.c.h.b16 %v839
    %v1982 = vunpack.c.l.b16 %v840
    %v1983 = vunpack.c.h.b16 %v840
    %v1984 = vunpack.c.l.b16 %v841
    %v1985 = vunpack.c.h.b16 %v841
    %v1986 = vunpack.c.l.b16 %v842
    %v1987 = vunpack.c.h.b16 %v842
    %v1988 = vunpack.c.l.b16 %v843
    %v1989 = vunpack.c.h.b16 %v843
    %v1990 = vunpack.c.l.b16 %v844
    %v1991 = vunpack.c.h.b16 %v844
    %v1992 = vunpack.c.l.b16 %v845
    %v1993 = vunpack.c.h.b16 %v845
    %v1994 = vunpack.c.l.b16 %v846
    %v1995 = vunpack.c.h.b16 %v846
    %v1996 = vunpack.c.l.b16 %v847
    %v1997 = vunpack.c.h.b16 %v847
    %v1998 = vunpack.c.l.b16 %v848
    %v1999 = vunpack.c.h.b16 %v848
    %v2000 = vunpack.c.l.b16 %v849
    %v2001 = vunpack.c.h.b16 %v849
    %v2002 = vunpack.c.l.b16 %v850
    %v2003 = vunpack.c.h.b16 %v850
    %v2004 = vunpack.c.l.b16 %v851
    %v2005 = vunpack.c.h.b16 %v851
    %v2006 = vunpack.c.l.b16 %v852
    %v2007 = vunpack.c.h.b16 %v852
    %v2008 = vunpack.c.l.b16 %v853
    %v2009 = vunpack.c.h.b16 %v853
    %v2010 = vunpack.c.l.b16 %v854
    %v2011 = vunpack.c.h.b16 %v854
    %v2012 = vunpack.c.l.b16 %v855
    %v2013 = vunpack.c.h.b16 %v855
    %v2014 = vunpack.c.l.b16 %v856
    %v2015 = vunpack.c.h.b16 %v856
    %v2016 = vunpack.c.l.b16 %v857
    %v2017 = vunpack.c.h.b16 %v857
    %v2018 = vunpack.c.l.b16 %v858
    %v2019 = vunpack.c.h.b16 %v858
    %v2020 = vunpack.c.l.b16 %v859
    %v2021 = vunpack.c.h.b16 %v859
    %v2022 = vunpack.c.l.b16 %v860
    %v2023 = vunpack.c.h.b16 %v860
    %v2024 = vunpack.c.l.b16 %v861
    %v2025 = vunpack.c.h.b16 %v861
    %v2026 = vunpack.c.l.b16 %v862
    %v2027 = vunpack.c.h.b16 %v862
    %v2028 = vunpack.c.l.b16 %v863
    %v2029 = vunpack.c.h.b16 %v863
    %v2030 = vunpack.c.l.b16 %v864
    %v2031 = vunpack.c.h.b16 %v864
    %v2032 = vunpack.c.l.b16 %v865
    %v2033 = vunpack.c.h.b16 %v865
    %v2034 = vunpack.c.l.b16 %v866
    %v2035 = vunpack.c.h.b16 %v866
    %v2036 = vunpack.c.l.b16 %v867
    %v2037 = vunpack.c.h.b16 %v867
    %v2038 = vunpack.c.l.b16 %v868
    %v2039 = vunpack.c.h.b16 %v868
    %v2040 = vunpack.c.l.b16 %v869
    %v2041 = vunpack.c.h.b16 %v869
    %v2042 = vunpack.c.l.b16 %v870
    %v2043 = vunpack.c.h.b16 %v870
    %v2044 = vunpack.c.l.b16 %v871
    %v2045 = vunpack.c.h.b16 %v871
    %v2046 = vunpack.c.l.b16 %v872
    %v2047 = vunpack.c.h.b16 %v872
    %v2048 = vunpack.c.l.b16 %v873
    %v2049 = vunpack.c.h.b16 %v873
    %v2050 = vunpack.c.l.b16 %v874
    %v2051 = vunpack.c.h.b16 %v874
    %v2052 = vunpack.c.l.b16 %v875
    %v2053 = vunpack.c.h.b16 %v875
    %v2054 = vunpack.c.l.b16 %v876
    %v2055 = vunpack.c.h.b16 %v876
    %v2056 = vunpack.c.l.b16 %v877
    %v2057 = vunpack.c.h.b16 %v877
    %v2058 = vunpack.c.l.b16 %v878
    %v2059 = vunpack.c.h.b16 %v878
    %v2060 = vunpack.c.l.b16 %v879
    %v2061 = vunpack.c.h.b16 %v879
    %v2062 = vunpack.c.l.b16 %v880
    %v2063 = vunpack.c.h.b16 %v880
    %v2064 = vunpack.c.l.b16 %v881
    %v2065 = vunpack.c.h.b16 %v881
    %v2066 = vunpack.c.l.b16 %v882
    %v2067 = vunpack.c.h.b16 %v882
    %v2068 = vunpack.c.l.b16 %v883
    %v2069 = vunpack.c.h.b16 %v883
    %v2070 = vunpack.c.l.b16 %v884
    %v2071 = vunpack.c.h.b16 %v884
    %v2072 = vunpack.c.l.b16 %v885
    %v2073 = vunpack.c.h.b16 %v885
    %v2074 = vunpack.c.l.b16 %v886
    %v2075 = vunpack.c.h.b16 %v886
    %v2076 = vunpack.c.l.b16 %v887
    %v2077 = vunpack.c.h.b16 %v887
    %v2078 = vunpack.c.l.b16 %v888
    %v2079 = vunpack.c.h.b16 %v888
    %v2080 = vunpack.c.l.b16 %v889
    %v2081 = vunpack.c.h.b16 %v889
    %v2082 = vunpack.c.l.b16 %v890
    %v2083 = vunpack.c.h.b16 %v890
    %v2084 = vunpack.c.l.b16 %v891
    %v2085 = vunpack.c.h.b16 %v891
    %v2086 = vunpack.c.l.b16 %v892
    %v2087 = vunpack.c.h.b16 %v892
    %v2088 = vunpack.c.l.b16 %v893
    %v2089 = vunpack.c.h.b16 %v893
    %v2090 = vunpack.c.l.b16 %v894
    %v2091 = vunpack.c.h.b16 %v894
    %v2092 = vunpack.c.l.b16 %v895
    %v2093 = vunpack.c.h.b16 %v895
    %v2094 = vunpack.c.l.b16 %v896
    %v2095 = vunpack.c.h.b16 %v896
    %v2096 = vunpack.c.l.b16 %v897
    %v2097 = vunpack.c.h.b16 %v897
    %v2098 = vunpack.c.l.b16 %v898
    %v2099 = vunpack.c.h.b16 %v898
    %v2100 = vunpack.c.l.b16 %v899
    %v2101 = vunpack.c.h.b16 %v899
    %v2102 = vunpack.c.l.b16 %v900
    %v2103 = vunpack.c.h.b16 %v900
    %v2104 = vunpack.c.l.b16 %v901
    %v2105 = vunpack.c.h.b16 %v901
    %v2106 = vunpack.c.l.b16 %v902
    %v2107 = vunpack.c.h.b16 %v902
    %v2108 = vunpack.c.l.b16 %v903
    %v2109 = vunpack.c.h.b16 %v903
    %v2110 = vunpack.c.l.b16 %v904
    %v2111 = vunpack.c.h.b16 %v904
    %v2112 = vunpack.c.l.b16 %v905
    %v2113 = vunpack.c.h.b16 %v905
    %v2114 = vunpack.c.l.b16 %v906
    %v2115 = vunpack.c.h.b16 %v906
    %v2116 = vunpack.c.l.b16 %v907
    %v2117 = vunpack.c.h.b16 %v907
    %v2118 = vunpack.c.l.b16 %v908
    %v2119 = vunpack.c.h.b16 %v908
    %v2120 = vunpack.c.l.b16 %v909
    %v2121 = vunpack.c.h.b16 %v909
    %v2122 = vunpack.c.l.b16 %v910
    %v2123 = vunpack.c.h.b16 %v910
    %v2124 = vunpack.c.l.b16 %v911
    %v2125 = vunpack.c.h.b16 %v911
    %v2126 = vunpack.c.l.b16 %v912
    %v2127 = vunpack.c.h.b16 %v912
    %v2128 = vunpack.c.l.b16 %v913
    %v2129 = vunpack.c.h.b16 %v913
    %v2130 = vunpack.c.l.b16 %v914
    %v2131 = vunpack.c.h.b16 %v914
    %v2132 = vunpack.c.l.b16 %v915
    %v2133 = vunpack.c.h.b16 %v915
    %v2134 = vunpack.c.l.b16 %v916
    %v2135 = vunpack.c.h.b16 %v916
    %v2136 = vunpack.c.l.b16 %v917
    %v2137 = vunpack.c.h.b16 %v917
    %v2138 = vunpack.c.l.b16 %v918
    %v2139 = vunpack.c.h.b16 %v918
    %v2140 = vunpack.c.l.b16 %v919
    %v2141 = vunpack.c.h.b16 %v919
    %v2142 = vunpack.c.l.b16 %v920
    %v2143 = vunpack.c.h.b16 %v920
    %v2144 = vunpack.c.l.b16 %v921
    %v2145 = vunpack.c.h.b16 %v921
    %v2146 = vunpack.c.l.b16 %v922
    %v2147 = vunpack.c.h.b16 %v922
    %v2148 = vunpack.c.l.b16 %v923
    %v2149 = vunpack.c.h.b16 %v923
    %v2150 = vunpack.c.l.b16 %v924
    %v2151 = vunpack.c.h.b16 %v924
    %v2152 = vunpack.c.l.b16 %v925
    %v2153 = vunpack.c.h.b16 %v925
    %v2154 = vunpack.c.l.b16 %v926
    %v2155 = vunpack.c.h.b16 %v926
    %v2156 = vunpack.c.l.b16 %v927
    %v2157 = vunpack.c.h.b16 %v927
    %v2158 = vunpack.c.l.b16 %v928
    %v2159 = vunpack.c.h.b16 %v928
    %v2160 = vunpack.c.l.b16 %v929
    %v2161 = vunpack.c.h.b16 %v929
    %v2162 = vunpack.c.l.b16 %v930
    %v2163 = vunpack.c.h.b16 %v930
    %v2164 = vunpack.c.l.b16 %v931
    %v2165 = vunpack.c.h.b16 %v931
    %v2166 = vunpack.c.l.b16 %v932
    %v2167 = vunpack.c.h.b16 %v932
    %v2168 = vunpack.c.l.b16 %v933
    %v2169 = vunpack.c.h.b16 %v933
    %v2170 = vunpack.c.l.b16 %v934
    %v2171 = vunpack.c.h.b16 %v934
    %v2172 = vunpack.c.l.b16 %v935
    %v2173 = vunpack.c.h.b16 %v935
    %v2174 = vunpack.c.l.b16 %v936
    %v2175 = vunpack.c.h.b16 %v936
    %v2176 = vunpack.c.l.b16 %v937
    %v2177 = vunpack.c.h.b16 %v937
    %v2178 = vunpack.c.l.b16 %v938
    %v2179 = vunpack.c.h.b16 %v938
    %v2180 = vunpack.c.l.b16 %v939
    %v2181 = vunpack.c.h.b16 %v939
    %v2182 = vunpack.c.l.b16 %v940
    %v2183 = vunpack.c.h.b16 %v940
    %v2184 = vunpack.c.l.b16 %v941
    %v2185 = vunpack.c.h.b16 %v941
    %v2186 = vunpack.c.l.b16 %v942
    %v2187 = vunpack.c.h.b16 %v942
    %v2188 = vunpack.c.l.b16 %v943
    %v2189 = vunpack.c.h.b16 %v943
    %v2190 = vunpack.c.l.b16 %v944
    %v2191 = vunpack.c.h.b16 %v944
    %v2192 = vunpack.c.l.b16 %v945
    %v2193 = vunpack.c.h.b16 %v945
    %v2194 = vunpack.c.l.b16 %v946
    %v2195 = vunpack.c.h.b16 %v946
    %v2196 = vunpack.c.l.b16 %v947
    %v2197 = vunpack.c.h.b16 %v947
    %v2198 = vunpack.c.l.b16 %v948
    %v2199 = vunpack.c.h.b16 %v948
    %v2200 = vunpack.c.l.b16 %v949
    %v2201 = vunpack.c.h.b16 %v949
    %v2202 = vunpack.c.l.b16 %v950
    %v2203 = vunpack.c.h.b16 %v950
    %v2204 = vunpack.c.l.b16 %v951
    %v2205 = vunpack.c.h.b16 %v951
    %v2206 = vunpack.c.l.b16 %v952
    %v2207 = vunpack.c.h.b16 %v952
    %v2208 = vunpack.c.l.b16 %v953
    %v2209 = vunpack.c.h.b16 %v953
    %v2210 = vunpack.c.l.b16 %v954
    %v2211 = vunpack.c.h.b16 %v954
    %v2212 = vunpack.c.l.b16 %v955
    %v2213 = vunpack.c.h.b16 %v955
    %v2214 = vunpack.c.l.b16 %v956
    %v2215 = vunpack.c.h.b16 %v956
    %v2216 = vunpack.c.l.b16 %v957
    %v2217 = vunpack.c.h.b16 %v957
    %v2218 = vunpack.c.l.b16 %v958
    %v2219 = vunpack.c.h.b16 %v958
    %v2220 = vunpack.c.l.b16 %v959
    %v2221 = vunpack.c.h.b16 %v959
    %v2222 = vunpack.c.l.b16 %v960
    %v2223 = vunpack.c.h.b16 %v960
    %v2224 = vunpack.c.l.b16 %v961
    %v2225 = vunpack.c.h.b16 %v961
    %v2226 = vunpack.c.l.b16 %v962
    %v2227 = vunpack.c.h.b16 %v962
    %v2228 = vunpack.c.l.b16 %v963
    %v2229 = vunpack.c.h.b16 %v963
    %v2230 = vunpack.c.l.b16 %v964
    %v2231 = vunpack.c.h.b16 %v964
    %v2232 = vunpack.c.l.b16 %v965
    %v2233 = vunpack.c.h.b16 %v965
    %v2234 = vunpack.c.l.b16 %v966
    %v2235 = vunpack.c.h.b16 %v966
    %v2236 = vunpack.c.l.b16 %v967
    %v2237 = vunpack.c.h.b16 %v967
    %v2238 = vunpack.c.l.b16 %v968
    %v2239 = vunpack.c.h.b16 %v968
    %v2240 = vunpack.c.l.b16 %v969
    %v2241 = vunpack.c.h.b16 %v969
    %v2242 = vunpack.c.l.b16 %v970
    %v2243 = vunpack.c.h.b16 %v970
    %v2244 = vunpack.c.l.b16 %v971
    %v2245 = vunpack.c.h.b16 %v971
    %v2246 = vunpack.c.l.b16 %v972
    %v2247 = vunpack.c.h.b16 %v972
    %v2248 = vunpack.c.l.b16 %v973
    %v2249 = vunpack.c.h.b16 %v973
    %v2250 = vunpack.c.l.b16 %v974
    %v2251 = vunpack.c.h.b16 %v974
    %v2252 = vunpack.c.l.b16 %v975
    %v2253 = vunpack.c.h.b16 %v975
    %v2254 = vunpack.c.l.b16 %v976
    %v2255 = vunpack.c.h.b16 %v976
    %v2256 = vunpack.c.l.b16 %v977
    %v2257 = vunpack.c.h.b16 %v977
    %v2258 = vunpack.c.l.b16 %v978
    %v2259 = vunpack.c.h.b16 %v978
    %v2260 = vunpack.c.l.b16 %v979
    %v2261 = vunpack.c.h.b16 %v979
    %v2262 = vunpack.c.l.b16 %v980
    %v2263 = vunpack.c.h.b16 %v980
    %v2264 = vunpack.c.l.b16 %v981
    %v2265 = vunpack.c.h.b16 %v981
    %v2266 = vunpack.c.l.b16 %v982
    %v2267 = vunpack.c.h.b16 %v982
    %v2268 = vunpack.c.l.b16 %v983
    %v2269 = vunpack.c.h.b16 %v983
    %v2270 = vunpack.c.l.b16 %v984
    %v2271 = vunpack.c.h.b16 %v984
    %v2272 = vunpack.c.l.b16 %v985
    %v2273 = vunpack.c.h.b16 %v985
    %v2274 = vunpack.c.l.b16 %v986
    %v2275 = vunpack.c.h.b16 %v986
    %v2276 = vunpack.c.l.b16 %v987
    %v2277 = vunpack.c.h.b16 %v987
    %v2278 = vunpack.c.l.b16 %v988
    %v2279 = vunpack.c.h.b16 %v988
    %v2280 = vunpack.c.l.b16 %v989
    %v2281 = vunpack.c.h.b16 %v989
    %v2282 = vunpack.c.l.b16 %v990
    %v2283 = vunpack.c.h.b16 %v990
    %v2284 = vunpack.c.l.b16 %v991
    %v2285 = vunpack.c.h.b16 %v991
    %v2286 = vunpack.c.l.b16 %v992
    %v2287 = vunpack.c.h.b16 %v992
    %v2288 = vunpack.c.l.b16 %v993
    %v2289 = vunpack.c.h.b16 %v993
    %v2290 = vunpack.c.l.b16 %v994
    %v2291 = vunpack.c.h.b16 %v994
    %v2292 = vunpack.c.l.b16 %v995
    %v2293 = vunpack.c.h.b16 %v995
    %v2294 = vunpack.c.l.b16 %v996
    %v2295 = vunpack.c.h.b16 %v996
    %v2296 = vunpack.c.l.b16 %v997
    %v2297 = vunpack.c.h.b16 %v997
    %v2298 = vunpack.c.l.b16 %v998
    %v2299 = vunpack.c.h.b16 %v998
    %v2300 = vunpack.c.l.b16 %v999
    %v2301 = vunpack.c.h.b16 %v999
    %v2302 = vunpack.c.l.b16 %v1000
    %v2303 = vunpack.c.h.b16 %v1000
    %v2304 = vunpack.c.l.b16 %v1001
    %v2305 = vunpack.c.h.b16 %v1001
    %v2306 = vunpack.c.l.b16 %v1002
    %v2307 = vunpack.c.h.b16 %v1002
    %v2308 = vunpack.c.l.b16 %v1003
    %v2309 = vunpack.c.h.b16 %v1003
    %v2310 = vunpack.c.l.b16 %v1004
    %v2311 = vunpack.c.h.b16 %v1004
    %v2312 = vunpack.c.l.b16 %v1005
    %v2313 = vunpack.c.h.b16 %v1005
    %v2314 = vunpack.c.l.b16 %v1006
    %v2315 = vunpack.c.h.b16 %v1006
    %v2316 = vunpack.c.l.b16 %v1007
    %v2317 = vunpack.c.h.b16 %v1007
    %v2318 = vunpack.c.l.b16 %v1008
    %v2319 = vunpack.c.h.b16 %v1008
    %v2320 = vunpack.c.l.b16 %v1009
    %v2321 = vunpack.c.h.b16 %v1009
    %v2322 = vunpack.c.l.b16 %v1010
    %v2323 = vunpack.c.h.b16 %v1010
    %v2324 = vunpack.c.l.b16 %v1011
    %v2325 = vunpack.c.h.b16 %v1011
    %v2326 = vunpack.c.l.b16 %v1012
    %v2327 = vunpack.c.h.b16 %v1012
    %v2328 = vunpack.c.l.b16 %v1013
    %v2329 = vunpack.c.h.b16 %v1013
    %v2330 = vunpack.c.l.b16 %v1014
    %v2331 = vunpack.c.h.b16 %v1014
    %v2332 = vunpack.c.l.b16 %v1015
    %v2333 = vunpack.c.h.b16 %v1015
    %v2334 = vunpack.c.l.b16 %v1016
    %v2335 = vunpack.c.h.b16 %v1016
    %v2336 = vunpack.c.l.b16 %v1017
    %v2337 = vunpack.c.h.b16 %v1017
    %v2338 = vunpack.c.l.b16 %v1018
    %v2339 = vunpack.c.h.b16 %v1018
    %v2340 = vunpack.c.l.b16 %v1019
    %v2341 = vunpack.c.h.b16 %v1019
    %v2342 = vunpack.c.l.b16 %v1020
    %v2343 = vunpack.c.h.b16 %v1020
    %v2344 = vunpack.c.l.b16 %v1021
    %v2345 = vunpack.c.h.b16 %v1021
    %v2346 = vunpack.c.l.b16 %v1022
    %v2347 = vunpack.c.h.b16 %v1022
    %v2348 = vunpack.c.l.b16 %v1023
    %v2349 = vunpack.c.h.b16 %v1023
    %v2350 = vunpack.c.l.b16 %v1024
    %v2351 = vunpack.c.h.b16 %v1024
    %v2352 = vunpack.c.l.b16 %v1025
    %v2353 = vunpack.c.h.b16 %v1025
    %v2354 = vunpack.c.l.b16 %v1026
    %v2355 = vunpack.c.h.b16 %v1026
    %v2356 = vunpack.c.l.b16 %v1027
    %v2357 = vunpack.c.h.b16 %v1027
    %v2358 = vunpack.c.l.b16 %v1028
    %v2359 = vunpack.c.h.b16 %v1028
    %v2360 = vunpack.c.l.b16 %v1029
    %v2361 = vunpack.c.h.b16 %v1029
    %v2362 = vunpack.c.l.b16 %v1030
    %v2363 = vunpack.c.h.b16 %v1030
    %v2364 = vunpack.c.l.b16 %v1031
    %v2365 = vunpack.c.h.b16 %v1031
    %v2366 = vunpack.c.l.b16 %v1032
    %v2367 = vunpack.c.h.b16 %v1032
    %v2368 = vunpack.c.l.b16 %v1033
    %v2369 = vunpack.c.h.b16 %v1033
    %v2370 = vunpack.c.l.b16 %v1034
    %v2371 = vunpack.c.h.b16 %v1034
    %v2372 = vunpack.c.l.b16 %v1035
    %v2373 = vunpack.c.h.b16 %v1035
    %v2374 = vunpack.c.l.b16 %v1036
    %v2375 = vunpack.c.h.b16 %v1036
    %v2376 = vunpack.c.l.b16 %v1037
    %v2377 = vunpack.c.h.b16 %v1037
    %v2378 = vunpack.c.l.b16 %v1038
    %v2379 = vunpack.c.h.b16 %v1038
    %v2380 = vunpack.c.l.b16 %v1039
    %v2381 = vunpack.c.h.b16 %v1039
    %v2382 = vunpack.c.l.b16 %v1040
    %v2383 = vunpack.c.h.b16 %v1040
    %v2384 = vunpack.c.l.b16 %v1041
    %v2385 = vunpack.c.h.b16 %v1041
    %v2386 = vunpack.c.l.b16 %v1042
    %v2387 = vunpack.c.h.b16 %v1042
    %v2388 = vunpack.c.l.b16 %v1043
    %v2389 = vunpack.c.h.b16 %v1043
    %v2390 = vunpack.c.l.b16 %v1044
    %v2391 = vunpack.c.h.b16 %v1044
    %v2392 = vunpack.c.l.b16 %v1045
    %v2393 = vunpack.c.h.b16 %v1045
    %v2394 = vunpack.c.l.b16 %v1046
    %v2395 = vunpack.c.h.b16 %v1046
    %v2396 = vunpack.c.l.b16 %v1047
    %v2397 = vunpack.c.h.b16 %v1047
    %v2398 = vunpack.c.l.b16 %v1048
    %v2399 = vunpack.c.h.b16 %v1048
    %v2400 = vunpack.c.l.b16 %v1049
    %v2401 = vunpack.c.h.b16 %v1049
    %v2402 = vunpack.c.l.b16 %v1050
    %v2403 = vunpack.c.h.b16 %v1050
    %v2404 = vunpack.c.l.b16 %v1051
    %v2405 = vunpack.c.h.b16 %v1051
    %v2406 = vunpack.c.l.b16 %v1052
    %v2407 = vunpack.c.h.b16 %v1052
    %v2408 = vunpack.c.l.b16 %v1053
    %v2409 = vunpack.c.h.b16 %v1053
    %v2410 = vunpack.c.l.b16 %v1054
    %v2411 = vunpack.c.h.b16 %v1054
    %v2412 = vunpack.c.l.b16 %v1055
    %v2413 = vunpack.c.h.b16 %v1055
    %v2414 = vunpack.c.l.b16 %v1056
    %v2415 = vunpack.c.h.b16 %v1056
    %v2416 = vunpack.c.l.b16 %v1057
    %v2417 = vunpack.c.h.b16 %v1057
    %v2418 = vunpack.c.l.b16 %v1058
    %v2419 = vunpack.c.h.b16 %v1058
    %v2420 = vunpack.c.l.b16 %v1059
    %v2421 = vunpack.c.h.b16 %v1059
    %v2422 = vunpack.c.l.b16 %v1060
    %v2423 = vunpack.c.h.b16 %v1060
    %v2424 = vunpack.c.l.b16 %v1061
    %v2425 = vunpack.c.h.b16 %v1061
    %v2426 = vunpack.c.l.b16 %v1062
    %v2427 = vunpack.c.h.b16 %v1062
    %v2428 = vunpack.c.l.b16 %v1063
    %v2429 = vunpack.c.h.b16 %v1063
    %v2430 = vunpack.c.l.b16 %v1064
    %v2431 = vunpack.c.h.b16 %v1064
    %v2432 = vunpack.c.l.b16 %v1065
    %v2433 = vunpack.c.h.b16 %v1065
    %v2434 = vunpack.c.l.b16 %v1066
    %v2435 = vunpack.c.h.b16 %v1066
    %v2436 = vunpack.c.l.b16 %v1067
    %v2437 = vunpack.c.h.b16 %v1067
    %v2438 = vunpack.c.l.b16 %v1068
    %v2439 = vunpack.c.h.b16 %v1068
    %v2440 = vunpack.c.l.b16 %v1069
    %v2441 = vunpack.c.h.b16 %v1069
    %v2442 = vunpack.c.l.b16 %v1070
    %v2443 = vunpack.c.h.b16 %v1070
    %v2444 = vunpack.c.l.b16 %v1071
    %v2445 = vunpack.c.h.b16 %v1071
    %v2446 = vunpack.c.l.b16 %v1072
    %v2447 = vunpack.c.h.b16 %v1072
    %v2448 = vunpack.c.l.b16 %v1073
    %v2449 = vunpack.c.h.b16 %v1073
    %v2450 = vunpack.c.l.b16 %v1074
    %v2451 = vunpack.c.h.b16 %v1074
    %v2452 = vunpack.c.l.b16 %v1075
    %v2453 = vunpack.c.h.b16 %v1075
    %v2454 = vunpack.c.l.b16 %v1076
    %v2455 = vunpack.c.h.b16 %v1076
    %v2456 = vunpack.c.l.b16 %v1077
    %v2457 = vunpack.c.h.b16 %v1077
    %v2458 = vunpack.c.l.b16 %v1078
    %v2459 = vunpack.c.h.b16 %v1078
    %v2460 = vunpack.c.l.b16 %v1079
    %v2461 = vunpack.c.h.b16 %v1079
    %v2462 = vunpack.c.l.b16 %v1080
    %v2463 = vunpack.c.h.b16 %v1080
    %v2464 = vunpack.c.l.b16 %v1081
    %v2465 = vunpack.c.h.b16 %v1081
    %v2466 = vunpack.c.l.b16 %v1082
    %v2467 = vunpack.c.h.b16 %v1082
    %v2468 = vunpack.c.l.b16 %v1083
    %v2469 = vunpack.c.h.b16 %v1083
    %v2470 = vunpack.c.l.b16 %v1084
    %v2471 = vunpack.c.h.b16 %v1084
    %v2472 = vunpack.c.l.b16 %v1085
    %v2473 = vunpack.c.h.b16 %v1085
    %v2474 = vunpack.c.l.b16 %v1086
    %v2475 = vunpack.c.h.b16 %v1086
    %v2476 = vunpack.c.l.b16 %v1087
    %v2477 = vunpack.c.h.b16 %v1087
    %v2478 = vunpack.c.l.b16 %v1088
    %v2479 = vunpack.c.h.b16 %v1088
    %v2480 = vunpack.c.l.b16 %v1089
    %v2481 = vunpack.c.h.b16 %v1089
    %v2482 = vunpack.c.l.b16 %v1090
    %v2483 = vunpack.c.h.b16 %v1090
    %v2484 = vunpack.c.l.b16 %v1091
    %v2485 = vunpack.c.h.b16 %v1091
    %v2486 = vunpack.c.l.b16 %v1092
    %v2487 = vunpack.c.h.b16 %v1092
    %v2488 = vunpack.c.l.b16 %v1093
    %v2489 = vunpack.c.h.b16 %v1093
    %v2490 = vunpack.c.l.b16 %v1094
    %v2491 = vunpack.c.h.b16 %v1094
    %v2492 = vunpack.c.l.b16 %v1095
    %v2493 = vunpack.c.h.b16 %v1095
    %v2494 = vunpack.c.l.b16 %v1096
    %v2495 = vunpack.c.h.b16 %v1096
    %v2496 = vunpack.c.l.b16 %v1097
    %v2497 = vunpack.c.h.b16 %v1097
    %v2498 = vunpack.c.l.b16 %v1098
    %v2499 = vunpack.c.h.b16 %v1098
    %v2500 = vunpack.c.l.b16 %v1099
    %v2501 = vunpack.c.h.b16 %v1099
    %v2502 = vunpack.c.l.b16 %v1100
    %v2503 = vunpack.c.h.b16 %v1100
    %v2504 = vunpack.c.l.b16 %v1101
    %v2505 = vunpack.c.h.b16 %v1101
    %v2506 = vunpack.c.l.b16 %v1102
    %v2507 = vunpack.c.h.b16 %v1102
    %v2508 = vunpack.c.l.b16 %v1103
    %v2509 = vunpack.c.h.b16 %v1103
    %v2510 = vunpack.c.l.b16 %v1104
    %v2511 = vunpack.c.h.b16 %v1104
    %v2512 = vunpack.c.l.b16 %v1105
    %v2513 = vunpack.c.h.b16 %v1105
    %v2514 = vunpack.c.l.b16 %v1106
    %v2515 = vunpack.c.h.b16 %v1106
    %v2516 = vunpack.c.l.b16 %v1107
    %v2517 = vunpack.c.h.b16 %v1107
    %v2518 = vunpack.c.l.b16 %v1108
    %v2519 = vunpack.c.h.b16 %v1108
    %v2520 = vunpack.c.l.b16 %v1109
    %v2521 = vunpack.c.h.b16 %v1109
    %v2522 = vunpack.c.l.b16 %v1110
    %v2523 = vunpack.c.h.b16 %v1110
    %v2524 = vunpack.c.l.b16 %v1111
    %v2525 = vunpack.c.h.b16 %v1111
    %v2526 = vunpack.c.l.b16 %v1112
    %v2527 = vunpack.c.h.b16 %v1112
    %v2528 = vunpack.c.l.b16 %v1113
    %v2529 = vunpack.c.h.b16 %v1113
    %v2530 = vunpack.c.l.b16 %v1114
    %v2531 = vunpack.c.h.b16 %v1114
    %v2532 = vunpack.c.l.b16 %v1115
    %v2533 = vunpack.c.h.b16 %v1115
    %v2534 = vunpack.c.l.b16 %v1116
    %v2535 = vunpack.c.h.b16 %v1116
    %v2536 = vunpack.c.l.b16 %v1117
    %v2537 = vunpack.c.h.b16 %v1117
    %v2538 = vunpack.c.l.b16 %v1118
    %v2539 = vunpack.c.h.b16 %v1118
    %v2540 = vunpack.c.l.b16 %v1119
    %v2541 = vunpack.c.h.b16 %v1119
    %v2542 = vunpack.c.l.b16 %v1120
    %v2543 = vunpack.c.h.b16 %v1120
    %v2544 = vunpack.c.l.b16 %v1121
    %v2545 = vunpack.c.h.b16 %v1121
    %v2546 = vunpack.c.l.b16 %v1122
    %v2547 = vunpack.c.h.b16 %v1122
    %v2548 = vunpack.c.l.b16 %v1123
    %v2549 = vunpack.c.h.b16 %v1123
    %v2550 = vunpack.c.l.b16 %v1124
    %v2551 = vunpack.c.h.b16 %v1124
    %v2552 = vunpack.c.l.b16 %v1125
    %v2553 = vunpack.c.h.b16 %v1125
    %v2554 = vunpack.c.l.b16 %v1126
    %v2555 = vunpack.c.h.b16 %v1126
    %v2556 = vunpack.c.l.b16 %v1127
    %v2557 = vunpack.c.h.b16 %v1127
    %v2558 = vunpack.c.l.b16 %v1128
    %v2559 = vunpack.c.h.b16 %v1128
    %v2560 = vunpack.c.l.b16 %v1129
    %v2561 = vunpack.c.h.b16 %v1129
    %v2562 = vunpack.c.l.b16 %v1130
    %v2563 = vunpack.c.h.b16 %v1130
    %v2564 = vunpack.c.l.b16 %v1131
    %v2565 = vunpack.c.h.b16 %v1131
    %v2566 = vunpack.c.l.b16 %v1132
    %v2567 = vunpack.c.h.b16 %v1132
    %v2568 = vunpack.c.l.b16 %v1133
    %v2569 = vunpack.c.h.b16 %v1133
    %v2570 = vunpack.c.l.b16 %v1134
    %v2571 = vunpack.c.h.b16 %v1134
    %v2572 = vunpack.c.l.b16 %v1135
    %v2573 = vunpack.c.h.b16 %v1135
    %v2574 = vunpack.c.l.b16 %v1136
    %v2575 = vunpack.c.h.b16 %v1136
    %v2576 = vunpack.c.l.b16 %v1137
    %v2577 = vunpack.c.h.b16 %v1137
    %v2578 = vunpack.c.l.b16 %v1138
    %v2579 = vunpack.c.h.b16 %v1138
    %v2580 = vunpack.c.l.b16 %v1139
    %v2581 = vunpack.c.h.b16 %v1139
    %v2582 = vunpack.c.l.b16 %v1140
    %v2583 = vunpack.c.h.b16 %v1140
    %v2584 = vunpack.c.l.b16 %v1141
    %v2585 = vunpack.c.h.b16 %v1141
    %v2586 = vunpack.c.l.b16 %v1142
    %v2587 = vunpack.c.h.b16 %v1142
    %v2588 = vunpack.c.l.b16 %v1143
    %v2589 = vunpack.c.h.b16 %v1143
    %v2590 = vunpack.c.l.b16 %v1144
    %v2591 = vunpack.c.h.b16 %v1144
    %v2592 = vunpack.c.l.b16 %v1145
    %v2593 = vunpack.c.h.b16 %v1145
    %v2594 = vunpack.c.l.b16 %v1146
    %v2595 = vunpack.c.h.b16 %v1146
    %v2596 = vunpack.c.l.b16 %v1147
    %v2597 = vunpack.c.h.b16 %v1147
    %v2598 = vunpack.c.l.b16 %v1148
    %v2599 = vunpack.c.h.b16 %v1148
    %v2600 = vunpack.c.l.b16 %v1149
    %v2601 = vunpack.c.h.b16 %v1149
    %v2602 = vunpack.c.l.b16 %v1150
    %v2603 = vunpack.c.h.b16 %v1150
    %v2604 = vunpack.c.l.b16 %v1151
    %v2605 = vunpack.c.h.b16 %v1151
    %v2606 = vunpack.c.l.b16 %v1152
    %v2607 = vunpack.c.h.b16 %v1152
    %v2608 = vunpack.c.l.b16 %v1153
    %v2609 = vunpack.c.h.b16 %v1153
    %v2610 = vunpack.c.l.b16 %v1154
    %v2611 = vunpack.c.h.b16 %v1154
    %v2612 = vunpack.c.l.b16 %v1155
    %v2613 = vunpack.c.h.b16 %v1155
    %v2614 = vunpack.c.l.b16 %v1156
    %v2615 = vunpack.c.h.b16 %v1156
    %v2616 = vunpack.c.l.b16 %v1157
    %v2617 = vunpack.c.h.b16 %v1157
    %v2618 = vunpack.c.l.b16 %v1158
    %v2619 = vunpack.c.h.b16 %v1158
    %v2620 = vunpack.c.l.b16 %v1159
    %v2621 = vunpack.c.h.b16 %v1159
    %v2622 = vunpack.c.l.b16 %v1160
    %v2623 = vunpack.c.h.b16 %v1160
    %v2624 = vunpack.c.l.b16 %v1161
    %v2625 = vunpack.c.h.b16 %v1161
    %v2626 = vunpack.c.l.b16 %v1162
    %v2627 = vunpack.c.h.b16 %v1162
    %v2628 = vunpack.c.l.b16 %v1163
    %v2629 = vunpack.c.h.b16 %v1163
    %v2630 = vunpack.c.l.b16 %v1164
    %v2631 = vunpack.c.h.b16 %v1164
    %v2632 = vunpack.c.l.b16 %v1165
    %v2633 = vunpack.c.h.b16 %v1165
    %v2634 = vunpack.c.l.b16 %v1166
    %v2635 = vunpack.c.h.b16 %v1166
    %v2636 = vunpack.c.l.b16 %v1167
    %v2637 = vunpack.c.h.b16 %v1167
    %v2638 = vunpack.c.l.b16 %v1168
    %v2639 = vunpack.c.h.b16 %v1168
    %v2640 = vunpack.c.l.b16 %v1169
    %v2641 = vunpack.c.h.b16 %v1169
    %v2642 = vunpack.c.l.b16 %v1170
    %v2643 = vunpack.c.h.b16 %v1170
    %v2644 = vunpack.c.l.b16 %v1171
    %v2645 = vunpack.c.h.b16 %v1171
    %v2646 = vunpack.c.l.b16 %v1172
    %v2647 = vunpack.c.h.b16 %v1172
    %v2648 = vunpack.c.l.b16 %v1173
    %v2649 = vunpack.c.h.b16 %v1173
    %v2650 = vunpack.c.l.b16 %v1174
    %v2651 = vunpack.c.h.b16 %v1174
    %v2652 = vunpack.c.l.b16 %v1175
    %v2653 = vunpack.c.h.b16 %v1175
    %v2654 = vunpack.c.l.b16 %v1176
    %v2655 = vunpack.c.h.b16 %v1176
    %v2656 = vunpack.c.l.b16 %v1177
    %v2657 = vunpack.c.h.b16 %v1177
    %v2658 = vunpack.c.l.b16 %v1178
    %v2659 = vunpack.c.h.b16 %v1178
    %v2660 = vunpack.c.l.b16 %v1179
    %v2661 = vunpack.c.h.b16 %v1179
    %v2662 = vunpack.c.l.b16 %v1180
    %v2663 = vunpack.c.h.b16 %v1180
    %v2664 = vunpack.c.l.b16 %v1181
    %v2665 = vunpack.c.h.b16 %v1181
    %v2666 = vunpack.c.l.b16 %v1182
    %v2667 = vunpack.c.h.b16 %v1182
    %v2668 = vunpack.c.l.b16 %v1183
    %v2669 = vunpack.c.h.b16 %v1183
    %v2670 = vunpack.c.l.b16 %v1184
    %v2671 = vunpack.c.h.b16 %v1184
    %v2672 = vunpack.c.l.b16 %v1185
    %v2673 = vunpack.c.h.b16 %v1185
    %v2674 = vunpack.c.l.b16 %v1186
    %v2675 = vunpack.c.h.b16 %v1186
    %v2676 = vunpack.c.l.b16 %v1187
    %v2677 = vunpack.c.h.b16 %v1187
    %v2678 = vunpack.c.l.b16 %v1188
    %v2679 = vunpack.c.h.b16 %v1188
    %v2680 = vunpack.c.l.b16 %v1189
    %v2681 = vunpack.c.h.b16 %v1189
    %v2682 = vunpack.c.l.b16 %v1190
    %v2683 = vunpack.c.h.b16 %v1190
    %v2684 = vunpack.c.l.b16 %v1191
    %v2685 = vunpack.c.h.b16 %v1191
    %v2686 = vunpack.c.l.b16 %v1192
    %v2687 = vunpack.c.h.b16 %v1192
    %v2688 = vunpack.c.l.b16 %v1193
    %v2689 = vunpack.c.h.b16 %v1193
    %v2690 = vunpack.c.l.b16 %v1194
    %v2691 = vunpack.c.h.b16 %v1194
    %v2692 = vunpack.c.l.b16 %v1195
    %v2693 = vunpack.c.h.b16 %v1195
    %v2694 = vunpack.c.l.b16 %v1196
    %v2695 = vunpack.c.h.b16 %v1196
    %v2696 = vunpack.c.l.b16 %v1197
    %v2697 = vunpack.c.h.b16 %v1197
    %v2698 = vunpack.c.l.b16 %v1198
    %v2699 = vunpack.c.h.b16 %v1198
    %v2700 = vunpack.c.l.b16 %v1199
    %v2701 = vunpack.c.h.b16 %v1199
    %v2702 = vunpack.c.l.b16 %v1200
    %v2703 = vunpack.c.h.b16 %v1200
    %v2704 = vunpack.c.l.b16 %v1201
    %v2705 = vunpack.c.h.b16 %v1201
    %v2706 = vunpack.c.l.b16 %v1202
    %v2707 = vunpack.c.h.b16 %v1202
    %v2708 = vunpack.c.l.b16 %v1203
    %v2709 = vunpack.c.h.b16 %v1203
    %v2710 = vunpack.c.l.b16 %v1204
    %v2711 = vunpack.c.h.b16 %v1204
    %v2712 = vunpack.c.l.b16 %v1205
    %v2713 = vunpack.c.h.b16 %v1205
    %v2714 = vunpack.c.l.b16 %v1206
    %v2715 = vunpack.c.h.b16 %v1206
    %v2716 = vunpack.c.l.b16 %v1207
    %v2717 = vunpack.c.h.b16 %v1207
    %v2718 = vunpack.c.l.b16 %v1208
    %v2719 = vunpack.c.h.b16 %v1208
    %v2720 = vunpack.c.l.b16 %v1209
    %v2721 = vunpack.c.h.b16 %v1209
    %v2722 = vunpack.c.l.b16 %v1210
    %v2723 = vunpack.c.h.b16 %v1210
    %v2724 = vunpack.c.l.b16 %v1211
    %v2725 = vunpack.c.h.b16 %v1211
    %v2726 = vunpack.c.l.b16 %v1212
    %v2727 = vunpack.c.h.b16 %v1212
    %v2728 = vunpack.c.l.b16 %v1213
    %v2729 = vunpack.c.h.b16 %v1213
    %v2730 = vunpack.c.l.b16 %v1214
    %v2731 = vunpack.c.h.b16 %v1214
    %v2732 = vunpack.c.l.b16 %v1215
    %v2733 = vunpack.c.h.b16 %v1215
    %v2734 = vunpack.c.l.b16 %v1216
    %v2735 = vunpack.c.h.b16 %v1216
    %v2736 = vunpack.c.l.b16 %v1217
    %v2737 = vunpack.c.h.b16 %v1217
    %v2738 = vunpack.c.l.b16 %v1218
    %v2739 = vunpack.c.h.b16 %v1218
    %v2740 = vunpack.c.l.b16 %v1219
    %v2741 = vunpack.c.h.b16 %v1219
    %v2742 = vunpack.c.l.b16 %v1220
    %v2743 = vunpack.c.h.b16 %v1220
    %v2744 = vunpack.c.l.b16 %v1221
    %v2745 = vunpack.c.h.b16 %v1221
    %v2746 = vunpack.c.l.b16 %v1222
    %v2747 = vunpack.c.h.b16 %v1222
    %v2748 = vunpack.c.l.b16 %v1223
    %v2749 = vunpack.c.h.b16 %v1223
    %v2750 = vunpack.c.l.b16 %v1224
    %v2751 = vunpack.c.h.b16 %v1224
    %v2752 = vunpack.c.l.b16 %v1225
    %v2753 = vunpack.c.h.b16 %v1225
    %v2754 = vunpack.c.l.b16 %v1226
    %v2755 = vunpack.c.h.b16 %v1226
    %v2756 = vunpack.c.l.b16 %v1227
    %v2757 = vunpack.c.h.b16 %v1227
    %v2758 = vunpack.c.l.b16 %v1228
    %v2759 = vunpack.c.h.b16 %v1228
    %v2760 = vunpack.c.l.b16 %v1229
    %v2761 = vunpack.c.h.b16 %v1229
    %v2762 = vunpack.c.l.b16 %v1230
    %v2763 = vunpack.c.h.b16 %v1230
    %v2764 = vunpack.c.l.b16 %v1231
    %v2765 = vunpack.c.h.b16 %v1231
    %v2766 = vunpack.c.l.b16 %v1232
    %v2767 = vunpack.c.h.b16 %v1232
    %v2768 = vunpack.c.l.b16 %v1233
    %v2769 = vunpack.c.h.b16 %v1233
    %v2770 = vunpack.c.l.b16 %v1234
    %v2771 = vunpack.c.h.b16 %v1234
    %v2772 = vunpack.c.l.b16 %v1235
    %v2773 = vunpack.c.h.b16 %v1235
    %v2774 = vunpack.c.l.b16 %v1236
    %v2775 = vunpack.c.h.b16 %v1236
    %v2776 = vunpack.c.l.b16 %v1237
    %v2777 = vunpack.c.h.b16 %v1237
    %v2778 = vunpack.c.l.b16 %v1238
    %v2779 = vunpack.c.h.b16 %v1238
    %v2780 = vunpack.c.l.b16 %v1239
    %v2781 = vunpack.c.h.b16 %v1239
    %v2782 = vunpack.c.l.b16 %v1240
    %v2783 = vunpack.c.h.b16 %v1240
    %v2784 = vunpack.c.l.b16 %v1241
    %v2785 = vunpack.c.h.b16 %v1241
    %v2786 = vunpack.c.l.b16 %v1242
    %v2787 = vunpack.c.h.b16 %v1242
    %v2788 = vunpack.c.l.b16 %v1243
    %v2789 = vunpack.c.h.b16 %v1243
    %v2790 = vunpack.c.l.b16 %v1244
    %v2791 = vunpack.c.h.b16 %v1244
    %v2792 = vunpack.c.l.b16 %v1245
    %v2793 = vunpack.c.h.b16 %v1245
    %v2794 = vunpack.c.l.b16 %v1246
    %v2795 = vunpack.c.h.b16 %v1246
    %v2796 = vunpack.c.l.b16 %v1247
    %v2797 = vunpack.c.h.b16 %v1247
    %v2798 = vunpack.c.l.b16 %v1248
    %v2799 = vunpack.c.h.b16 %v1248
    %v2800 = vunpack.c.l.b16 %v1249
    %v2801 = vunpack.c.h.b16 %v1249
    %v2802 = vunpack.c.l.b16 %v1250
    %v2803 = vunpack.c.h.b16 %v1250
    %v2804 = vunpack.c.l.b16 %v1251
    %v2805 = vunpack.c.h.b16 %v1251
    %v2806 = vunpack.c.l.b16 %v1252
    %v2807 = vunpack.c.h.b16 %v1252
    %v2808 = vunpack.c.l.b16 %v1253
    %v2809 = vunpack.c.h.b16 %v1253
    %v2810 = vunpack.c.l.b16 %v1254
    %v2811 = vunpack.c.h.b16 %v1254
    %v2812 = vunpack.c.l.b16 %v1255
    %v2813 = vunpack.c.h.b16 %v1255
    %v2814 = vunpack.c.l.b16 %v1256
    %v2815 = vunpack.c.h.b16 %v1256
    %v2816 = vunpack.c.l.b16 %v1257
    %v2817 = vunpack.c.h.b16 %v1257
    %v2818 = vunpack.c.l.b16 %v1258
    %v2819 = vunpack.c.h.b16 %v1258
    %v2820 = vunpack.c.l.b16 %v1259
    %v2821 = vunpack.c.h.b16 %v1259
    %v2822 = vunpack.c.l.b16 %v1260
    %v2823 = vunpack.c.h.b16 %v1260
    %v2824 = vunpack.c.l.b16 %v1261
    %v2825 = vunpack.c.h.b16 %v1261
    %v2826 = vunpack.c.l.b16 %v1262
    %v2827 = vunpack.c.h.b16 %v1262
    %v2828 = vunpack.c.l.b16 %v1263
    %v2829 = vunpack.c.h.b16 %v1263
    %v2830 = vunpack.c.l.b16 %v1264
    %v2831 = vunpack.c.h.b16 %v1264
    %v2832 = vunpack.c.l.b16 %v1265
    %v2833 = vunpack.c.h.b16 %v1265
    %v2834 = vunpack.c.l.b16 %v1266
    %v2835 = vunpack.c.h.b16 %v1266
    %v2836 = vunpack.c.l.b16 %v1267
    %v2837 = vunpack.c.h.b16 %v1267
    %v2838 = vunpack.c.l.b16 %v1268
    %v2839 = vunpack.c.h.b16 %v1268
    %v2840 = vunpack.c.l.b16 %v1269
    %v2841 = vunpack.c.h.b16 %v1269
    %v2842 = vunpack.c.l.b16 %v1270
    %v2843 = vunpack.c.h.b16 %v1270
    %v2844 = vunpack.c.l.b16 %v1271
    %v2845 = vunpack.c.h.b16 %v1271
    %v2846 = vunpack.c.l.b16 %v1272
    %v2847 = vunpack.c.h.b16 %v1272
    %v2848 = vunpack.c.l.b16 %v1273
    %v2849 = vunpack.c.h.b16 %v1273
    %v2850 = vunpack.c.l.b16 %v1274
    %v2851 = vunpack.c.h.b16 %v1274
    %v2852 = vunpack.c.l.b16 %v1275
    %v2853 = vunpack.c.h.b16 %v1275
    %v2854 = vunpack.c.l.b16 %v1276
    %v2855 = vunpack.c.h.b16 %v1276
    %v2856 = vunpack.c.l.b16 %v1277
    %v2857 = vunpack.c.h.b16 %v1277
    %v2858 = vunpack.c.l.b16 %v1278
    %v2859 = vunpack.c.h.b16 %v1278
    %v2860 = vunpack.c.l.b16 %v1279
    %v2861 = vunpack.c.h.b16 %v1279
    %v2862 = vunpack.c.l.b16 %v1280
    %v2863 = vunpack.c.h.b16 %v1280
    %v2864 = vunpack.c.l.b16 %v1281
    %v2865 = vunpack.c.h.b16 %v1281
    %v2866 = vunpack.c.l.b16 %v1282
    %v2867 = vunpack.c.h.b16 %v1282
    %v2868 = vunpack.c.l.b16 %v1283
    %v2869 = vunpack.c.h.b16 %v1283
    %v2870 = vunpack.c.l.b16 %v1284
    %v2871 = vunpack.c.h.b16 %v1284
    %v2872 = vunpack.c.l.b16 %v1285
    %v2873 = vunpack.c.h.b16 %v1285
    %v2874 = vunpack.c.l.b16 %v1286
    %v2875 = vunpack.c.h.b16 %v1286
    %v2876 = vunpack.c.l.b16 %v1287
    %v2877 = vunpack.c.h.b16 %v1287
    %v2878 = vunpack.c.l.b16 %v1288
    %v2879 = vunpack.c.h.b16 %v1288
    %v2880 = vunpack.c.l.b16 %v1289
    %v2881 = vunpack.c.h.b16 %v1289
    %v2882 = vunpack.c.l.b16 %v1290
    %v2883 = vunpack.c.h.b16 %v1290
    %v2884 = vunpack.c.l.b16 %v1291
    %v2885 = vunpack.c.h.b16 %v1291
    %v2886 = vunpack.c.l.b16 %v1292
    %v2887 = vunpack.c.h.b16 %v1292
    %v2888 = vunpack.c.l.b16 %v1293
    %v2889 = vunpack.c.h.b16 %v1293
    %v2890 = vunpack.c.l.b16 %v1294
    %v2891 = vunpack.c.h.b16 %v1294
    %v2892 = vunpack.c.l.b16 %v1295
    %v2893 = vunpack.c.h.b16 %v1295
    %v2894 = vunpack.c.l.b16 %v1296
    %v2895 = vunpack.c.h.b16 %v1296
    %v2896 = vunpack.c.l.b16 %v1297
    %v2897 = vunpack.c.h.b16 %v1297
    %v2898 = vunpack.c.l.b16 %v1298
    %v2899 = vunpack.c.h.b16 %v1298
    %v2900 = vunpack.c.l.b16 %v1299
    %v2901 = vunpack.c.h.b16 %v1299
    %v2902 = vunpack.c.l.b16 %v1300
    %v2903 = vunpack.c.h.b16 %v1300
    %v2904 = vunpack.c.l.b16 %v1301
    %v2905 = vunpack.c.h.b16 %v1301
    %v2906 = vunpack.c.l.b16 %v1302
    %v2907 = vunpack.c.h.b16 %v1302
    %v2908 = vunpack.c.l.b16 %v1303
    %v2909 = vunpack.c.h.b16 %v1303
    %v2910 = vunpack.c.l.b16 %v1304
    %v2911 = vunpack.c.h.b16 %v1304
    %v2912 = vunpack.c.l.b16 %v1305
    %v2913 = vunpack.c.h.b16 %v1305
    %v2914 = vunpack.c.l.b16 %v1306
    %v2915 = vunpack.c.h.b16 %v1306
    %v2916 = vunpack.c.l.b16 %v1307
    %v2917 = vunpack.c.h.b16 %v1307
    %v2918 = vunpack.c.l.b16 %v1308
    %v2919 = vunpack.c.h.b16 %v1308
    %v2920 = vunpack.c.l.b16 %v1309
    %v2921 = vunpack.c.h.b16 %v1309
    %v2922 = vunpack.c.l.b16 %v1310
    %v2923 = vunpack.c.h.b16 %v1310
    %v2924 = vunpack.c.l.b16 %v1311
    %v2925 = vunpack.c.h.b16 %v1311
    %v2926 = vunpack.c.l.b16 %v1312
    %v2927 = vunpack.c.h.b16 %v1312
    %v2928 = vunpack.c.l.b16 %v1313
    %v2929 = vunpack.c.h.b16 %v1313
    %v2930 = vpack.c.b16 %v1910, %v1906
    %v2931 = vpack.c.b16 %v1911, %v1907
    %v2932 = vpack.c.b16 %v1912, %v1908
    %v2933 = vpack.c.b16 %v1913, %v1909
    %v2934 = vpack.c.b16 %v1918, %v1914
    %v2935 = vpack.c.b16 %v1919, %v1915
    %v2936 = vpack.c.b16 %v1920, %v1916
    %v2937 = vpack.c.b16 %v1921, %v1917
    %v2938 = vpack.c.b16 %v1926, %v1922
    %v2939 = vpack.c.b16 %v1927, %v1923
    %v2940 = vpack.c.b16 %v1928, %v1924
    %v2941 = vpack.c.b16 %v1929, %v1925
    %v2942 = vpack.c.b16 %v1934, %v1930
    %v2943 = vpack.c.b16 %v1935, %v1931
    %v2944 = vpack.c.b16 %v1936, %v1932
    %v2945 = vpack.c.b16 %v1937, %v1933
    %v2946 = vpack.c.b16 %v1942, %v1938
    %v2947 = vpack.c.b16 %v1943, %v1939
    %v2948 = vpack.c.b16 %v1944, %v1940
    %v2949 = vpack.c.b16 %v1945, %v1941
    %v2950 = vpack.c.b16 %v1950, %v1946
    %v2951 = vpack.c.b16 %v1951, %v1947
    %v2952 = vpack.c.b16 %v1952, %v1948
    %v2953 = vpack.c.b16 %v1953, %v1949
    %v2954 = vpack.c.b16 %v1958, %v1954
    %v2955 = vpack.c.b16 %v1959, %v1955
    %v2956 = vpack.c.b16 %v1960, %v1956
    %v2957 = vpack.c.b16 %v1961, %v1957
    %v2958 = vpack.c.b16 %v1966, %v1962
    %v2959 = vpack.c.b16 %v1967, %v1963
    %v2960 = vpack.c.b16 %v1968, %v1964
    %v2961 = vpack.c.b16 %v1969, %v1965
    %v2962 = vpack.c.b16 %v1974, %v1970
    %v2963 = vpack.c.b16 %v1975, %v1971
    %v2964 = vpack.c.b16 %v1976, %v1972
    %v2965 = vpack.c.b16 %v1977, %v1973
    %v2966 = vpack.c.b16 %v1982, %v1978
    %v2967 = vpack.c.b16 %v1983, %v1979
    %v2968 = vpack.c.b16 %v1984, %v1980
    %v2969 = vpack.c.b16 %v1985, %v1981
    %v2970 = vpack.c.b16 %v1990, %v1986
    %v2971 = vpack.c.b16 %v1991, %v1987
    %v2972 = vpack.c.b16 %v1992, %v1988
    %v2973 = vpack.c.b16 %v1993, %v1989
    %v2974 = vpack.c.b16 %v1998, %v1994
    %v2975 = vpack.c.b16 %v1999, %v1995
    %v2976 = vpack.c.b16 %v2000, %v1996
    %v2977 = vpack.c.b16 %v2001, %v1997
    %v2978 = vpack.c.b16 %v2006, %v2002
    %v2979 = vpack.c.b16 %v2007, %v2003
    %v2980 = vpack.c.b16 %v2008, %v2004
    %v2981 = vpack.c.b16 %v2009, %v2005
    %v2982 = vpack.c.b16 %v2014, %v2010
    %v2983 = vpack.c.b16 %v2015, %v2011
    %v2984 = vpack.c.b16 %v2016, %v2012
    %v2985 = vpack.c.b16 %v2017, %v2013
    %v2986 = vpack.c.b16 %v2022, %v2018
    %v2987 = vpack.c.b16 %v2023, %v2019
    %v2988 = vpack.c.b16 %v2024, %v2020
    %v2989 = vpack.c.b16 %v2025, %v2021
    %v2990 = vpack.c.b16 %v2030, %v2026
    %v2991 = vpack.c.b16 %v2031, %v2027
    %v2992 = vpack.c.b16 %v2032, %v2028
    %v2993 = vpack.c.b16 %v2033, %v2029
    %v2994 = vpack.c.b16 %v2038, %v2034
    %v2995 = vpack.c.b16 %v2039, %v2035
    %v2996 = vpack.c.b16 %v2040, %v2036
    %v2997 = vpack.c.b16 %v2041, %v2037
    %v2998 = vpack.c.b16 %v2046, %v2042
    %v2999 = vpack.c.b16 %v2047, %v2043
    %v3000 = vpack.c.b16 %v2048, %v2044
    %v3001 = vpack.c.b16 %v2049, %v2045
    %v3002 = vpack.c.b16 %v2054, %v2050
    %v3003 = vpack.c.b16 %v2055, %v2051
    %v3004 = vpack.c.b16 %v2056, %v2052
    %v3005 = vpack.c.b16 %v2057, %v2053
    %v3006 = vpack.c.b16 %v2062, %v2058
    %v3007 = vpack.c.b16 %v2063, %v2059
    %v3008 = vpack.c.b16 %v2064, %v2060
    %v3009 = vpack.c.b16 %v2065, %v2061
    %v3010 = vpack.c.b16 %v2070, %v2066
    %v3011 = vpack.c.b16 %v2071, %v2067
    %v3012 = vpack.c.b16 %v2072, %v2068
    %v3013 = vpack.c.b16 %v2073, %v2069
    %v3014 = vpack.c.b16 %v2078, %v2074
    %v3015 = vpack.c.b16 %v2079, %v2075
    %v3016 = vpack.c.b16 %v2080, %v2076
    %v3017 = vpack.c.b16 %v2081, %v2077
    %v3018 = vpack.c.b16 %v2086, %v2082
    %v3019 = vpack.c.b16 %v2087, %v2083
    %v3020 = vpack.c.b16 %v2088, %v2084
    %v3021 = vpack.c.b16 %v2089, %v2085
    %v3022 = vpack.c.b16 %v2094, %v2090
    %v3023 = vpack.c.b16 %v2095, %v2091
    %v3024 = vpack.c.b16 %v2096, %v2092
    %v3025 = vpack.c.b16 %v2097, %v2093
    %v3026 = vpack.c.b16 %v2102, %v2098
    %v3027 = vpack.c.b16 %v2103, %v2099
    %v3028 = vpack.c.b16 %v2104, %v2100
    %v3029 = vpack.c.b16 %v2105, %v2101
    %v3030 = vpack.c.b16 %v2110, %v2106
    %v3031 = vpack.c.b16 %v2111, %v2107
    %v3032 = vpack.c.b16 %v2112, %v2108
    %v3033 = vpack.c.b16 %v2113, %v2109
    %v3034 = vpack.c.b16 %v2118, %v2114
    %v3035 = vpack.c.b16 %v2119, %v2115
    %v3036 = vpack.c.b16 %v2120, %v2116
    %v3037 = vpack.c.b16 %v2121, %v2117
    %v3038 = vpack.c.b16 %v2126, %v2122
    %v3039 = vpack.c.b16 %v2127, %v2123
    %v3040 = vpack.c.b16 %v2128, %v2124
    %v3041 = vpack.c.b16 %v2129, %v2125
    %v3042 = vpack.c.b16 %v2134, %v2130
    %v3043 = vpack.c.b16 %v2135, %v2131
    %v3044 = vpack.c.b16 %v2136, %v2132
    %v3045 = vpack.c.b16 %v2137, %v2133
    %v3046 = vpack.c.b16 %v2142, %v2138
    %v3047 = vpack.c.b16 %v2143, %v2139
    %v3048 = vpack.c.b16 %v2144, %v2140
    %v3049 = vpack.c.b16 %v2145, %v2141
    %v3050 = vpack.c.b16 %v2150, %v2146
    %v3051 = vpack.c.b16 %v2151, %v2147
    %v3052 = vpack.c.b16 %v2152, %v2148
    %v3053 = vpack.c.b16 %v2153, %v2149
    %v3054 = vpack.c.b16 %v2158, %v2154
    %v3055 = vpack.c.b16 %v2159, %v2155
    %v3056 = vpack.c.b16 %v2160, %v2156
    %v3057 = vpack.c.b16 %v2161, %v2157
    %v3058 = vpack.c.b16 %v2166, %v2162
    %v3059 = vpack.c.b16 %v2167, %v2163
    %v3060 = vpack.c.b16 %v2168, %v2164
    %v3061 = vpack.c.b16 %v2169, %v2165
    %v3062 = vpack.c.b16 %v2174, %v2170
    %v3063 = vpack.c.b16 %v2175, %v2171
    %v3064 = vpack.c.b16 %v2176, %v2172
    %v3065 = vpack.c.b16 %v2177, %v2173
    %v3066 = vpack.c.b16 %v2182, %v2178
    %v3067 = vpack.c.b16 %v2183, %v2179
    %v3068 = vpack.c.b16 %v2184, %v2180
    %v3069 = vpack.c.b16 %v2185, %v2181
    %v3070 = vpack.c.b16 %v2190, %v2186
    %v3071 = vpack.c.b16 %v2191, %v2187
    %v3072 = vpack.c.b16 %v2192, %v2188
    %v3073 = vpack.c.b16 %v2193, %v2189
    %v3074 = vpack.c.b16 %v2198, %v2194
    %v3075 = vpack.c.b16 %v2199, %v2195
    %v3076 = vpack.c.b16 %v2200, %v2196
    %v3077 = vpack.c.b16 %v2201, %v2197
    %v3078 = vpack.c.b16 %v2206, %v2202
    %v3079 = vpack.c.b16 %v2207, %v2203
    %v3080 = vpack.c.b16 %v2208, %v2204
    %v3081 = vpack.c.b16 %v2209, %v2205
    %v3082 = vpack.c.b16 %v2214, %v2210
    %v3083 = vpack.c.b16 %v2215, %v2211
    %v3084 = vpack.c.b16 %v2216, %v2212
    %v3085 = vpack.c.b16 %v2217, %v2213
    %v3086 = vpack.c.b16 %v2222, %v2218
    %v3087 = vpack.c.b16 %v2223, %v2219
    %v3088 = vpack.c.b16 %v2224, %v2220
    %v3089 = vpack.c.b16 %v2225, %v2221
    %v3090 = vpack.c.b16 %v2230, %v2226
    %v3091 = vpack.c.b16 %v2231, %v2227
    %v3092 = vpack.c.b16 %v2232, %v2228
    %v3093 = vpack.c.b16 %v2233, %v2229
    %v3094 = vpack.c.b16 %v2238, %v2234
    %v3095 = vpack.c.b16 %v2239, %v2235
    %v3096 = vpack.c.b16 %v2240, %v2236
    %v3097 = vpack.c.b16 %v2241, %v2237
    %v3098 = vpack.c.b16 %v2246, %v2242
    %v3099 = vpack.c.b16 %v2247, %v2243
    %v3100 = vpack.c.b16 %v2248, %v2244
    %v3101 = vpack.c.b16 %v2249, %v2245
    %v3102 = vpack.c.b16 %v2254, %v2250
    %v3103 = vpack.c.b16 %v2255, %v2251
    %v3104 = vpack.c.b16 %v2256, %v2252
    %v3105 = vpack.c.b16 %v2257, %v2253
    %v3106 = vpack.c.b16 %v2262, %v2258
    %v3107 = vpack.c.b16 %v2263, %v2259
    %v3108 = vpack.c.b16 %v2264, %v2260
    %v3109 = vpack.c.b16 %v2265, %v2261
    %v3110 = vpack.c.b16 %v2270, %v2266
    %v3111 = vpack.c.b16 %v2271, %v2267
    %v3112 = vpack.c.b16 %v2272, %v2268
    %v3113 = vpack.c.b16 %v2273, %v2269
    %v3114 = vpack.c.b16 %v2278, %v2274
    %v3115 = vpack.c.b16 %v2279, %v2275
    %v3116 = vpack.c.b16 %v2280, %v2276
    %v3117 = vpack.c.b16 %v2281, %v2277
    %v3118 = vpack.c.b16 %v2286, %v2282
    %v3119 = vpack.c.b16 %v2287, %v2283
    %v3120 = vpack.c.b16 %v2288, %v2284
    %v3121 = vpack.c.b16 %v2289, %v2285
    %v3122 = vpack.c.b16 %v2294, %v2290
    %v3123 = vpack.c.b16 %v2295, %v2291
    %v3124 = vpack.c.b16 %v2296, %v2292
    %v3125 = vpack.c.b16 %v2297, %v2293
    %v3126 = vpack.c.b16 %v2302, %v2298
    %v3127 = vpack.c.b16 %v2303, %v2299
    %v3128 = vpack.c.b16 %v2304, %v2300
    %v3129 = vpack.c.b16 %v2305, %v2301
    %v3130 = vpack.c.b16 %v2310, %v2306
    %v3131 = vpack.c.b16 %v2311, %v2307
    %v3132 = vpack.c.b16 %v2312, %v2308
    %v3133 = vpack.c.b16 %v2313, %v2309
    %v3134 = vpack.c.b16 %v2318, %v2314
    %v3135 = vpack.c.b16 %v2319, %v2315
    %v3136 = vpack.c.b16 %v2320, %v2316
    %v3137 = vpack.c.b16 %v2321, %v2317
    %v3138 = vpack.c.b16 %v2326, %v2322
    %v3139 = vpack.c.b16 %v2327, %v2323
    %v3140 = vpack.c.b16 %v2328, %v2324
    %v3141 = vpack.c.b16 %v2329, %v2325
    %v3142 = vpack.c.b16 %v2334, %v2330
    %v3143 = vpack.c.b16 %v2335, %v2331
    %v3144 = vpack.c.b16 %v2336, %v2332
    %v3145 = vpack.c.b16 %v2337, %v2333
    %v3146 = vpack.c.b16 %v2342, %v2338
    %v3147 = vpack.c.b16 %v2343, %v2339
    %v3148 = vpack.c.b16 %v2344, %v2340
    %v3149 = vpack.c.b16 %v2345, %v2341
    %v3150 = vpack.c.b16 %v2350, %v2346
    %v3151 = vpack.c.b16 %v2351, %v2347
    %v3152 = vpack.c.b16 %v2352, %v2348
    %v3153 = vpack.c.b16 %v2353, %v2349
    %v3154 = vpack.c.b16 %v2358, %v2354
    %v3155 = vpack.c.b16 %v2359, %v2355
    %v3156 = vpack.c.b16 %v2360, %v2356
    %v3157 = vpack.c.b16 %v2361, %v2357
    %v3158 = vpack.c.b16 %v2366, %v2362
    %v3159 = vpack.c.b16 %v2367, %v2363
    %v3160 = vpack.c.b16 %v2368, %v2364
    %v3161 = vpack.c.b16 %v2369, %v2365
    %v3162 = vpack.c.b16 %v2374, %v2370
    %v3163 = vpack.c.b16 %v2375, %v2371
    %v3164 = vpack.c.b16 %v2376, %v2372
    %v3165 = vpack.c.b16 %v2377, %v2373
    %v3166 = vpack.c.b16 %v2382, %v2378
    %v3167 = vpack.c.b16 %v2383, %v2379
    %v3168 = vpack.c.b16 %v2384, %v2380
    %v3169 = vpack.c.b16 %v2385, %v2381
    %v3170 = vpack.c.b16 %v2390, %v2386
    %v3171 = vpack.c.b16 %v2391, %v2387
    %v3172 = vpack.c.b16 %v2392, %v2388
    %v3173 = vpack.c.b16 %v2393, %v2389
    %v3174 = vpack.c.b16 %v2398, %v2394
    %v3175 = vpack.c.b16 %v2399, %v2395
    %v3176 = vpack.c.b16 %v2400, %v2396
    %v3177 = vpack.c.b16 %v2401, %v2397
    %v3178 = vpack.c.b16 %v2406, %v2402
    %v3179 = vpack.c.b16 %v2407, %v2403
    %v3180 = vpack.c.b16 %v2408, %v2404
    %v3181 = vpack.c.b16 %v2409, %v2405
    %v3182 = vpack.c.b16 %v2414, %v2410
    %v3183 = vpack.c.b16 %v2415, %v2411
    %v3184 = vpack.c.b16 %v2416, %v2412
    %v3185 = vpack.c.b16 %v2417, %v2413
    %v3186 = vpack.c.b16 %v2422, %v2418
    %v3187 = vpack.c.b16 %v2423, %v2419
    %v3188 = vpack.c.b16 %v2424, %v2420
    %v3189 = vpack.c.b16 %v2425, %v2421
    %v3190 = vpack.c.b16 %v2430, %v2426
    %v3191 = vpack.c.b16 %v2431, %v2427
    %v3192 = vpack.c.b16 %v2432, %v2428
    %v3193 = vpack.c.b16 %v2433, %v2429
    %v3194 = vpack.c.b16 %v2438, %v2434
    %v3195 = vpack.c.b16 %v2439, %v2435
    %v3196 = vpack.c.b16 %v2440, %v2436
    %v3197 = vpack.c.b16 %v2441, %v2437
    %v3198 = vpack.c.b16 %v2446, %v2442
    %v3199 = vpack.c.b16 %v2447, %v2443
    %v3200 = vpack.c.b16 %v2448, %v2444
    %v3201 = vpack.c.b16 %v2449, %v2445
    %v3202 = vpack.c.b16 %v2454, %v2450
    %v3203 = vpack.c.b16 %v2455, %v2451
    %v3204 = vpack.c.b16 %v2456, %v2452
    %v3205 = vpack.c.b16 %v2457, %v2453
    %v3206 = vpack.c.b16 %v2462, %v2458
    %v3207 = vpack.c.b16 %v2463, %v2459
    %v3208 = vpack.c.b16 %v2464, %v2460
    %v3209 = vpack.c.b16 %v2465, %v2461
    %v3210 = vpack.c.b16 %v2470, %v2466
    %v3211 = vpack.c.b16 %v2471, %v2467
    %v3212 = vpack.c.b16 %v2472, %v2468
    %v3213 = vpack.c.b16 %v2473, %v2469
    %v3214 = vpack.c.b16 %v2478, %v2474
    %v3215 = vpack.c.b16 %v2479, %v2475
    %v3216 = vpack.c.b16 %v2480, %v2476
    %v3217 = vpack.c.b16 %v2481, %v2477
    %v3218 = vpack.c.b16 %v2486, %v2482
    %v3219 = vpack.c.b16 %v2487, %v2483
    %v3220 = vpack.c.b16 %v2488, %v2484
    %v3221 = vpack.c.b16 %v2489, %v2485
    %v3222 = vpack.c.b16 %v2494, %v2490
    %v3223 = vpack.c.b16 %v2495, %v2491
    %v3224 = vpack.c.b16 %v2496, %v2492
    %v3225 = vpack.c.b16 %v2497, %v2493
    %v3226 = vpack.c.b16 %v2502, %v2498
    %v3227 = vpack.c.b16 %v2503, %v2499
    %v3228 = vpack.c.b16 %v2504, %v2500
    %v3229 = vpack.c.b16 %v2505, %v2501
    %v3230 = vpack.c.b16 %v2510, %v2506
    %v3231 = vpack.c.b16 %v2511, %v2507
    %v3232 = vpack.c.b16 %v2512, %v2508
    %v3233 = vpack.c.b16 %v2513, %v2509
    %v3234 = vpack.c.b16 %v2518, %v2514
    %v3235 = vpack.c.b16 %v2519, %v2515
    %v3236 = vpack.c.b16 %v2520, %v2516
    %v3237 = vpack.c.b16 %v2521, %v2517
    %v3238 = vpack.c.b16 %v2526, %v2522
    %v3239 = vpack.c.b16 %v2527, %v2523
    %v3240 = vpack.c.b16 %v2528, %v2524
    %v3241 = vpack.c.b16 %v2529, %v2525
    %v3242 = vpack.c.b16 %v2534, %v2530
    %v3243 = vpack.c.b16 %v2535, %v2531
    %v3244 = vpack.c.b16 %v2536, %v2532
    %v3245 = vpack.c.b16 %v2537, %v2533
    %v3246 = vpack.c.b16 %v2542, %v2538
    %v3247 = vpack.c.b16 %v2543, %v2539
    %v3248 = vpack.c.b16 %v2544, %v2540
    %v3249 = vpack.c.b16 %v2545, %v2541
    %v3250 = vpack.c.b16 %v2550, %v2546
    %v3251 = vpack.c.b16 %v2551, %v2547
    %v3252 = vpack.c.b16 %v2552, %v2548
    %v3253 = vpack.c.b16 %v2553, %v2549
    %v3254 = vpack.c.b16 %v2558, %v2554
    %v3255 = vpack.c.b16 %v2559, %v2555
    %v3256 = vpack.c.b16 %v2560, %v2556
    %v3257 = vpack.c.b16 %v2561, %v2557
    %v3258 = vpack.c.b16 %v2566, %v2562
    %v3259 = vpack.c.b16 %v2567, %v2563
    %v3260 = vpack.c.b16 %v2568, %v2564
    %v3261 = vpack.c.b16 %v2569, %v2565
    %v3262 = vpack.c.b16 %v2574, %v2570
    %v3263 = vpack.c.b16 %v2575, %v2571
    %v3264 = vpack.c.b16 %v2576, %v2572
    %v3265 = vpack.c.b16 %v2577, %v2573
    %v3266 = vpack.c.b16 %v2582, %v2578
    %v3267 = vpack.c.b16 %v2583, %v2579
    %v3268 = vpack.c.b16 %v2584, %v2580
    %v3269 = vpack.c.b16 %v2585, %v2581
    %v3270 = vpack.c.b16 %v2590, %v2586
    %v3271 = vpack.c.b16 %v2591, %v2587
    %v3272 = vpack.c.b16 %v2592, %v2588
    %v3273 = vpack.c.b16 %v2593, %v2589
    %v3274 = vpack.c.b16 %v2598, %v2594
    %v3275 = vpack.c.b16 %v2599, %v2595
    %v3276 = vpack.c.b16 %v2600, %v2596
    %v3277 = vpack.c.b16 %v2601, %v2597
    %v3278 = vpack.c.b16 %v2606, %v2602
    %v3279 = vpack.c.b16 %v2607, %v2603
    %v3280 = vpack.c.b16 %v2608, %v2604
    %v3281 = vpack.c.b16 %v2609, %v2605
    %v3282 = vpack.c.b16 %v2614, %v2610
    %v3283 = vpack.c.b16 %v2615, %v2611
    %v3284 = vpack.c.b16 %v2616, %v2612
    %v3285 = vpack.c.b16 %v2617, %v2613
    %v3286 = vpack.c.b16 %v2622, %v2618
    %v3287 = vpack.c.b16 %v2623, %v2619
    %v3288 = vpack.c.b16 %v2624, %v2620
    %v3289 = vpack.c.b16 %v2625, %v2621
    %v3290 = vpack.c.b16 %v2630, %v2626
    %v3291 = vpack.c.b16 %v2631, %v2627
    %v3292 = vpack.c.b16 %v2632, %v2628
    %v3293 = vpack.c.b16 %v2633, %v2629
    %v3294 = vpack.c.b16 %v2638, %v2634
    %v3295 = vpack.c.b16 %v2639, %v2635
    %v3296 = vpack.c.b16 %v2640, %v2636
    %v3297 = vpack.c.b16 %v2641, %v2637
    %v3298 = vpack.c.b16 %v2646, %v2642
    %v3299 = vpack.c.b16 %v2647, %v2643
    %v3300 = vpack.c.b16 %v2648, %v2644
    %v3301 = vpack.c.b16 %v2649, %v2645
    %v3302 = vpack.c.b16 %v2654, %v2650
    %v3303 = vpack.c.b16 %v2655, %v2651
    %v3304 = vpack.c.b16 %v2656, %v2652
    %v3305 = vpack.c.b16 %v2657, %v2653
    %v3306 = vpack.c.b16 %v2662, %v2658
    %v3307 = vpack.c.b16 %v2663, %v2659
    %v3308 = vpack.c.b16 %v2664, %v2660
    %v3309 = vpack.c.b16 %v2665, %v2661
    %v3310 = vpack.c.b16 %v2670, %v2666
    %v3311 = vpack.c.b16 %v2671, %v2667
    %v3312 = vpack.c.b16 %v2672, %v2668
    %v3313 = vpack.c.b16 %v2673, %v2669
    %v3314 = vpack.c.b16 %v2678, %v2674
    %v3315 = vpack.c.b16 %v2679, %v2675
    %v3316 = vpack.c.b16 %v2680, %v2676
    %v3317 = vpack.c.b16 %v2681, %v2677
    %v3318 = vpack.c.b16 %v2686, %v2682
    %v3319 = vpack.c.b16 %v2687, %v2683
    %v3320 = vpack.c.b16 %v2688, %v2684
    %v3321 = vpack.c.b16 %v2689, %v2685
    %v3322 = vpack.c.b16 %v2694, %v2690
    %v3323 = vpack.c.b16 %v2695, %v2691
    %v3324 = vpack.c.b16 %v2696, %v2692
    %v3325 = vpack.c.b16 %v2697, %v2693
    %v3326 = vpack.c.b16 %v2702, %v2698
    %v3327 = vpack.c.b16 %v2703, %v2699
    %v3328 = vpack.c.b16 %v2704, %v2700
    %v3329 = vpack.c.b16 %v2705, %v2701
    %v3330 = vpack.c.b16 %v2710, %v2706
    %v3331 = vpack.c.b16 %v2711, %v2707
    %v3332 = vpack.c.b16 %v2712, %v2708
    %v3333 = vpack.c.b16 %v2713, %v2709
    %v3334 = vpack.c.b16 %v2718, %v2714
    %v3335 = vpack.c.b16 %v2719, %v2715
    %v3336 = vpack.c.b16 %v2720, %v2716
    %v3337 = vpack.c.b16 %v2721, %v2717
    %v3338 = vpack.c.b16 %v2726, %v2722
    %v3339 = vpack.c.b16 %v2727, %v2723
    %v3340 = vpack.c.b16 %v2728, %v2724
    %v3341 = vpack.c.b16 %v2729, %v2725
    %v3342 = vpack.c.b16 %v2734, %v2730
    %v3343 = vpack.c.b16 %v2735, %v2731
    %v3344 = vpack.c.b16 %v2736, %v2732
    %v3345 = vpack.c.b16 %v2737, %v2733
    %v3346 = vpack.c.b16 %v2742, %v2738
    %v3347 = vpack.c.b16 %v2743, %v2739
    %v3348 = vpack.c.b16 %v2744, %v2740
    %v3349 = vpack.c.b16 %v2745, %v2741
    %v3350 = vpack.c.b16 %v2750, %v2746
    %v3351 = vpack.c.b16 %v2751, %v2747
    %v3352 = vpack.c.b16 %v2752, %v2748
    %v3353 = vpack.c.b16 %v2753, %v2749
    %v3354 = vpack.c.b16 %v2758, %v2754
    %v3355 = vpack.c.b16 %v2759, %v2755
    %v3356 = vpack.c.b16 %v2760, %v2756
    %v3357 = vpack.c.b16 %v2761, %v2757
    %v3358 = vpack.c.b16 %v2766, %v2762
    %v3359 = vpack.c.b16 %v2767, %v2763
    %v3360 = vpack.c.b16 %v2768, %v2764
    %v3361 = vpack.c.b16 %v2769, %v2765
    %v3362 = vpack.c.b16 %v2774, %v2770
    %v3363 = vpack.c.b16 %v2775, %v2771
    %v3364 = vpack.c.b16 %v2776, %v2772
    %v3365 = vpack.c.b16 %v2777, %v2773
    %v3366 = vpack.c.b16 %v2782, %v2778
    %v3367 = vpack.c.b16 %v2783, %v2779
    %v3368 = vpack.c.b16 %v2784, %v2780
    %v3369 = vpack.c.b16 %v2785, %v2781
    %v3370 = vpack.c.b16 %v2790, %v2786
    %v3371 = vpack.c.b16 %v2791, %v2787
    %v3372 = vpack.c.b16 %v2792, %v2788
    %v3373 = vpack.c.b16 %v2793, %v2789
    %v3374 = vpack.c.b16 %v2798, %v2794
    %v3375 = vpack.c.b16 %v2799, %v2795
    %v3376 = vpack.c.b16 %v2800, %v2796
    %v3377 = vpack.c.b16 %v2801, %v2797
    %v3378 = vpack.c.b16 %v2806, %v2802
    %v3379 = vpack.c.b16 %v2807, %v2803
    %v3380 = vpack.c.b16 %v2808, %v2804
    %v3381 = vpack.c.b16 %v2809, %v2805
    %v3382 = vpack.c.b16 %v2814, %v2810
    %v3383 = vpack.c.b16 %v2815, %v2811
    %v3384 = vpack.c.b16 %v2816, %v2812
    %v3385 = vpack.c.b16 %v2817, %v2813
    %v3386 = vpack.c.b16 %v2822, %v2818
    %v3387 = vpack.c.b16 %v2823, %v2819
    %v3388 = vpack.c.b16 %v2824, %v2820
    %v3389 = vpack.c.b16 %v2825, %v2821
    %v3390 = vpack.c.b16 %v2830, %v2826
    %v3391 = vpack.c.b16 %v2831, %v2827
    %v3392 = vpack.c.b16 %v2832, %v2828
    %v3393 = vpack.c.b16 %v2833, %v2829
    %v3394 = vpack.c.b16 %v2838, %v2834
    %v3395 = vpack.c.b16 %v2839, %v2835
    %v3396 = vpack.c.b16 %v2840, %v2836
    %v3397 = vpack.c.b16 %v2841, %v2837
    %v3398 = vpack.c.b16 %v2846, %v2842
    %v3399 = vpack.c.b16 %v2847, %v2843
    %v3400 = vpack.c.b16 %v2848, %v2844
    %v3401 = vpack.c.b16 %v2849, %v2845
    %v3402 = vpack.c.b16 %v2854, %v2850
    %v3403 = vpack.c.b16 %v2855, %v2851
    %v3404 = vpack.c.b16 %v2856, %v2852
    %v3405 = vpack.c.b16 %v2857, %v2853
    %v3406 = vpack.c.b16 %v2862, %v2858
    %v3407 = vpack.c.b16 %v2863, %v2859
    %v3408 = vpack.c.b16 %v2864, %v2860
    %v3409 = vpack.c.b16 %v2865, %v2861
    %v3410 = vpack.c.b16 %v2870, %v2866
    %v3411 = vpack.c.b16 %v2871, %v2867
    %v3412 = vpack.c.b16 %v2872, %v2868
    %v3413 = vpack.c.b16 %v2873, %v2869
    %v3414 = vpack.c.b16 %v2878, %v2874
    %v3415 = vpack.c.b16 %v2879, %v2875
    %v3416 = vpack.c.b16 %v2880, %v2876
    %v3417 = vpack.c.b16 %v2881, %v2877
    %v3418 = vpack.c.b16 %v2886, %v2882
    %v3419 = vpack.c.b16 %v2887, %v2883
    %v3420 = vpack.c.b16 %v2888, %v2884
    %v3421 = vpack.c.b16 %v2889, %v2885
    %v3422 = vpack.c.b16 %v2894, %v2890
    %v3423 = vpack.c.b16 %v2895, %v2891
    %v3424 = vpack.c.b16 %v2896, %v2892
    %v3425 = vpack.c.b16 %v2897, %v2893
    %v3426 = vpack.c.b16 %v2902, %v2898
    %v3427 = vpack.c.b16 %v2903, %v2899
    %v3428 = vpack.c.b16 %v2904, %v2900
    %v3429 = vpack.c.b16 %v2905, %v2901
    %v3430 = vpack.c.b16 %v2910, %v2906
    %v3431 = vpack.c.b16 %v2911, %v2907
    %v3432 = vpack.c.b16 %v2912, %v2908
    %v3433 = vpack.c.b16 %v2913, %v2909
    %v3434 = vpack.c.b16 %v2918, %v2914
    %v3435 = vpack.c.b16 %v2919, %v2915
    %v3436 = vpack.c.b16 %v2920, %v2916
    %v3437 = vpack.c.b16 %v2921, %v2917
    %v3438 = vpack.c.b16 %v2926, %v2922
    %v3439 = vpack.c.b16 %v2927, %v2923
    %v3440 = vpack.c.b16 %v2928, %v2924
    %v3441 = vpack.c.b16 %v2929, %v2925
    %3954 = vmatprep.subr.bf16.mxu0 %v2959
    %3955 = vmatpush1.bf16.msra.mxu0 %v2958
    %3956 = vmatprep.subr.bf16.mxu0 %v2955
    %3957 = vmatpush1.bf16.msra.mxu0 %v2954
    %3958 = vmatprep.subr.bf16.mxu0 %v2951
    %3959 = vmatpush1.bf16.msra.mxu0 %v2950
    %3960 = vmatprep.subr.bf16.mxu0 %v2947
    %3961 = vmatpush1.bf16.msra.mxu0 %v2946
    %3962 = vmatprep.subr.bf16.mxu0 %v2943
    %3963 = vmatpush1.bf16.msra.mxu0 %v2942
    %3964 = vmatprep.subr.bf16.mxu0 %v2939
    %3965 = vmatpush1.bf16.msra.mxu0 %v2938
    %3966 = vmatprep.subr.bf16.mxu0 %v2935
    %3967 = vmatpush1.bf16.msra.mxu0 %v2934
    %3968 = vmatprep.subr.bf16.mxu0 %v2931
    %3969 = vmatpush1.bf16.msra.mxu0 %v2930
    %3970 = vmatprep.subr.bf16.mxu0 %v2991
    %3971 = vmatpush2.bf16.msra.mxu0 %v2990
    %3972 = vmatprep.subr.bf16.mxu0 %v2987
    %3973 = vmatpush2.bf16.msra.mxu0 %v2986
    %3974 = vmatprep.subr.bf16.mxu0 %v2983
    %3975 = vmatpush2.bf16.msra.mxu0 %v2982
    %3976 = vmatprep.subr.bf16.mxu0 %v2979
    %3977 = vmatpush2.bf16.msra.mxu0 %v2978
    %3978 = vmatprep.subr.bf16.mxu0 %v2975
    %3979 = vmatpush2.bf16.msra.mxu0 %v2974
    %3980 = vmatprep.subr.bf16.mxu0 %v2971
    %3981 = vmatpush2.bf16.msra.mxu0 %v2970
    %3982 = vmatprep.subr.bf16.mxu0 %v2967
    %3983 = vmatpush2.bf16.msra.mxu0 %v2966
    %3984 = vmatprep.subr.bf16.mxu0 %v2963
    %3985 = vmatpush2.bf16.msra.mxu0 %v2962
    %3986 = vmatprep.mubr.bf16.mxu0 %v1363
    %3987 = vmatmul.mubr.bf16.gmra.mxu0 %v1362
    %v3988 = vpop.f32.mrf.mxu0
    %v3989 = vadd.f32 %v1321, %v3988
    %v3990 = vpop.f32.mrf.mxu0
    %v3991 = vadd.f32 %v1325, %v3990
    %v3992 = vpop.f32.mrf.mxu0
    %v3993 = vpop.f32.mrf.mxu0
    %3994 = vdwg.mxu0
    %3995 = vmatprep.subr.bf16.mxu0 %v3023
    %3996 = vmatpush1.bf16.msra.mxu0 %v3022
    %3997 = vmatprep.subr.bf16.mxu0 %v3019
    %3998 = vmatpush1.bf16.msra.mxu0 %v3018
    %3999 = vmatprep.subr.bf16.mxu0 %v3015
    %4000 = vmatpush1.bf16.msra.mxu0 %v3014
    %4001 = vmatprep.subr.bf16.mxu0 %v3011
    %4002 = vmatpush1.bf16.msra.mxu0 %v3010
    %4003 = vmatprep.subr.bf16.mxu0 %v3007
    %4004 = vmatpush1.bf16.msra.mxu0 %v3006
    %4005 = vmatprep.subr.bf16.mxu0 %v3003
    %4006 = vmatpush1.bf16.msra.mxu0 %v3002
    %4007 = vmatprep.subr.bf16.mxu0 %v2999
    %4008 = vmatpush1.bf16.msra.mxu0 %v2998
    %4009 = vmatprep.subr.bf16.mxu0 %v2995
    %4010 = vmatpush1.bf16.msra.mxu0 %v2994
    %4011 = vmatprep.subr.bf16.mxu0 %v3055
    %4012 = vmatpush2.bf16.msra.mxu0 %v3054
    %4013 = vmatprep.subr.bf16.mxu0 %v3051
    %4014 = vmatpush2.bf16.msra.mxu0 %v3050
    %4015 = vmatprep.subr.bf16.mxu0 %v3047
    %4016 = vmatpush2.bf16.msra.mxu0 %v3046
    %4017 = vmatprep.subr.bf16.mxu0 %v3043
    %4018 = vmatpush2.bf16.msra.mxu0 %v3042
    %4019 = vmatprep.subr.bf16.mxu0 %v3039
    %4020 = vmatpush2.bf16.msra.mxu0 %v3038
    %4021 = vmatprep.subr.bf16.mxu0 %v3035
    %4022 = vmatpush2.bf16.msra.mxu0 %v3034
    %4023 = vmatprep.subr.bf16.mxu0 %v3031
    %4024 = vmatpush2.bf16.msra.mxu0 %v3030
    %4025 = vmatprep.subr.bf16.mxu0 %v3027
    %4026 = vmatpush2.bf16.msra.mxu0 %v3026
    %4027 = vmatprep.mubr.bf16.mxu0 %v1365
    %4028 = vmatmul.mubr.bf16.gmra.mxu0 %v1364
    %v4029 = vpop.f32.mrf.mxu0
    %v4030 = vadd.f32 %v3989, %v4029
    %v4031 = vpop.f32.mrf.mxu0
    %v4032 = vadd.f32 %v3991, %v4031
    %v4033 = vpop.f32.mrf.mxu0
    %v4034 = vpop.f32.mrf.mxu0
    %4035 = vdwg.mxu0
    %4036 = vmatprep.subr.bf16.mxu0 %v3087
    %4037 = vmatpush1.bf16.msra.mxu0 %v3086
    %4038 = vmatprep.subr.bf16.mxu0 %v3083
    %4039 = vmatpush1.bf16.msra.mxu0 %v3082
    %4040 = vmatprep.subr.bf16.mxu0 %v3079
    %4041 = vmatpush1.bf16.msra.mxu0 %v3078
    %4042 = vmatprep.subr.bf16.mxu0 %v3075
    %4043 = vmatpush1.bf16.msra.mxu0 %v3074
    %4044 = vmatprep.subr.bf16.mxu0 %v3071
    %4045 = vmatpush1.bf16.msra.mxu0 %v3070
    %4046 = vmatprep.subr.bf16.mxu0 %v3067
    %4047 = vmatpush1.bf16.msra.mxu0 %v3066
    %4048 = vmatprep.subr.bf16.mxu0 %v3063
    %4049 = vmatpush1.bf16.msra.mxu0 %v3062
    %4050 = vmatprep.subr.bf16.mxu0 %v3059
    %4051 = vmatpush1.bf16.msra.mxu0 %v3058
    %4052 = vmatprep.subr.bf16.mxu0 %v3119
    %4053 = vmatpush2.bf16.msra.mxu0 %v3118
    %4054 = vmatprep.subr.bf16.mxu0 %v3115
    %4055 = vmatpush2.bf16.msra.mxu0 %v3114
    %4056 = vmatprep.subr.bf16.mxu0 %v3111
    %4057 = vmatpush2.bf16.msra.mxu0 %v3110
    %4058 = vmatprep.subr.bf16.mxu0 %v3107
    %4059 = vmatpush2.bf16.msra.mxu0 %v3106
    %4060 = vmatprep.subr.bf16.mxu0 %v3103
    %4061 = vmatpush2.bf16.msra.mxu0 %v3102
    %4062 = vmatprep.subr.bf16.mxu0 %v3099
    %4063 = vmatpush2.bf16.msra.mxu0 %v3098
    %4064 = vmatprep.subr.bf16.mxu0 %v3095
    %4065 = vmatpush2.bf16.msra.mxu0 %v3094
    %4066 = vmatprep.subr.bf16.mxu0 %v3091
    %4067 = vmatpush2.bf16.msra.mxu0 %v3090
    %4068 = vmatprep.mubr.bf16.mxu0 %v1367
    %4069 = vmatmul.mubr.bf16.gmra.mxu0 %v1366
    %v4070 = vpop.f32.mrf.mxu0
    %v4071 = vadd.f32 %v4030, %v4070
    %v4072 = vpop.f32.mrf.mxu0
    %v4073 = vadd.f32 %v4032, %v4072
    %v4074 = vpop.f32.mrf.mxu0
    %v4075 = vpop.f32.mrf.mxu0
    %4076 = vdwg.mxu0
    %4077 = vmatprep.subr.bf16.mxu0 %v3151
    %4078 = vmatpush1.bf16.msra.mxu0 %v3150
    %4079 = vmatprep.subr.bf16.mxu0 %v3147
    %4080 = vmatpush1.bf16.msra.mxu0 %v3146
    %4081 = vmatprep.subr.bf16.mxu0 %v3143
    %4082 = vmatpush1.bf16.msra.mxu0 %v3142
    %4083 = vmatprep.subr.bf16.mxu0 %v3139
    %4084 = vmatpush1.bf16.msra.mxu0 %v3138
    %4085 = vmatprep.subr.bf16.mxu0 %v3135
    %4086 = vmatpush1.bf16.msra.mxu0 %v3134
    %4087 = vmatprep.subr.bf16.mxu0 %v3131
    %4088 = vmatpush1.bf16.msra.mxu0 %v3130
    %4089 = vmatprep.subr.bf16.mxu0 %v3127
    %4090 = vmatpush1.bf16.msra.mxu0 %v3126
    %4091 = vmatprep.subr.bf16.mxu0 %v3123
    %4092 = vmatpush1.bf16.msra.mxu0 %v3122
    %4093 = vmatprep.subr.bf16.mxu0 %v3183
    %4094 = vmatpush2.bf16.msra.mxu0 %v3182
    %4095 = vmatprep.subr.bf16.mxu0 %v3179
    %4096 = vmatpush2.bf16.msra.mxu0 %v3178
    %4097 = vmatprep.subr.bf16.mxu0 %v3175
    %4098 = vmatpush2.bf16.msra.mxu0 %v3174
    %4099 = vmatprep.subr.bf16.mxu0 %v3171
    %4100 = vmatpush2.bf16.msra.mxu0 %v3170
    %4101 = vmatprep.subr.bf16.mxu0 %v3167
    %4102 = vmatpush2.bf16.msra.mxu0 %v3166
    %4103 = vmatprep.subr.bf16.mxu0 %v3163
    %4104 = vmatpush2.bf16.msra.mxu0 %v3162
    %4105 = vmatprep.subr.bf16.mxu0 %v3159
    %4106 = vmatpush2.bf16.msra.mxu0 %v3158
    %4107 = vmatprep.subr.bf16.mxu0 %v3155
    %4108 = vmatpush2.bf16.msra.mxu0 %v3154
    %4109 = vmatprep.mubr.bf16.mxu0 %v1369
    %4110 = vmatmul.mubr.bf16.gmra.mxu0 %v1368
    %v4111 = vpop.f32.mrf.mxu0
    %v4112 = vadd.f32 %v4071, %v4111
    %v4113 = vpop.f32.mrf.mxu0
    %v4114 = vadd.f32 %v4073, %v4113
    %v4115 = vpop.f32.mrf.mxu0
    %v4116 = vpop.f32.mrf.mxu0
    %4117 = vdwg.mxu0
    %4118 = vmatprep.subr.bf16.mxu0 %v3215
    %4119 = vmatpush1.bf16.msra.mxu0 %v3214
    %4120 = vmatprep.subr.bf16.mxu0 %v3211
    %4121 = vmatpush1.bf16.msra.mxu0 %v3210
    %4122 = vmatprep.subr.bf16.mxu0 %v3207
    %4123 = vmatpush1.bf16.msra.mxu0 %v3206
    %4124 = vmatprep.subr.bf16.mxu0 %v3203
    %4125 = vmatpush1.bf16.msra.mxu0 %v3202
    %4126 = vmatprep.subr.bf16.mxu0 %v3199
    %4127 = vmatpush1.bf16.msra.mxu0 %v3198
    %4128 = vmatprep.subr.bf16.mxu0 %v3195
    %4129 = vmatpush1.bf16.msra.mxu0 %v3194
    %4130 = vmatprep.subr.bf16.mxu0 %v3191
    %4131 = vmatpush1.bf16.msra.mxu0 %v3190
    %4132 = vmatprep.subr.bf16.mxu0 %v3187
    %4133 = vmatpush1.bf16.msra.mxu0 %v3186
    %4134 = vmatprep.subr.bf16.mxu0 %v3247
    %4135 = vmatpush2.bf16.msra.mxu0 %v3246
    %4136 = vmatprep.subr.bf16.mxu0 %v3243
    %4137 = vmatpush2.bf16.msra.mxu0 %v3242
    %4138 = vmatprep.subr.bf16.mxu0 %v3239
    %4139 = vmatpush2.bf16.msra.mxu0 %v3238
    %4140 = vmatprep.subr.bf16.mxu0 %v3235
    %4141 = vmatpush2.bf16.msra.mxu0 %v3234
    %4142 = vmatprep.subr.bf16.mxu0 %v3231
    %4143 = vmatpush2.bf16.msra.mxu0 %v3230
    %4144 = vmatprep.subr.bf16.mxu0 %v3227
    %4145 = vmatpush2.bf16.msra.mxu0 %v3226
    %4146 = vmatprep.subr.bf16.mxu0 %v3223
    %4147 = vmatpush2.bf16.msra.mxu0 %v3222
    %4148 = vmatprep.subr.bf16.mxu0 %v3219
    %4149 = vmatpush2.bf16.msra.mxu0 %v3218
    %4150 = vmatprep.mubr.bf16.mxu0 %v1371
    %4151 = vmatmul.mubr.bf16.gmra.mxu0 %v1370
    %v4152 = vpop.f32.mrf.mxu0
    %v4153 = vadd.f32 %v4112, %v4152
    %v4154 = vpop.f32.mrf.mxu0
    %v4155 = vadd.f32 %v4114, %v4154
    %v4156 = vpop.f32.mrf.mxu0
    %v4157 = vpop.f32.mrf.mxu0
    %4158 = vdwg.mxu0
    %4159 = vmatprep.subr.bf16.mxu0 %v3279
    %4160 = vmatpush1.bf16.msra.mxu0 %v3278
    %4161 = vmatprep.subr.bf16.mxu0 %v3275
    %4162 = vmatpush1.bf16.msra.mxu0 %v3274
    %4163 = vmatprep.subr.bf16.mxu0 %v3271
    %4164 = vmatpush1.bf16.msra.mxu0 %v3270
    %4165 = vmatprep.subr.bf16.mxu0 %v3267
    %4166 = vmatpush1.bf16.msra.mxu0 %v3266
    %4167 = vmatprep.subr.bf16.mxu0 %v3263
    %4168 = vmatpush1.bf16.msra.mxu0 %v3262
    %4169 = vmatprep.subr.bf16.mxu0 %v3259
    %4170 = vmatpush1.bf16.msra.mxu0 %v3258
    %4171 = vmatprep.subr.bf16.mxu0 %v3255
    %4172 = vmatpush1.bf16.msra.mxu0 %v3254
    %4173 = vmatprep.subr.bf16.mxu0 %v3251
    %4174 = vmatpush1.bf16.msra.mxu0 %v3250
    %4175 = vmatprep.subr.bf16.mxu0 %v3311
    %4176 = vmatpush2.bf16.msra.mxu0 %v3310
    %4177 = vmatprep.subr.bf16.mxu0 %v3307
    %4178 = vmatpush2.bf16.msra.mxu0 %v3306
    %4179 = vmatprep.subr.bf16.mxu0 %v3303
    %4180 = vmatpush2.bf16.msra.mxu0 %v3302
    %4181 = vmatprep.subr.bf16.mxu0 %v3299
    %4182 = vmatpush2.bf16.msra.mxu0 %v3298
    %4183 = vmatprep.subr.bf16.mxu0 %v3295
    %4184 = vmatpush2.bf16.msra.mxu0 %v3294
    %4185 = vmatprep.subr.bf16.mxu0 %v3291
    %4186 = vmatpush2.bf16.msra.mxu0 %v3290
    %4187 = vmatprep.subr.bf16.mxu0 %v3287
    %4188 = vmatpush2.bf16.msra.mxu0 %v3286
    %4189 = vmatprep.subr.bf16.mxu0 %v3283
    %4190 = vmatpush2.bf16.msra.mxu0 %v3282
    %4191 = vmatprep.mubr.bf16.mxu0 %v1373
    %4192 = vmatmul.mubr.bf16.gmra.mxu0 %v1372
    %v4193 = vpop.f32.mrf.mxu0
    %v4194 = vadd.f32 %v4153, %v4193
    %v4195 = vpop.f32.mrf.mxu0
    %v4196 = vadd.f32 %v4155, %v4195
    %v4197 = vpop.f32.mrf.mxu0
    %v4198 = vpop.f32.mrf.mxu0
    %4199 = vdwg.mxu0
    %4200 = vmatprep.subr.bf16.mxu0 %v3343
    %4201 = vmatpush1.bf16.msra.mxu0 %v3342
    %4202 = vmatprep.subr.bf16.mxu0 %v3339
    %4203 = vmatpush1.bf16.msra.mxu0 %v3338
    %4204 = vmatprep.subr.bf16.mxu0 %v3335
    %4205 = vmatpush1.bf16.msra.mxu0 %v3334
    %4206 = vmatprep.subr.bf16.mxu0 %v3331
    %4207 = vmatpush1.bf16.msra.mxu0 %v3330
    %4208 = vmatprep.subr.bf16.mxu0 %v3327
    %4209 = vmatpush1.bf16.msra.mxu0 %v3326
    %4210 = vmatprep.subr.bf16.mxu0 %v3323
    %4211 = vmatpush1.bf16.msra.mxu0 %v3322
    %4212 = vmatprep.subr.bf16.mxu0 %v3319
    %4213 = vmatpush1.bf16.msra.mxu0 %v3318
    %4214 = vmatprep.subr.bf16.mxu0 %v3315
    %4215 = vmatpush1.bf16.msra.mxu0 %v3314
    %4216 = vmatprep.subr.bf16.mxu0 %v3375
    %4217 = vmatpush2.bf16.msra.mxu0 %v3374
    %4218 = vmatprep.subr.bf16.mxu0 %v3371
    %4219 = vmatpush2.bf16.msra.mxu0 %v3370
    %4220 = vmatprep.subr.bf16.mxu0 %v3367
    %4221 = vmatpush2.bf16.msra.mxu0 %v3366
    %4222 = vmatprep.subr.bf16.mxu0 %v3363
    %4223 = vmatpush2.bf16.msra.mxu0 %v3362
    %4224 = vmatprep.subr.bf16.mxu0 %v3359
    %4225 = vmatpush2.bf16.msra.mxu0 %v3358
    %4226 = vmatprep.subr.bf16.mxu0 %v3355
    %4227 = vmatpush2.bf16.msra.mxu0 %v3354
    %4228 = vmatprep.subr.bf16.mxu0 %v3351
    %4229 = vmatpush2.bf16.msra.mxu0 %v3350
    %4230 = vmatprep.subr.bf16.mxu0 %v3347
    %4231 = vmatpush2.bf16.msra.mxu0 %v3346
    %4232 = vmatprep.mubr.bf16.mxu0 %v1375
    %4233 = vmatmul.mubr.bf16.gmra.mxu0 %v1374
    %v4234 = vpop.f32.mrf.mxu0
    %v4235 = vadd.f32 %v4194, %v4234
    %v4236 = vpop.f32.mrf.mxu0
    %v4237 = vadd.f32 %v4196, %v4236
    %v4238 = vpop.f32.mrf.mxu0
    %v4239 = vpop.f32.mrf.mxu0
    %4240 = vdwg.mxu0
    %4241 = vmatprep.subr.bf16.mxu0 %v3407
    %4242 = vmatpush1.bf16.msra.mxu0 %v3406
    %4243 = vmatprep.subr.bf16.mxu0 %v3403
    %4244 = vmatpush1.bf16.msra.mxu0 %v3402
    %4245 = vmatprep.subr.bf16.mxu0 %v3399
    %4246 = vmatpush1.bf16.msra.mxu0 %v3398
    %4247 = vmatprep.subr.bf16.mxu0 %v3395
    %4248 = vmatpush1.bf16.msra.mxu0 %v3394
    %4249 = vmatprep.subr.bf16.mxu0 %v3391
    %4250 = vmatpush1.bf16.msra.mxu0 %v3390
    %4251 = vmatprep.subr.bf16.mxu0 %v3387
    %4252 = vmatpush1.bf16.msra.mxu0 %v3386
    %4253 = vmatprep.subr.bf16.mxu0 %v3383
    %4254 = vmatpush1.bf16.msra.mxu0 %v3382
    %4255 = vmatprep.subr.bf16.mxu0 %v3379
    %4256 = vmatpush1.bf16.msra.mxu0 %v3378
    %4257 = vmatprep.subr.bf16.mxu0 %v3439
    %4258 = vmatpush2.bf16.msra.mxu0 %v3438
    %4259 = vmatprep.subr.bf16.mxu0 %v3435
    %4260 = vmatpush2.bf16.msra.mxu0 %v3434
    %4261 = vmatprep.subr.bf16.mxu0 %v3431
    %4262 = vmatpush2.bf16.msra.mxu0 %v3430
    %4263 = vmatprep.subr.bf16.mxu0 %v3427
    %4264 = vmatpush2.bf16.msra.mxu0 %v3426
    %4265 = vmatprep.subr.bf16.mxu0 %v3423
    %4266 = vmatpush2.bf16.msra.mxu0 %v3422
    %4267 = vmatprep.subr.bf16.mxu0 %v3419
    %4268 = vmatpush2.bf16.msra.mxu0 %v3418
    %4269 = vmatprep.subr.bf16.mxu0 %v3415
    %4270 = vmatpush2.bf16.msra.mxu0 %v3414
    %4271 = vmatprep.subr.bf16.mxu0 %v3411
    %4272 = vmatpush2.bf16.msra.mxu0 %v3410
    %4273 = vmatprep.mubr.bf16.mxu0 %v1377
    %4274 = vmatmul.mubr.bf16.gmra.mxu0 %v1376
    %v4275 = vpop.f32.mrf.mxu0
    %v4276 = vadd.f32 %v4235, %v4275
    %v4277 = vpop.f32.mrf.mxu0
    %v4278 = vadd.f32 %v4237, %v4277
    %v4279 = vpop.f32.mrf.mxu0
    %v4280 = vpop.f32.mrf.mxu0
    %4281 = vdwg.mxu0
    %4282 = vmatprep.subr.bf16.mxu0 %v2961
    %4283 = vmatpush1.bf16.msra.mxu0 %v2960
    %4284 = vmatprep.subr.bf16.mxu0 %v2957
    %4285 = vmatpush1.bf16.msra.mxu0 %v2956
    %4286 = vmatprep.subr.bf16.mxu0 %v2953
    %4287 = vmatpush1.bf16.msra.mxu0 %v2952
    %4288 = vmatprep.subr.bf16.mxu0 %v2949
    %4289 = vmatpush1.bf16.msra.mxu0 %v2948
    %4290 = vmatprep.subr.bf16.mxu0 %v2945
    %4291 = vmatpush1.bf16.msra.mxu0 %v2944
    %4292 = vmatprep.subr.bf16.mxu0 %v2941
    %4293 = vmatpush1.bf16.msra.mxu0 %v2940
    %4294 = vmatprep.subr.bf16.mxu0 %v2937
    %4295 = vmatpush1.bf16.msra.mxu0 %v2936
    %4296 = vmatprep.subr.bf16.mxu0 %v2933
    %4297 = vmatpush1.bf16.msra.mxu0 %v2932
    %4298 = vmatprep.subr.bf16.mxu0 %v2993
    %4299 = vmatpush2.bf16.msra.mxu0 %v2992
    %4300 = vmatprep.subr.bf16.mxu0 %v2989
    %4301 = vmatpush2.bf16.msra.mxu0 %v2988
    %4302 = vmatprep.subr.bf16.mxu0 %v2985
    %4303 = vmatpush2.bf16.msra.mxu0 %v2984
    %4304 = vmatprep.subr.bf16.mxu0 %v2981
    %4305 = vmatpush2.bf16.msra.mxu0 %v2980
    %4306 = vmatprep.subr.bf16.mxu0 %v2977
    %4307 = vmatpush2.bf16.msra.mxu0 %v2976
    %4308 = vmatprep.subr.bf16.mxu0 %v2973
    %4309 = vmatpush2.bf16.msra.mxu0 %v2972
    %4310 = vmatprep.subr.bf16.mxu0 %v2969
    %4311 = vmatpush2.bf16.msra.mxu0 %v2968
    %4312 = vmatprep.subr.bf16.mxu0 %v2965
    %4313 = vmatpush2.bf16.msra.mxu0 %v2964
    %4314 = vmatprep.mubr.bf16.mxu0 %v1363
    %4315 = vmatmul.mubr.bf16.gmra.mxu0 %v1362
    %v4316 = vpop.f32.mrf.mxu0
    %v4317 = vadd.f32 %v1329, %v4316
    %v4318 = vpop.f32.mrf.mxu0
    %v4319 = vadd.f32 %v1333, %v4318
    %v4320 = vpop.f32.mrf.mxu0
    %v4321 = vpop.f32.mrf.mxu0
    %4322 = vdwg.mxu0
    %4323 = vmatprep.subr.bf16.mxu0 %v3025
    %4324 = vmatpush1.bf16.msra.mxu0 %v3024
    %4325 = vmatprep.subr.bf16.mxu0 %v3021
    %4326 = vmatpush1.bf16.msra.mxu0 %v3020
    %4327 = vmatprep.subr.bf16.mxu0 %v3017
    %4328 = vmatpush1.bf16.msra.mxu0 %v3016
    %4329 = vmatprep.subr.bf16.mxu0 %v3013
    %4330 = vmatpush1.bf16.msra.mxu0 %v3012
    %4331 = vmatprep.subr.bf16.mxu0 %v3009
    %4332 = vmatpush1.bf16.msra.mxu0 %v3008
    %4333 = vmatprep.subr.bf16.mxu0 %v3005
    %4334 = vmatpush1.bf16.msra.mxu0 %v3004
    %4335 = vmatprep.subr.bf16.mxu0 %v3001
    %4336 = vmatpush1.bf16.msra.mxu0 %v3000
    %4337 = vmatprep.subr.bf16.mxu0 %v2997
    %4338 = vmatpush1.bf16.msra.mxu0 %v2996
    %4339 = vmatprep.subr.bf16.mxu0 %v3057
    %4340 = vmatpush2.bf16.msra.mxu0 %v3056
    %4341 = vmatprep.subr.bf16.mxu0 %v3053
    %4342 = vmatpush2.bf16.msra.mxu0 %v3052
    %4343 = vmatprep.subr.bf16.mxu0 %v3049
    %4344 = vmatpush2.bf16.msra.mxu0 %v3048
    %4345 = vmatprep.subr.bf16.mxu0 %v3045
    %4346 = vmatpush2.bf16.msra.mxu0 %v3044
    %4347 = vmatprep.subr.bf16.mxu0 %v3041
    %4348 = vmatpush2.bf16.msra.mxu0 %v3040
    %4349 = vmatprep.subr.bf16.mxu0 %v3037
    %4350 = vmatpush2.bf16.msra.mxu0 %v3036
    %4351 = vmatprep.subr.bf16.mxu0 %v3033
    %4352 = vmatpush2.bf16.msra.mxu0 %v3032
    %4353 = vmatprep.subr.bf16.mxu0 %v3029
    %4354 = vmatpush2.bf16.msra.mxu0 %v3028
    %4355 = vmatprep.mubr.bf16.mxu0 %v1365
    %4356 = vmatmul.mubr.bf16.gmra.mxu0 %v1364
    %v4357 = vpop.f32.mrf.mxu0
    %v4358 = vadd.f32 %v4317, %v4357
    %v4359 = vpop.f32.mrf.mxu0
    %v4360 = vadd.f32 %v4319, %v4359
    %v4361 = vpop.f32.mrf.mxu0
    %v4362 = vpop.f32.mrf.mxu0
    %4363 = vdwg.mxu0
    %4364 = vmatprep.subr.bf16.mxu0 %v3089
    %4365 = vmatpush1.bf16.msra.mxu0 %v3088
    %4366 = vmatprep.subr.bf16.mxu0 %v3085
    %4367 = vmatpush1.bf16.msra.mxu0 %v3084
    %4368 = vmatprep.subr.bf16.mxu0 %v3081
    %4369 = vmatpush1.bf16.msra.mxu0 %v3080
    %4370 = vmatprep.subr.bf16.mxu0 %v3077
    %4371 = vmatpush1.bf16.msra.mxu0 %v3076
    %4372 = vmatprep.subr.bf16.mxu0 %v3073
    %4373 = vmatpush1.bf16.msra.mxu0 %v3072
    %4374 = vmatprep.subr.bf16.mxu0 %v3069
    %4375 = vmatpush1.bf16.msra.mxu0 %v3068
    %4376 = vmatprep.subr.bf16.mxu0 %v3065
    %4377 = vmatpush1.bf16.msra.mxu0 %v3064
    %4378 = vmatprep.subr.bf16.mxu0 %v3061
    %4379 = vmatpush1.bf16.msra.mxu0 %v3060
    %4380 = vmatprep.subr.bf16.mxu0 %v3121
    %4381 = vmatpush2.bf16.msra.mxu0 %v3120
    %4382 = vmatprep.subr.bf16.mxu0 %v3117
    %4383 = vmatpush2.bf16.msra.mxu0 %v3116
    %4384 = vmatprep.subr.bf16.mxu0 %v3113
    %4385 = vmatpush2.bf16.msra.mxu0 %v3112
    %4386 = vmatprep.subr.bf16.mxu0 %v3109
    %4387 = vmatpush2.bf16.msra.mxu0 %v3108
    %4388 = vmatprep.subr.bf16.mxu0 %v3105
    %4389 = vmatpush2.bf16.msra.mxu0 %v3104
    %4390 = vmatprep.subr.bf16.mxu0 %v3101
    %4391 = vmatpush2.bf16.msra.mxu0 %v3100
    %4392 = vmatprep.subr.bf16.mxu0 %v3097
    %4393 = vmatpush2.bf16.msra.mxu0 %v3096
    %4394 = vmatprep.subr.bf16.mxu0 %v3093
    %4395 = vmatpush2.bf16.msra.mxu0 %v3092
    %4396 = vmatprep.mubr.bf16.mxu0 %v1367
    %4397 = vmatmul.mubr.bf16.gmra.mxu0 %v1366
    %v4398 = vpop.f32.mrf.mxu0
    %v4399 = vadd.f32 %v4358, %v4398
    %v4400 = vpop.f32.mrf.mxu0
    %v4401 = vadd.f32 %v4360, %v4400
    %v4402 = vpop.f32.mrf.mxu0
    %v4403 = vpop.f32.mrf.mxu0
    %4404 = vdwg.mxu0
    %4405 = vmatprep.subr.bf16.mxu0 %v3153
    %4406 = vmatpush1.bf16.msra.mxu0 %v3152
    %4407 = vmatprep.subr.bf16.mxu0 %v3149
    %4408 = vmatpush1.bf16.msra.mxu0 %v3148
    %4409 = vmatprep.subr.bf16.mxu0 %v3145
    %4410 = vmatpush1.bf16.msra.mxu0 %v3144
    %4411 = vmatprep.subr.bf16.mxu0 %v3141
    %4412 = vmatpush1.bf16.msra.mxu0 %v3140
    %4413 = vmatprep.subr.bf16.mxu0 %v3137
    %4414 = vmatpush1.bf16.msra.mxu0 %v3136
    %4415 = vmatprep.subr.bf16.mxu0 %v3133
    %4416 = vmatpush1.bf16.msra.mxu0 %v3132
    %4417 = vmatprep.subr.bf16.mxu0 %v3129
    %4418 = vmatpush1.bf16.msra.mxu0 %v3128
    %4419 = vmatprep.subr.bf16.mxu0 %v3125
    %4420 = vmatpush1.bf16.msra.mxu0 %v3124
    %4421 = vmatprep.subr.bf16.mxu0 %v3185
    %4422 = vmatpush2.bf16.msra.mxu0 %v3184
    %4423 = vmatprep.subr.bf16.mxu0 %v3181
    %4424 = vmatpush2.bf16.msra.mxu0 %v3180
    %4425 = vmatprep.subr.bf16.mxu0 %v3177
    %4426 = vmatpush2.bf16.msra.mxu0 %v3176
    %4427 = vmatprep.subr.bf16.mxu0 %v3173
    %4428 = vmatpush2.bf16.msra.mxu0 %v3172
    %4429 = vmatprep.subr.bf16.mxu0 %v3169
    %4430 = vmatpush2.bf16.msra.mxu0 %v3168
    %4431 = vmatprep.subr.bf16.mxu0 %v3165
    %4432 = vmatpush2.bf16.msra.mxu0 %v3164
    %4433 = vmatprep.subr.bf16.mxu0 %v3161
    %4434 = vmatpush2.bf16.msra.mxu0 %v3160
    %4435 = vmatprep.subr.bf16.mxu0 %v3157
    %4436 = vmatpush2.bf16.msra.mxu0 %v3156
    %4437 = vmatprep.mubr.bf16.mxu0 %v1369
    %4438 = vmatmul.mubr.bf16.gmra.mxu0 %v1368
    %v4439 = vpop.f32.mrf.mxu0
    %v4440 = vadd.f32 %v4399, %v4439
    %v4441 = vpop.f32.mrf.mxu0
    %v4442 = vadd.f32 %v4401, %v4441
    %v4443 = vpop.f32.mrf.mxu0
    %v4444 = vpop.f32.mrf.mxu0
    %4445 = vdwg.mxu0
    %4446 = vmatprep.subr.bf16.mxu0 %v3217
    %4447 = vmatpush1.bf16.msra.mxu0 %v3216
    %4448 = vmatprep.subr.bf16.mxu0 %v3213
    %4449 = vmatpush1.bf16.msra.mxu0 %v3212
    %4450 = vmatprep.subr.bf16.mxu0 %v3209
    %4451 = vmatpush1.bf16.msra.mxu0 %v3208
    %4452 = vmatprep.subr.bf16.mxu0 %v3205
    %4453 = vmatpush1.bf16.msra.mxu0 %v3204
    %4454 = vmatprep.subr.bf16.mxu0 %v3201
    %4455 = vmatpush1.bf16.msra.mxu0 %v3200
    %4456 = vmatprep.subr.bf16.mxu0 %v3197
    %4457 = vmatpush1.bf16.msra.mxu0 %v3196
    %4458 = vmatprep.subr.bf16.mxu0 %v3193
    %4459 = vmatpush1.bf16.msra.mxu0 %v3192
    %4460 = vmatprep.subr.bf16.mxu0 %v3189
    %4461 = vmatpush1.bf16.msra.mxu0 %v3188
    %4462 = vmatprep.subr.bf16.mxu0 %v3249
    %4463 = vmatpush2.bf16.msra.mxu0 %v3248
    %4464 = vmatprep.subr.bf16.mxu0 %v3245
    %4465 = vmatpush2.bf16.msra.mxu0 %v3244
    %4466 = vmatprep.subr.bf16.mxu0 %v3241
    %4467 = vmatpush2.bf16.msra.mxu0 %v3240
    %4468 = vmatprep.subr.bf16.mxu0 %v3237
    %4469 = vmatpush2.bf16.msra.mxu0 %v3236
    %4470 = vmatprep.subr.bf16.mxu0 %v3233
    %4471 = vmatpush2.bf16.msra.mxu0 %v3232
    %4472 = vmatprep.subr.bf16.mxu0 %v3229
    %4473 = vmatpush2.bf16.msra.mxu0 %v3228
    %4474 = vmatprep.subr.bf16.mxu0 %v3225
    %4475 = vmatpush2.bf16.msra.mxu0 %v3224
    %4476 = vmatprep.subr.bf16.mxu0 %v3221
    %4477 = vmatpush2.bf16.msra.mxu0 %v3220
    %4478 = vmatprep.mubr.bf16.mxu0 %v1371
    %4479 = vmatmul.mubr.bf16.gmra.mxu0 %v1370
    %v4480 = vpop.f32.mrf.mxu0
    %v4481 = vadd.f32 %v4440, %v4480
    %v4482 = vpop.f32.mrf.mxu0
    %v4483 = vadd.f32 %v4442, %v4482
    %v4484 = vpop.f32.mrf.mxu0
    %v4485 = vpop.f32.mrf.mxu0
    %4486 = vdwg.mxu0
    %4487 = vmatprep.subr.bf16.mxu0 %v3281
    %4488 = vmatpush1.bf16.msra.mxu0 %v3280
    %4489 = vmatprep.subr.bf16.mxu0 %v3277
    %4490 = vmatpush1.bf16.msra.mxu0 %v3276
    %4491 = vmatprep.subr.bf16.mxu0 %v3273
    %4492 = vmatpush1.bf16.msra.mxu0 %v3272
    %4493 = vmatprep.subr.bf16.mxu0 %v3269
    %4494 = vmatpush1.bf16.msra.mxu0 %v3268
    %4495 = vmatprep.subr.bf16.mxu0 %v3265
    %4496 = vmatpush1.bf16.msra.mxu0 %v3264
    %4497 = vmatprep.subr.bf16.mxu0 %v3261
    %4498 = vmatpush1.bf16.msra.mxu0 %v3260
    %4499 = vmatprep.subr.bf16.mxu0 %v3257
    %4500 = vmatpush1.bf16.msra.mxu0 %v3256
    %4501 = vmatprep.subr.bf16.mxu0 %v3253
    %4502 = vmatpush1.bf16.msra.mxu0 %v3252
    %4503 = vmatprep.subr.bf16.mxu0 %v3313
    %4504 = vmatpush2.bf16.msra.mxu0 %v3312
    %4505 = vmatprep.subr.bf16.mxu0 %v3309
    %4506 = vmatpush2.bf16.msra.mxu0 %v3308
    %4507 = vmatprep.subr.bf16.mxu0 %v3305
    %4508 = vmatpush2.bf16.msra.mxu0 %v3304
    %4509 = vmatprep.subr.bf16.mxu0 %v3301
    %4510 = vmatpush2.bf16.msra.mxu0 %v3300
    %4511 = vmatprep.subr.bf16.mxu0 %v3297
    %4512 = vmatpush2.bf16.msra.mxu0 %v3296
    %4513 = vmatprep.subr.bf16.mxu0 %v3293
    %4514 = vmatpush2.bf16.msra.mxu0 %v3292
    %4515 = vmatprep.subr.bf16.mxu0 %v3289
    %4516 = vmatpush2.bf16.msra.mxu0 %v3288
    %4517 = vmatprep.subr.bf16.mxu0 %v3285
    %4518 = vmatpush2.bf16.msra.mxu0 %v3284
    %4519 = vmatprep.mubr.bf16.mxu0 %v1373
    %4520 = vmatmul.mubr.bf16.gmra.mxu0 %v1372
    %v4521 = vpop.f32.mrf.mxu0
    %v4522 = vadd.f32 %v4481, %v4521
    %v4523 = vpop.f32.mrf.mxu0
    %v4524 = vadd.f32 %v4483, %v4523
    %v4525 = vpop.f32.mrf.mxu0
    %v4526 = vpop.f32.mrf.mxu0
    %4527 = vdwg.mxu0
    %4528 = vmatprep.subr.bf16.mxu0 %v3345
    %4529 = vmatpush1.bf16.msra.mxu0 %v3344
    %4530 = vmatprep.subr.bf16.mxu0 %v3341
    %4531 = vmatpush1.bf16.msra.mxu0 %v3340
    %4532 = vmatprep.subr.bf16.mxu0 %v3337
    %4533 = vmatpush1.bf16.msra.mxu0 %v3336
    %4534 = vmatprep.subr.bf16.mxu0 %v3333
    %4535 = vmatpush1.bf16.msra.mxu0 %v3332
    %4536 = vmatprep.subr.bf16.mxu0 %v3329
    %4537 = vmatpush1.bf16.msra.mxu0 %v3328
    %4538 = vmatprep.subr.bf16.mxu0 %v3325
    %4539 = vmatpush1.bf16.msra.mxu0 %v3324
    %4540 = vmatprep.subr.bf16.mxu0 %v3321
    %4541 = vmatpush1.bf16.msra.mxu0 %v3320
    %4542 = vmatprep.subr.bf16.mxu0 %v3317
    %4543 = vmatpush1.bf16.msra.mxu0 %v3316
    %4544 = vmatprep.subr.bf16.mxu0 %v3377
    %4545 = vmatpush2.bf16.msra.mxu0 %v3376
    %4546 = vmatprep.subr.bf16.mxu0 %v3373
    %4547 = vmatpush2.bf16.msra.mxu0 %v3372
    %4548 = vmatprep.subr.bf16.mxu0 %v3369
    %4549 = vmatpush2.bf16.msra.mxu0 %v3368
    %4550 = vmatprep.subr.bf16.mxu0 %v3365
    %4551 = vmatpush2.bf16.msra.mxu0 %v3364
    %4552 = vmatprep.subr.bf16.mxu0 %v3361
    %4553 = vmatpush2.bf16.msra.mxu0 %v3360
    %4554 = vmatprep.subr.bf16.mxu0 %v3357
    %4555 = vmatpush2.bf16.msra.mxu0 %v3356
    %4556 = vmatprep.subr.bf16.mxu0 %v3353
    %4557 = vmatpush2.bf16.msra.mxu0 %v3352
    %4558 = vmatprep.subr.bf16.mxu0 %v3349
    %4559 = vmatpush2.bf16.msra.mxu0 %v3348
    %4560 = vmatprep.mubr.bf16.mxu0 %v1375
    %4561 = vmatmul.mubr.bf16.gmra.mxu0 %v1374
    %v4562 = vpop.f32.mrf.mxu0
    %v4563 = vadd.f32 %v4522, %v4562
    %v4564 = vpop.f32.mrf.mxu0
    %v4565 = vadd.f32 %v4524, %v4564
    %v4566 = vpop.f32.mrf.mxu0
    %v4567 = vpop.f32.mrf.mxu0
    %4568 = vdwg.mxu0
    %4569 = vmatprep.subr.bf16.mxu0 %v3409
    %4570 = vmatpush1.bf16.msra.mxu0 %v3408
    %4571 = vmatprep.subr.bf16.mxu0 %v3405
    %4572 = vmatpush1.bf16.msra.mxu0 %v3404
    %4573 = vmatprep.subr.bf16.mxu0 %v3401
    %4574 = vmatpush1.bf16.msra.mxu0 %v3400
    %4575 = vmatprep.subr.bf16.mxu0 %v3397
    %4576 = vmatpush1.bf16.msra.mxu0 %v3396
    %4577 = vmatprep.subr.bf16.mxu0 %v3393
    %4578 = vmatpush1.bf16.msra.mxu0 %v3392
    %4579 = vmatprep.subr.bf16.mxu0 %v3389
    %4580 = vmatpush1.bf16.msra.mxu0 %v3388
    %4581 = vmatprep.subr.bf16.mxu0 %v3385
    %4582 = vmatpush1.bf16.msra.mxu0 %v3384
    %4583 = vmatprep.subr.bf16.mxu0 %v3381
    %4584 = vmatpush1.bf16.msra.mxu0 %v3380
    %4585 = vmatprep.subr.bf16.mxu0 %v3441
    %4586 = vmatpush2.bf16.msra.mxu0 %v3440
    %4587 = vmatprep.subr.bf16.mxu0 %v3437
    %4588 = vmatpush2.bf16.msra.mxu0 %v3436
    %4589 = vmatprep.subr.bf16.mxu0 %v3433
    %4590 = vmatpush2.bf16.msra.mxu0 %v3432
    %4591 = vmatprep.subr.bf16.mxu0 %v3429
    %4592 = vmatpush2.bf16.msra.mxu0 %v3428
    %4593 = vmatprep.subr.bf16.mxu0 %v3425
    %4594 = vmatpush2.bf16.msra.mxu0 %v3424
    %4595 = vmatprep.subr.bf16.mxu0 %v3421
    %4596 = vmatpush2.bf16.msra.mxu0 %v3420
    %4597 = vmatprep.subr.bf16.mxu0 %v3417
    %4598 = vmatpush2.bf16.msra.mxu0 %v3416
    %4599 = vmatprep.subr.bf16.mxu0 %v3413
    %4600 = vmatpush2.bf16.msra.mxu0 %v3412
    %4601 = vmatprep.mubr.bf16.mxu0 %v1377
    %4602 = vmatmul.mubr.bf16.gmra.mxu0 %v1376
    %v4603 = vpop.f32.mrf.mxu0
    %v4604 = vadd.f32 %v4563, %v4603
    %v4605 = vpop.f32.mrf.mxu0
    %v4606 = vadd.f32 %v4565, %v4605
    %v4607 = vpop.f32.mrf.mxu0
    %v4608 = vpop.f32.mrf.mxu0
    %4609 = vdwg.mxu0
    %4610 = vst [vmem:[#allocation12] sm:$0xff] %v4276
    %4611 = vst [vmem:[#allocation12 + $0x8] sm:$0xff] %v4278
    %4612 = vst [vmem:[#allocation12 + $0x10] sm:$0xff] %v4604
    %4613 = vst [vmem:[#allocation12 + $0x18] sm:$0xff] %v4606
    // Predicated region
    $region46: #{tpu_custom_call.1} parent=1 // pred_check
      _
    $region47: #{tpu_custom_call.1} parent=1 // pred_check_branch
      %4615 = sbr.rel (0) target = $region49
    $region48: #{tpu_custom_call.1} parent=1 // pred_region
      %s4616 = sadd.s32 0, 0
      %s4617 = smul.u32 4, %s4616
      %s4619 = ssub.s32 512, 512
      %4620 = vsyncadd [#allocation5], %s4619
      %s4621 = smul.addr %s4617, 128
      %s4622 = scalar_lea.hbm %s5, %s4621
      %s4624 = sshll.u32 [#allocation12], 4
      %s4625 = int_to_ptr.vmem [resolvable:$true] %s4624
      %4627 = dma.vmem_to_hbm [thread:$0]  %s4625, 512, %s4622, [#allocation5]
    $region49: #{tpu_custom_call.1} parent=1 // pred_fallthru
      _
    // Predicated region
    $region50: #{tpu_custom_call.1} parent=1 // pred_check
      _
    $region51: #{tpu_custom_call.1} parent=1 // pred_check_branch
      %4629 = sbr.rel (0) target = $region53
    $region52: #{tpu_custom_call.1} parent=1 // pred_region
      %4630 = dma.done [#allocation5], 512
    $region53: #{tpu_custom_call.1} parent=1 // pred_fallthru
      _
    %4631 = vsyncpa [#allocation4], 1
    %4632 = vsyncpa [#allocation7], 1
    %4633 = vsyncpa [#allocation10], 1
    %4634 = vsyncpa [#allocation5], 1

</llo_original>
